<compile_context>
chip_gen: v5e
topology: v5e:2x2
jax: 0.10.0
libtpu: 0.0.40
codegen_flags: <defaults>
</compile_context>

<pallas_src>
import math

import jax
import jax.numpy as jnp
from jax import lax
from jax.experimental import pallas as pl
from jax.experimental.pallas import tpu as pltpu

# ----- small, TinyLlama-shaped (but shrunk) config ---------------------------
HIDDEN = 256
NUM_HEADS = 4
NUM_KV_HEADS = 2
HEAD_DIM = HIDDEN // NUM_HEADS            # 64
N_REP = NUM_HEADS // NUM_KV_HEADS         # 2
KV_DIM = NUM_KV_HEADS * HEAD_DIM          # 128
QKV_DIM = HIDDEN + 2 * KV_DIM             # 512  (q | k | v lanes)
ROPE_THETA = 10000.0

BATCH = 2
SEQ = 128

SM_SCALE = 1.0 / math.sqrt(HEAD_DIM)


# --------------------------- fused attention kernel --------------------------
def _fused_llama_attn_kernel(x_ref, wqkv_ref, wo_ref, cs_ref, o_ref):
    # x_ref   : (bblk, S, HIDDEN)        bf16 hidden states
    # wqkv_ref: (HIDDEN, QKV_DIM)        bf16 fused, pre-transposed q|k|v weight
    # wo_ref  : (HIDDEN, HIDDEN)         bf16 pre-transposed o_proj weight
    # cs_ref  : (S, 2*HEAD_DIM)          f32  [cos | sign-folded sin]
    # o_ref   : (bblk, S, HIDDEN)        f32  attention module output
    bblk, s_len, _ = x_ref.shape
    half = HEAD_DIM // 2

    wqkv = wqkv_ref[...]
    wo = wo_ref[...]
    cs = cs_ref[...]
    cos = cs[:, :HEAD_DIM]                 # (S, D)
    sin_signed = cs[:, HEAD_DIM:]          # (S, D), rotate_half sign pre-folded

    def rope(xh):                          # xh: (S, HEAD_DIM) f32
        rot = jnp.concatenate([xh[:, half:], xh[:, :half]], axis=-1)
        return xh * cos + rot * sin_signed

    # Causal mask shared by both query heads of a GQA group (row-stacked).
    rows = N_REP * s_len
    q_pos = lax.broadcasted_iota(jnp.int32, (rows, s_len), 0) % s_len
    k_pos = lax.broadcasted_iota(jnp.int32, (rows, s_len), 1)
    causal = k_pos <= q_pos

    for b in range(bblk):                  # static loop (1 or 2)
        # ---- fused q/k/v projection (bf16 operands, f32 accumulation) -------
        qkv = jnp.dot(x_ref[b], wqkv,
                      preferred_element_type=jnp.float32)        # (S, 512) f32

        chunks = []
        for g in range(NUM_KV_HEADS):                            # static loop (2)
            k_off = HIDDEN + g * HEAD_DIM
            v_off = HIDDEN + KV_DIM + g * HEAD_DIM
            k_g = rope(qkv[:, k_off:k_off + HEAD_DIM]).astype(jnp.bfloat16)
            v_g = qkv[:, v_off:v_off + HEAD_DIM].astype(jnp.bfloat16)

            # Fold the GQA group: stack the N_REP query heads sharing k_g/v_g
            # along rows -> QK matmul runs with M = N_REP*S (better MXU fill).
            q_heads = []
            for r in range(N_REP):
                h = g * N_REP + r
                q_heads.append(rope(qkv[:, h * HEAD_DIM:(h + 1) * HEAD_DIM]))
            q_grp = (jnp.concatenate(q_heads, axis=0) * SM_SCALE
                     ).astype(jnp.bfloat16)                      # (2S, D)

            s = lax.dot_general(q_grp, k_g, (((1,), (1,)), ((), ())),
                                preferred_element_type=jnp.float32)  # (2S, S)
            m = s.max(axis=-1, keepdims=True)
            p = jnp.where(causal, jnp.exp(s - m), 0.0)           # mask after exp
            l = p.sum(axis=-1, keepdims=True)
            pv = jnp.dot(p.astype(jnp.bfloat16), v_g,
                         preferred_element_type=jnp.float32)     # (2S, D) f32
            o_grp = pv * pl.reciprocal(l, approx=True)           # EUP slot

            # 128-lane-aligned chunk: heads (2g, 2g+1) side-by-side in lanes.
            chunks.append(jnp.concatenate([o_grp[:s_len], o_grp[s_len:]],
                                          axis=-1))              # (S, 128)

        attn = jnp.concatenate(chunks, axis=-1).astype(jnp.bfloat16)  # (S, 256)

        # ---- fused o_proj epilogue ------------------------------------------
        out = jnp.dot(attn, wo, preferred_element_type=jnp.float32)   # (S, 256)
        o_ref[b] = out.astype(o_ref.dtype)


def _multi_tensorcore():
    """True on chips with >1 TensorCore (v7x / v4 / ...): keep a parallel batch
    grid axis for megacore.  False on single-TC v5e/v6e: fold batch into one
    block (a grid step costs ~0.35 us of pure overhead there)."""
    try:
        kind = jax.devices()[0].device_kind.lower()
    except Exception:
        return True
    single_tc = any(t in kind for t in ("v5 lite", "v5e", "v6 lite", "v6e"))
    return not single_tc


def rope_cos_sin_packed(seq_len):
    """(S, 2*HEAD_DIM) lane-dense table: [cos | sin with rotate_half sign folded]."""
    inv_freq = 1.0 / (ROPE_THETA ** (
        jnp.arange(0, HEAD_DIM, 2, dtype=jnp.float32) / HEAD_DIM))
    pos = jnp.arange(seq_len, dtype=jnp.float32)
    freqs = pos[:, None] * inv_freq[None, :]                 # (S, D/2)
    emb = jnp.concatenate([freqs, freqs], axis=-1)           # (S, D)
    cos = jnp.cos(emb)
    sin = jnp.sin(emb)                                       # attention_scaling = 1.0
    # rotate_half(x)*sin == concat([x2, x1]) * concat([-sin1, sin2])
    sin_signed = jnp.concatenate([-sin[:, :HEAD_DIM // 2], sin[:, HEAD_DIM // 2:]],
                                 axis=-1)
    return jnp.concatenate([cos, sin_signed], axis=-1)       # (S, 2*D) f32


def prepare_params(params):
    """Fuse q/k/v weights, pre-transpose once, cast matmul operands to bf16."""
    wqkv = jnp.concatenate([params["q"], params["k"], params["v"]], axis=0)
    return {
        "wqkv_t": jnp.asarray(wqkv.T, dtype=jnp.bfloat16),        # (HIDDEN, QKV_DIM)
        "wo_t": jnp.asarray(params["o"].T, dtype=jnp.bfloat16),   # (HIDDEN, HIDDEN)
    }


# --------------------------- module forward (Pallas) -------------------------
def llama_flash_attention2_forward(hidden_states, fused_params, batch_in_grid=None):
    B, S, H = hidden_states.shape
    assert H == HIDDEN and S % 8 == 0
    assert S <= 2048, "full-S resident KV; re-tile KV axis for longer sequences"

    if batch_in_grid is None:
        batch_in_grid = _multi_tensorcore()
    bblk = 1 if (batch_in_grid and B > 1) else B
    grid = (B // bblk,)

    x_bf = hidden_states.astype(jnp.bfloat16)
    cs = rope_cos_sin_packed(S)

    return pl.pallas_call(
        _fused_llama_attn_kernel,
        out_shape=jax.ShapeDtypeStruct((B, S, HIDDEN), jnp.float32),
        grid=grid,
        in_specs=[
            pl.BlockSpec((bblk, S, HIDDEN), lambda i: (i, 0, 0)),
            pl.BlockSpec((HIDDEN, QKV_DIM), lambda i: (0, 0)),
            pl.BlockSpec((HIDDEN, HIDDEN), lambda i: (0, 0)),
            pl.BlockSpec((S, 2 * HEAD_DIM), lambda i: (0, 0)),
        ],
        out_specs=pl.BlockSpec((bblk, S, HIDDEN), lambda i: (i, 0, 0)),
        compiler_params=pltpu.CompilerParams(
            dimension_semantics=("parallel",)),
    )(x_bf, fused_params["wqkv_t"], fused_params["wo_t"], cs)


# ------------------------------ plain-JAX reference --------------------------
def rotate_half(x):
    x1 = x[..., : x.shape[-1] // 2]
    x2 = x[..., x.shape[-1] // 2:]
    return jnp.concatenate((-x2, x1), axis=-1)


def _ref_cos_sin(seq_len):
    inv_freq = 1.0 / (ROPE_THETA ** (
        jnp.arange(0, HEAD_DIM, 2, dtype=jnp.float32) / HEAD_DIM))
    pos = jnp.arange(seq_len, dtype=jnp.float32)
    freqs = pos[:, None] * inv_freq[None, :]
    emb = jnp.concatenate([freqs, freqs], axis=-1)
    return jnp.cos(emb), jnp.sin(emb)


def reference_forward(x, params):
    B, S, _ = x.shape
    q = (x @ params["q"].T).reshape(B, S, NUM_HEADS, HEAD_DIM).transpose(0, 2, 1, 3)
    k = (x @ params["k"].T).reshape(B, S, NUM_KV_HEADS, HEAD_DIM).transpose(0, 2, 1, 3)
    v = (x @ params["v"].T).reshape(B, S, NUM_KV_HEADS, HEAD_DIM).transpose(0, 2, 1, 3)
    cos, sin = _ref_cos_sin(S)
    cos = cos[None, None]
    sin = sin[None, None]
    q = q * cos + rotate_half(q) * sin
    k = k * cos + rotate_half(k) * sin
    k = jnp.repeat(k, N_REP, axis=1)
    v = jnp.repeat(v, N_REP, axis=1)
    scores = jnp.einsum("bhqd,bhkd->bhqk", q, k) * SM_SCALE
    mask = jnp.tril(jnp.ones((S, S), dtype=bool))
    scores = jnp.where(mask[None, None], scores, -jnp.inf)
    p = jax.nn.softmax(scores, axis=-1)
    o = jnp.einsum("bhqk,bhkd->bhqd", p, v)
    o = o.transpose(0, 2, 1, 3).reshape(B, S, HIDDEN)
    return o @ params["o"].T


# ----------------------------------- main ------------------------------------
if __name__ == "__main__":
    key = jax.random.PRNGKey(0)
    k1, k2, k3, k4, k5 = jax.random.split(key, 5)
    wscale = 0.02
    params = {
        "q": jax.random.normal(k1, (NUM_HEADS * HEAD_DIM, HIDDEN), jnp.float32) * wscale,
        "k": jax.random.normal(k2, (NUM_KV_HEADS * HEAD_DIM, HIDDEN), jnp.float32) * wscale,
        "v": jax.random.normal(k3, (NUM_KV_HEADS * HEAD_DIM, HIDDEN), jnp.float32) * wscale,
        "o": jax.random.normal(k4, (HIDDEN, HIDDEN), jnp.float32) * wscale,
    }
    x = jax.random.normal(k5, (BATCH, SEQ, HIDDEN), jnp.float32)

    fused_params = prepare_params(params)               # init-time fuse/transpose/bf16

    out = jax.jit(llama_flash_attention2_forward)(x, fused_params)
    out = jax.block_until_ready(out)

    ref = reference_forward(x, params)
    err = float(jnp.max(jnp.abs(out - ref)))
    denom = float(jnp.max(jnp.abs(ref))) + 1e-6
    # 2e-2 tolerance accounts for bf16 matmul operands + approximate reciprocal.
    assert math.isfinite(err) and err / denom < 2e-2, f"mismatch: max abs err {err}"
    print("KERNEL_OK")
</pallas_src>

<mosaic_0001>
module attributes {stable_mosaic.version = 11 : i64} {
  func.func @_fused_llama_attn_kernel(%arg0: i32, %arg1: memref<1x128x256xbf16, #tpu.memory_space<vmem>>, %arg2: memref<256x512xbf16, #tpu.memory_space<vmem>>, %arg3: memref<256x256xbf16, #tpu.memory_space<vmem>>, %arg4: memref<128x128xf32, #tpu.memory_space<vmem>>, %arg5: memref<1x128x256xf32, #tpu.memory_space<vmem>>) attributes {dimension_semantics = [#tpu.dimension_semantics<parallel>], iteration_bounds = array<i64: 2>, scalar_prefetch = 0 : i64, scratch_operands = 0 : i64, tpu.core_type = #tpu.core_type<tc>, window_params = [{transform_indices = @transform_0, window_bounds = array<i64: 1, 128, 256>}, {pipeline_mode = #tpu.pipeline_mode<synchronous>, transform_indices = @transform_1, window_bounds = array<i64: 256, 512>}, {pipeline_mode = #tpu.pipeline_mode<synchronous>, transform_indices = @transform_2, window_bounds = array<i64: 256, 256>}, {pipeline_mode = #tpu.pipeline_mode<synchronous>, transform_indices = @transform_3, window_bounds = array<i64: 128, 128>}, {transform_indices = @transform_4, window_bounds = array<i64: 1, 128, 256>}]} {
    %c0 = arith.constant 0 : index
    %c0_0 = arith.constant 0 : index
    %0 = vector.load %arg2[%c0, %c0_0] : memref<256x512xbf16, #tpu.memory_space<vmem>>, vector<256x512xbf16>
    %c0_1 = arith.constant 0 : index
    %c0_2 = arith.constant 0 : index
    %1 = vector.load %arg3[%c0_1, %c0_2] : memref<256x256xbf16, #tpu.memory_space<vmem>>, vector<256x256xbf16>
    %c0_3 = arith.constant 0 : index
    %c0_4 = arith.constant 0 : index
    %2 = vector.load %arg4[%c0_3, %c0_4] : memref<128x128xf32, #tpu.memory_space<vmem>>, vector<128x128xf32>
    %3 = vector.extract_strided_slice %2 {offsets = [0, 0], sizes = [128, 64], strides = [1, 1]} : vector<128x128xf32> to vector<128x64xf32>
    %4 = vector.extract_strided_slice %2 {offsets = [0, 64], sizes = [128, 64], strides = [1, 1]} : vector<128x128xf32> to vector<128x64xf32>
    %5 = tpu.iota {dimensions = array<i32: 0>} : vector<256x128xi32>
    %c128_i32 = arith.constant 128 : i32
    %c0_i32 = arith.constant 0 : i32
    %6 = arith.cmpi eq, %c128_i32, %c0_i32 : i32
    %c1_i32 = arith.constant 1 : i32
    %7 = arith.select %6, %c1_i32, %c128_i32 : i32
    %8 = vector.broadcast %7 : i32 to vector<256x128xi32>
    %9 = arith.remsi %5, %8 : vector<256x128xi32>
    %c0_i32_5 = arith.constant 0 : i32
    %10 = vector.broadcast %c0_i32_5 : i32 to vector<256x128xi32>
    %11 = arith.cmpi ne, %9, %10 : vector<256x128xi32>
    %c0_i32_6 = arith.constant 0 : i32
    %12 = vector.broadcast %c0_i32_6 : i32 to vector<256x128xi32>
    %13 = arith.cmpi slt, %9, %12 : vector<256x128xi32>
    %c0_i32_7 = arith.constant 0 : i32
    %14 = arith.cmpi slt, %7, %c0_i32_7 : i32
    %15 = vector.broadcast %14 : i1 to vector<256x128xi1>
    %16 = vector.broadcast %15 : vector<256x128xi1> to vector<256x128xi1>
    %17 = arith.xori %13, %16 : vector<256x128xi1>
    %18 = arith.andi %17, %11 : vector<256x128xi1>
    %19 = vector.broadcast %7 : i32 to vector<256x128xi32>
    %20 = arith.addi %9, %19 : vector<256x128xi32>
    %21 = arith.select %18, %20, %9 : vector<256x128xi1>, vector<256x128xi32>
    %22 = tpu.iota {dimensions = array<i32: 1>} : vector<256x128xi32>
    %23 = arith.cmpi sle, %22, %21 : vector<256x128xi32>
    %c0_8 = arith.constant 0 : index
    %c0_9 = arith.constant 0 : index
    %c0_10 = arith.constant 0 : index
    %24 = vector.load %arg1[%c0_8, %c0_9, %c0_10] : memref<1x128x256xbf16, #tpu.memory_space<vmem>>, vector<1x128x256xbf16>
    %25 = vector.shape_cast %24 : vector<1x128x256xbf16> to vector<128x256xbf16>
    %cst = arith.constant dense<0.000000e+00> : vector<128x512xf32>
    %26 = tpu.matmul %25, %0, %cst {dimension_numbers = #tpu.dot_dimension_numbers<[1], [0], [0], [1], [0, 0, 1, 1], [], []>} : vector<128x256xbf16>, vector<256x512xbf16>, vector<128x512xf32> -> vector<128x512xf32>
    %27 = vector.extract_strided_slice %26 {offsets = [0, 256], sizes = [128, 64], strides = [1, 1]} : vector<128x512xf32> to vector<128x64xf32>
    %28 = vector.extract_strided_slice %27 {offsets = [0, 32], sizes = [128, 32], strides = [1, 1]} : vector<128x64xf32> to vector<128x32xf32>
    %29 = vector.extract_strided_slice %27 {offsets = [0, 0], sizes = [128, 32], strides = [1, 1]} : vector<128x64xf32> to vector<128x32xf32>
    %30 = tpu.concatenate %28, %29 in 1 : vector<128x32xf32>, vector<128x32xf32> -> vector<128x64xf32>
    %31 = arith.mulf %27, %3 : vector<128x64xf32>
    %32 = arith.mulf %30, %4 : vector<128x64xf32>
    %33 = arith.addf %31, %32 : vector<128x64xf32>
    %34 = arith.truncf %33 : vector<128x64xf32> to vector<128x64xbf16>
    %35 = vector.extract_strided_slice %26 {offsets = [0, 384], sizes = [128, 64], strides = [1, 1]} : vector<128x512xf32> to vector<128x64xf32>
    %36 = arith.truncf %35 : vector<128x64xf32> to vector<128x64xbf16>
    %37 = vector.extract_strided_slice %26 {offsets = [0, 0], sizes = [128, 64], strides = [1, 1]} : vector<128x512xf32> to vector<128x64xf32>
    %38 = vector.extract_strided_slice %37 {offsets = [0, 32], sizes = [128, 32], strides = [1, 1]} : vector<128x64xf32> to vector<128x32xf32>
    %39 = vector.extract_strided_slice %37 {offsets = [0, 0], sizes = [128, 32], strides = [1, 1]} : vector<128x64xf32> to vector<128x32xf32>
    %40 = tpu.concatenate %38, %39 in 1 : vector<128x32xf32>, vector<128x32xf32> -> vector<128x64xf32>
    %41 = arith.mulf %37, %3 : vector<128x64xf32>
    %42 = arith.mulf %40, %4 : vector<128x64xf32>
    %43 = arith.addf %41, %42 : vector<128x64xf32>
    %44 = vector.extract_strided_slice %26 {offsets = [0, 64], sizes = [128, 64], strides = [1, 1]} : vector<128x512xf32> to vector<128x64xf32>
    %45 = vector.extract_strided_slice %44 {offsets = [0, 32], sizes = [128, 32], strides = [1, 1]} : vector<128x64xf32> to vector<128x32xf32>
    %46 = vector.extract_strided_slice %44 {offsets = [0, 0], sizes = [128, 32], strides = [1, 1]} : vector<128x64xf32> to vector<128x32xf32>
    %47 = tpu.concatenate %45, %46 in 1 : vector<128x32xf32>, vector<128x32xf32> -> vector<128x64xf32>
    %48 = arith.mulf %44, %3 : vector<128x64xf32>
    %49 = arith.mulf %47, %4 : vector<128x64xf32>
    %50 = arith.addf %48, %49 : vector<128x64xf32>
    %51 = tpu.concatenate %43, %50 in 0 : vector<128x64xf32>, vector<128x64xf32> -> vector<256x64xf32>
    %cst_11 = arith.constant 1.250000e-01 : f32
    %52 = vector.broadcast %cst_11 : f32 to vector<256x64xf32>
    %53 = arith.mulf %51, %52 : vector<256x64xf32>
    %54 = arith.truncf %53 : vector<256x64xf32> to vector<256x64xbf16>
    %cst_12 = arith.constant dense<0.000000e+00> : vector<256x128xf32>
    %55 = tpu.matmul %54, %34, %cst_12 {dimension_numbers = #tpu.dot_dimension_numbers<[1], [1], [0], [0], [0, 0, 1, 0], [], []>} : vector<256x64xbf16>, vector<128x64xbf16>, vector<256x128xf32> -> vector<256x128xf32>
    %cst_13 = arith.constant dense<0xFF800000> : vector<256xf32>
    %56 = vector.multi_reduction <maximumf>, %55, %cst_13 [1] : vector<256x128xf32> to vector<256xf32>
    %57 = vector.shape_cast %56 : vector<256xf32> to vector<256x1xf32>
    %58 = vector.broadcast %57 : vector<256x1xf32> to vector<256x128xf32>
    %59 = arith.subf %55, %58 : vector<256x128xf32>
    %60 = math.exp %59 : vector<256x128xf32>
    %cst_14 = arith.constant 0.000000e+00 : f32
    %61 = vector.broadcast %cst_14 : f32 to vector<256x128xf32>
    %62 = arith.select %23, %60, %61 : vector<256x128xi1>, vector<256x128xf32>
    %cst_15 = arith.constant dense<0.000000e+00> : vector<256xf32>
    %63 = vector.multi_reduction <add>, %62, %cst_15 [1] : vector<256x128xf32> to vector<256xf32>
    %64 = vector.shape_cast %63 : vector<256xf32> to vector<256x1xf32>
    %65 = arith.truncf %62 : vector<256x128xf32> to vector<256x128xbf16>
    %cst_16 = arith.constant dense<0.000000e+00> : vector<256x64xf32>
    %66 = tpu.matmul %65, %36, %cst_16 {dimension_numbers = #tpu.dot_dimension_numbers<[1], [0], [0], [1], [0, 0, 1, 1], [], []>} : vector<256x128xbf16>, vector<128x64xbf16>, vector<256x64xf32> -> vector<256x64xf32>
    %67 = tpu.reciprocal %64 {approx = true} : vector<256x1xf32> -> vector<256x1xf32>
    %68 = vector.broadcast %67 : vector<256x1xf32> to vector<256x64xf32>
    %69 = arith.mulf %66, %68 : vector<256x64xf32>
    %70 = vector.extract_strided_slice %69 {offsets = [0, 0], sizes = [128, 64], strides = [1, 1]} : vector<256x64xf32> to vector<128x64xf32>
    %71 = vector.extract_strided_slice %69 {offsets = [128, 0], sizes = [128, 64], strides = [1, 1]} : vector<256x64xf32> to vector<128x64xf32>
    %72 = tpu.concatenate %70, %71 in 1 : vector<128x64xf32>, vector<128x64xf32> -> vector<128x128xf32>
    %73 = vector.extract_strided_slice %26 {offsets = [0, 320], sizes = [128, 64], strides = [1, 1]} : vector<128x512xf32> to vector<128x64xf32>
    %74 = vector.extract_strided_slice %73 {offsets = [0, 32], sizes = [128, 32], strides = [1, 1]} : vector<128x64xf32> to vector<128x32xf32>
    %75 = vector.extract_strided_slice %73 {offsets = [0, 0], sizes = [128, 32], strides = [1, 1]} : vector<128x64xf32> to vector<128x32xf32>
    %76 = tpu.concatenate %74, %75 in 1 : vector<128x32xf32>, vector<128x32xf32> -> vector<128x64xf32>
    %77 = arith.mulf %73, %3 : vector<128x64xf32>
    %78 = arith.mulf %76, %4 : vector<128x64xf32>
    %79 = arith.addf %77, %78 : vector<128x64xf32>
    %80 = arith.truncf %79 : vector<128x64xf32> to vector<128x64xbf16>
    %81 = vector.extract_strided_slice %26 {offsets = [0, 448], sizes = [128, 64], strides = [1, 1]} : vector<128x512xf32> to vector<128x64xf32>
    %82 = arith.truncf %81 : vector<128x64xf32> to vector<128x64xbf16>
    %83 = vector.extract_strided_slice %26 {offsets = [0, 128], sizes = [128, 64], strides = [1, 1]} : vector<128x512xf32> to vector<128x64xf32>
    %84 = vector.extract_strided_slice %83 {offsets = [0, 32], sizes = [128, 32], strides = [1, 1]} : vector<128x64xf32> to vector<128x32xf32>
    %85 = vector.extract_strided_slice %83 {offsets = [0, 0], sizes = [128, 32], strides = [1, 1]} : vector<128x64xf32> to vector<128x32xf32>
    %86 = tpu.concatenate %84, %85 in 1 : vector<128x32xf32>, vector<128x32xf32> -> vector<128x64xf32>
    %87 = arith.mulf %83, %3 : vector<128x64xf32>
    %88 = arith.mulf %86, %4 : vector<128x64xf32>
    %89 = arith.addf %87, %88 : vector<128x64xf32>
    %90 = vector.extract_strided_slice %26 {offsets = [0, 192], sizes = [128, 64], strides = [1, 1]} : vector<128x512xf32> to vector<128x64xf32>
    %91 = vector.extract_strided_slice %90 {offsets = [0, 32], sizes = [128, 32], strides = [1, 1]} : vector<128x64xf32> to vector<128x32xf32>
    %92 = vector.extract_strided_slice %90 {offsets = [0, 0], sizes = [128, 32], strides = [1, 1]} : vector<128x64xf32> to vector<128x32xf32>
    %93 = tpu.concatenate %91, %92 in 1 : vector<128x32xf32>, vector<128x32xf32> -> vector<128x64xf32>
    %94 = arith.mulf %90, %3 : vector<128x64xf32>
    %95 = arith.mulf %93, %4 : vector<128x64xf32>
    %96 = arith.addf %94, %95 : vector<128x64xf32>
    %97 = tpu.concatenate %89, %96 in 0 : vector<128x64xf32>, vector<128x64xf32> -> vector<256x64xf32>
    %cst_17 = arith.constant 1.250000e-01 : f32
    %98 = vector.broadcast %cst_17 : f32 to vector<256x64xf32>
    %99 = arith.mulf %97, %98 : vector<256x64xf32>
    %100 = arith.truncf %99 : vector<256x64xf32> to vector<256x64xbf16>
    %cst_18 = arith.constant dense<0.000000e+00> : vector<256x128xf32>
    %101 = tpu.matmul %100, %80, %cst_18 {dimension_numbers = #tpu.dot_dimension_numbers<[1], [1], [0], [0], [0, 0, 1, 0], [], []>} : vector<256x64xbf16>, vector<128x64xbf16>, vector<256x128xf32> -> vector<256x128xf32>
    %cst_19 = arith.constant dense<0xFF800000> : vector<256xf32>
    %102 = vector.multi_reduction <maximumf>, %101, %cst_19 [1] : vector<256x128xf32> to vector<256xf32>
    %103 = vector.shape_cast %102 : vector<256xf32> to vector<256x1xf32>
    %104 = vector.broadcast %103 : vector<256x1xf32> to vector<256x128xf32>
    %105 = arith.subf %101, %104 : vector<256x128xf32>
    %106 = math.exp %105 : vector<256x128xf32>
    %cst_20 = arith.constant 0.000000e+00 : f32
    %107 = vector.broadcast %cst_20 : f32 to vector<256x128xf32>
    %108 = arith.select %23, %106, %107 : vector<256x128xi1>, vector<256x128xf32>
    %cst_21 = arith.constant dense<0.000000e+00> : vector<256xf32>
    %109 = vector.multi_reduction <add>, %108, %cst_21 [1] : vector<256x128xf32> to vector<256xf32>
    %110 = vector.shape_cast %109 : vector<256xf32> to vector<256x1xf32>
    %111 = arith.truncf %108 : vector<256x128xf32> to vector<256x128xbf16>
    %cst_22 = arith.constant dense<0.000000e+00> : vector<256x64xf32>
    %112 = tpu.matmul %111, %82, %cst_22 {dimension_numbers = #tpu.dot_dimension_numbers<[1], [0], [0], [1], [0, 0, 1, 1], [], []>} : vector<256x128xbf16>, vector<128x64xbf16>, vector<256x64xf32> -> vector<256x64xf32>
    %113 = tpu.reciprocal %110 {approx = true} : vector<256x1xf32> -> vector<256x1xf32>
    %114 = vector.broadcast %113 : vector<256x1xf32> to vector<256x64xf32>
    %115 = arith.mulf %112, %114 : vector<256x64xf32>
    %116 = vector.extract_strided_slice %115 {offsets = [0, 0], sizes = [128, 64], strides = [1, 1]} : vector<256x64xf32> to vector<128x64xf32>
    %117 = vector.extract_strided_slice %115 {offsets = [128, 0], sizes = [128, 64], strides = [1, 1]} : vector<256x64xf32> to vector<128x64xf32>
    %118 = tpu.concatenate %116, %117 in 1 : vector<128x64xf32>, vector<128x64xf32> -> vector<128x128xf32>
    %119 = tpu.concatenate %72, %118 in 1 : vector<128x128xf32>, vector<128x128xf32> -> vector<128x256xf32>
    %120 = arith.truncf %119 : vector<128x256xf32> to vector<128x256xbf16>
    %cst_23 = arith.constant dense<0.000000e+00> : vector<128x256xf32>
    %121 = tpu.matmul %120, %1, %cst_23 {dimension_numbers = #tpu.dot_dimension_numbers<[1], [0], [0], [1], [0, 0, 1, 1], [], []>} : vector<128x256xbf16>, vector<256x256xbf16>, vector<128x256xf32> -> vector<128x256xf32>
    %c0_24 = arith.constant 0 : index
    %c0_25 = arith.constant 0 : index
    %c0_26 = arith.constant 0 : index
    %122 = vector.load %arg5[%c0_24, %c0_25, %c0_26] : memref<1x128x256xf32, #tpu.memory_space<vmem>>, vector<1x128x256xf32>
    %123 = vector.shape_cast %122 : vector<1x128x256xf32> to vector<128x256xf32>
    %124 = vector.shape_cast %121 : vector<128x256xf32> to vector<1x128x256xf32>
    tpu.vector_store %arg5[%c0_24, %c0_25, %c0_26], %124 {strides = array<i32>} : memref<1x128x256xf32, #tpu.memory_space<vmem>>, vector<1x128x256xf32>,
    return
  }
  func.func @transform_0(%arg0: i32) -> (i32, i32, i32) {
    %c0_i32 = arith.constant 0 : i32
    %c0_i32_0 = arith.constant 0 : i32
    %c0_i32_1 = arith.constant 0 : i32
    return %arg0, %c0_i32, %c0_i32_0 : i32, i32, i32
  }
  func.func @transform_1(%arg0: i32) -> (i32, i32) {
    %c0_i32 = arith.constant 0 : i32
    %c0_i32_0 = arith.constant 0 : i32
    %c0_i32_1 = arith.constant 0 : i32
    return %c0_i32, %c0_i32_0 : i32, i32
  }
  func.func @transform_2(%arg0: i32) -> (i32, i32) {
    %c0_i32 = arith.constant 0 : i32
    %c0_i32_0 = arith.constant 0 : i32
    %c0_i32_1 = arith.constant 0 : i32
    return %c0_i32, %c0_i32_0 : i32, i32
  }
  func.func @transform_3(%arg0: i32) -> (i32, i32) {
    %c0_i32 = arith.constant 0 : i32
    %c0_i32_0 = arith.constant 0 : i32
    %c0_i32_1 = arith.constant 0 : i32
    return %c0_i32, %c0_i32_0 : i32, i32
  }
  func.func @transform_4(%arg0: i32) -> (i32, i32, i32) {
    %c0_i32 = arith.constant 0 : i32
    %c0_i32_0 = arith.constant 0 : i32
    %c0_i32_1 = arith.constant 0 : i32
    return %arg0, %c0_i32, %c0_i32_0 : i32, i32, i32
  }
}

</mosaic_0001>

<llo_original>
// kernel: llama_flash_attention2_forward.1
$region0: #{llama_flash_attention2_forward.1}
  #allocation0 [shape = 'u32[]', space=smem, size = 0x4, offset = 0x4, fixed_abs, tag = 'smem constant byte address 0x4 - core index']
  #allocation1 [shape = 'u32[72,128]{1,0:T(1,128)}', space=vmem, size = 0x9000, scoped, tag = 'internal scratch']
  %s0 = inlined_call_operand.vmem [shape: bf16[2,128,256], index: 0, kind: input, shape index: {}]
  %s1 = inlined_call_operand.vmem [shape: bf16[256,512], index: 1, kind: input, shape index: {}]
  %s2 = inlined_call_operand.vmem [shape: bf16[256,256], index: 2, kind: input, shape index: {}]
  %s3 = inlined_call_operand.vmem [shape: f32[128,128], index: 3, kind: input, shape index: {}]
  %s4 = inlined_call_operand.hbm [shape: f32[2,128,256], index: 4, kind: output, shape index: {}]
  %s5 = sld [smem:[#allocation0]]
  $region49: #{llama_flash_attention2_forward.1} parent=0
    _
  %s7 = ssub.s32 1, %s5
  %s8 = scalar_select 0, %s7, %s5
  $region1: #{llama_flash_attention2_forward.1} parent=0
    #allocation2 [shape = 'u8[262144]{0}', space=vmem, size = 0x40000, scoped, tag = 'output window, operand 0']
    #allocation3 [shape = 's32[2]{0}', space=sflag, size = 0x8, scoped, tag = 'scoped memory for llama_flash_attention2_forward.1']
    %9 = vsyncpa [#allocation3], 0
    %s10 = scalar_lea.sflag [#allocation3], 1
    %11 = vsyncpa %s10, 0
    loop: start=0, step=1, limit=4
    $region2: #{llama_flash_attention2_forward.1} parent=1 // loop_pre_header
      _
    $region3: #{llama_flash_attention2_forward.1} parent=1 // loop_header
      %s13 = sphi 0, %s17
      %p14 = scmp.ge.s32.totalorder %s13, 4
      %s23 = sphi 0, %s25
      %s26 = sphi 0, %s23
      %s27 = sphi 0, %s26
      %s43 = sphi 0, %s27
      %s47 = sphi 0, %s47
      %s49 = sphi 0, %s47
      %s50 = sphi 0, %s49
      %s64 = sphi 0, %s50
      %s68 = sphi 0, %s68
      %s70 = sphi 0, %s68
      %s71 = sphi 0, %s70
      %s85 = sphi 0, %s71
      %s89 = sphi 0, %s89
      %s91 = sphi 0, %s89
      %s92 = sphi 0, %s91
      %s106 = sphi 0, %s92
      %s112 = sphi 0, %s114
      %s115 = sphi 0, %s112
      %s116 = sphi 0, %s115
      %s132 = sphi 0, %s116
    $region4: #{llama_flash_attention2_forward.1} parent=1 // loop_header_branch
      %16 = sbr.rel (%p14) target = $region8
    $region5: #{llama_flash_attention2_forward.1} parent=1 // loop_body
      %s18 = ssub.s32 %s13, 1
      %s19 = ssub.s32 %s13, 2
      %s20 = sadd.s32 %s13, 1
      %s21 = ssub.s32 %s13, %s20
      %p22 = scmp.eq.s32.totalorder %s21, 0
      %s24 = sadd.s32 %s23, 1
      %s25 = scalar_select %p22, %s23, %s24
      %p28 = pneg %p22
      %p29 = scmp.eq.s32.totalorder %s13, 1
      %p30 = por %p28, %p29
      %p31 = scmp.ne.s32.totalorder %s23, %s26
      %p32 = scmp.eq.s32.totalorder %s13, 0
      %p33 = por %p31, %p32
      %p34 = scmp.ne.s32.totalorder %s23, %s26
      %p35 = scmp.eq.s32.totalorder %s18, 1
      %p36 = por %p34, %p35
      %p37 = scmp.ne.s32.totalorder %s26, %s27
      %p38 = scmp.eq.s32.totalorder %s18, 0
      %p39 = por %p37, %p38
      %p40 = scmp.ne.s32.totalorder %s26, %s27
      %p41 = scmp.eq.s32.totalorder %s19, 1
      %p42 = por %p40, %p41
      %p44 = scmp.ne.s32.totalorder %s27, %s43
      %p45 = scmp.eq.s32.totalorder %s19, 0
      %p46 = por %p44, %p45
      %s48 = sadd.s32 %s47, 1
      %p51 = scmp.eq.s32.totalorder %s13, 1
      %p52 = scmp.ne.s32.totalorder %s47, %s49
      %p53 = scmp.eq.s32.totalorder %s13, 0
      %p54 = por %p52, %p53
      %p55 = scmp.ne.s32.totalorder %s47, %s49
      %p56 = scmp.eq.s32.totalorder %s18, 1
      %p57 = por %p55, %p56
      %p58 = scmp.ne.s32.totalorder %s49, %s50
      %p59 = scmp.eq.s32.totalorder %s18, 0
      %p60 = por %p58, %p59
      %p61 = scmp.ne.s32.totalorder %s49, %s50
      %p62 = scmp.eq.s32.totalorder %s19, 1
      %p63 = por %p61, %p62
      %p65 = scmp.ne.s32.totalorder %s50, %s64
      %p66 = scmp.eq.s32.totalorder %s19, 0
      %p67 = por %p65, %p66
      %s69 = sadd.s32 %s68, 1
      %p72 = scmp.eq.s32.totalorder %s13, 1
      %p73 = scmp.ne.s32.totalorder %s68, %s70
      %p74 = scmp.eq.s32.totalorder %s13, 0
      %p75 = por %p73, %p74
      %p76 = scmp.ne.s32.totalorder %s68, %s70
      %p77 = scmp.eq.s32.totalorder %s18, 1
      %p78 = por %p76, %p77
      %p79 = scmp.ne.s32.totalorder %s70, %s71
      %p80 = scmp.eq.s32.totalorder %s18, 0
      %p81 = por %p79, %p80
      %p82 = scmp.ne.s32.totalorder %s70, %s71
      %p83 = scmp.eq.s32.totalorder %s19, 1
      %p84 = por %p82, %p83
      %p86 = scmp.ne.s32.totalorder %s71, %s85
      %p87 = scmp.eq.s32.totalorder %s19, 0
      %p88 = por %p86, %p87
      %s90 = sadd.s32 %s89, 1
      %p93 = scmp.eq.s32.totalorder %s13, 1
      %p94 = scmp.ne.s32.totalorder %s89, %s91
      %p95 = scmp.eq.s32.totalorder %s13, 0
      %p96 = por %p94, %p95
      %p97 = scmp.ne.s32.totalorder %s89, %s91
      %p98 = scmp.eq.s32.totalorder %s18, 1
      %p99 = por %p97, %p98
      %p100 = scmp.ne.s32.totalorder %s91, %s92
      %p101 = scmp.eq.s32.totalorder %s18, 0
      %p102 = por %p100, %p101
      %p103 = scmp.ne.s32.totalorder %s91, %s92
      %p104 = scmp.eq.s32.totalorder %s19, 1
      %p105 = por %p103, %p104
      %p107 = scmp.ne.s32.totalorder %s92, %s106
      %p108 = scmp.eq.s32.totalorder %s19, 0
      %p109 = por %p107, %p108
      %s110 = ssub.s32 %s13, %s20
      %p111 = scmp.eq.s32.totalorder %s110, 0
      %s113 = sadd.s32 %s112, 1
      %s114 = scalar_select %p111, %s112, %s113
      %p117 = pneg %p111
      %p118 = scmp.eq.s32.totalorder %s13, 1
      %p119 = por %p117, %p118
      %p120 = scmp.ne.s32.totalorder %s112, %s115
      %p121 = scmp.eq.s32.totalorder %s13, 0
      %p122 = por %p120, %p121
      %p123 = scmp.ne.s32.totalorder %s112, %s115
      %p124 = scmp.eq.s32.totalorder %s18, 1
      %p125 = por %p123, %p124
      %p126 = scmp.ne.s32.totalorder %s115, %s116
      %p127 = scmp.eq.s32.totalorder %s18, 0
      %p128 = por %p126, %p127
      %p129 = scmp.ne.s32.totalorder %s115, %s116
      %p130 = scmp.eq.s32.totalorder %s19, 1
      %p131 = por %p129, %p130
      %p133 = scmp.ne.s32.totalorder %s116, %s132
      %p134 = scmp.eq.s32.totalorder %s19, 0
      %p135 = por %p133, %p134
      %p136 = scmp.le.s32.totalorder 1, %s13
      %p137 = scmp.lt.s32.totalorder %s13, 3
      %p138 = pnand %p136, %p137
      %p139 = pneg %p138
      // Predicated region
      $region9: #{llama_flash_attention2_forward.1} parent=5 // pred_check
        _
      $region10: #{llama_flash_attention2_forward.1} parent=5 // pred_check_branch
        %141 = sbr.rel (%p138) target = $region12
      $region11: #{llama_flash_attention2_forward.1} parent=5 // pred_region
        %s142 = ssub.s32 %s13, 1
        // Predicated region
        $region13: #{llama_flash_attention2_forward.1} parent=11 // pred_check
          %p143 = pneg %p60
        $region14: #{llama_flash_attention2_forward.1} parent=11 // pred_check_branch
          %145 = sbr.rel (%p143) target = $region16
        $region15: #{llama_flash_attention2_forward.1} parent=11 // pred_region
          _
        $region16: #{llama_flash_attention2_forward.1} parent=11 // pred_fallthru
          _
        // Predicated region
        $region17: #{llama_flash_attention2_forward.1} parent=11 // pred_check
          %p146 = pneg %p81
        $region18: #{llama_flash_attention2_forward.1} parent=11 // pred_check_branch
          %148 = sbr.rel (%p146) target = $region20
        $region19: #{llama_flash_attention2_forward.1} parent=11 // pred_region
          _
        $region20: #{llama_flash_attention2_forward.1} parent=11 // pred_fallthru
          _
        // Predicated region
        $region21: #{llama_flash_attention2_forward.1} parent=11 // pred_check
          %p149 = pneg %p102
        $region22: #{llama_flash_attention2_forward.1} parent=11 // pred_check_branch
          %151 = sbr.rel (%p149) target = $region24
        $region23: #{llama_flash_attention2_forward.1} parent=11 // pred_region
          _
        $region24: #{llama_flash_attention2_forward.1} parent=11 // pred_fallthru
          _
      $region12: #{llama_flash_attention2_forward.1} parent=5 // pred_fallthru
        _
      %p152 = scmp.lt.s32.totalorder %s13, 2
      // Predicated region
      $region25: #{llama_flash_attention2_forward.1} parent=5 // pred_check
        %p153 = pneg %p152
      $region26: #{llama_flash_attention2_forward.1} parent=5 // pred_check_branch
        %155 = sbr.rel (%p153) target = $region28
      $region27: #{llama_flash_attention2_forward.1} parent=5 // pred_region
        // Predicated region
        $region29: #{llama_flash_attention2_forward.1} parent=27 // pred_check
          %p156 = pneg %p33
        $region30: #{llama_flash_attention2_forward.1} parent=27 // pred_check_branch
          %158 = sbr.rel (%p156) target = $region32
        $region31: #{llama_flash_attention2_forward.1} parent=27 // pred_region
          %p159 = scmp.lt.s32.totalorder %s13, 1
          %s160 = scalar_select %p159, %s13, 1
          %s161 = smul.addr %s160, 32
          %s162 = smul.addr %s161, 4
          %s163 = scalar_lea.vmem %s0, %s162
        $region32: #{llama_flash_attention2_forward.1} parent=27 // pred_fallthru
          _
      $region28: #{llama_flash_attention2_forward.1} parent=5 // pred_fallthru
        _
      %p164 = scmp.le.s32.totalorder 1, %s13
      %p165 = scmp.lt.s32.totalorder %s13, 3
      %p166 = pnand %p164, %p165
      %p167 = pneg %p166
      // Predicated region
      $region33: #{llama_flash_attention2_forward.1} parent=5 // pred_check
        _
      $region34: #{llama_flash_attention2_forward.1} parent=5 // pred_check_branch
        %169 = sbr.rel (%p166) target = $region36
      $region35: #{llama_flash_attention2_forward.1} parent=5 // pred_region
        %s170 = ssub.s32 %s13, 1
        %p171 = scmp.lt.s32.totalorder %s18, 1
        %s172 = scalar_select %p171, %s18, 1
        %s173 = smul.addr %s172, 32
        %s174 = smul.addr %s173, 4
        %s175 = scalar_lea.vmem %s0, %s174
        %p176 = pneg %p39
        %p177 = pneg %p36
        %p178 = pneg %p60
        %p179 = pneg %p57
        %p180 = pneg %p81
        %p181 = pneg %p78
        %p182 = pneg %p102
        %p183 = pneg %p99
        %p184 = pneg %p128
        %p185 = pneg %p125
        %s186 = sand.u32 %s115, 1
        %s187 = scalar_lea.sflag [#allocation3], %s186
        %s188 = sand.u32 %s115, 1
        %s189 = smul.addr %s188, 256
        %s190 = scalar_lea.vmem [#allocation2], %s189
        %p191 = scmp.lt.s32.totalorder %s18, 1
        %s192 = scalar_select %p191, %s18, 1
        %s193 = smul.addr %s192, 32
        %s194 = smul.addr %s193, 4
        %s195 = scalar_lea.vmem %s0, %s194
        %v196 = vld [vmem:[%s1] sm:$0xff]
        %v197 = vld [vmem:[%s1 + $0x8] sm:$0xff]
        %v198 = vld [vmem:[%s1 + $0x10] sm:$0xff]
        %v199 = vld [vmem:[%s1 + $0x18] sm:$0xff]
        %v200 = vld [vmem:[%s1 + $0x20] sm:$0xff]
        %v201 = vld [vmem:[%s1 + $0x28] sm:$0xff]
        %v202 = vld [vmem:[%s1 + $0x30] sm:$0xff]
        %v203 = vld [vmem:[%s1 + $0x38] sm:$0xff]
        %v204 = vld [vmem:[%s1 + $0x40] sm:$0xff]
        %v205 = vld [vmem:[%s1 + $0x48] sm:$0xff]
        %v206 = vld [vmem:[%s1 + $0x50] sm:$0xff]
        %v207 = vld [vmem:[%s1 + $0x58] sm:$0xff]
        %v208 = vld [vmem:[%s1 + $0x60] sm:$0xff]
        %v209 = vld [vmem:[%s1 + $0x68] sm:$0xff]
        %v210 = vld [vmem:[%s1 + $0x70] sm:$0xff]
        %v211 = vld [vmem:[%s1 + $0x78] sm:$0xff]
        %v212 = vld [vmem:[%s1 + $0x80] sm:$0xff]
        %v213 = vld [vmem:[%s1 + $0x88] sm:$0xff]
        %v214 = vld [vmem:[%s1 + $0x90] sm:$0xff]
        %v215 = vld [vmem:[%s1 + $0x98] sm:$0xff]
        %v216 = vld [vmem:[%s1 + $0xa0] sm:$0xff]
        %v217 = vld [vmem:[%s1 + $0xa8] sm:$0xff]
        %v218 = vld [vmem:[%s1 + $0xb0] sm:$0xff]
        %v219 = vld [vmem:[%s1 + $0xb8] sm:$0xff]
        %v220 = vld [vmem:[%s1 + $0xc0] sm:$0xff]
        %v221 = vld [vmem:[%s1 + $0xc8] sm:$0xff]
        %v222 = vld [vmem:[%s1 + $0xd0] sm:$0xff]
        %v223 = vld [vmem:[%s1 + $0xd8] sm:$0xff]
        %v224 = vld [vmem:[%s1 + $0xe0] sm:$0xff]
        %v225 = vld [vmem:[%s1 + $0xe8] sm:$0xff]
        %v226 = vld [vmem:[%s1 + $0xf0] sm:$0xff]
        %v227 = vld [vmem:[%s1 + $0xf8] sm:$0xff]
        %v228 = vld [vmem:[%s1 + $0x100] sm:$0xff]
        %v229 = vld [vmem:[%s1 + $0x108] sm:$0xff]
        %v230 = vld [vmem:[%s1 + $0x110] sm:$0xff]
        %v231 = vld [vmem:[%s1 + $0x118] sm:$0xff]
        %v232 = vld [vmem:[%s1 + $0x120] sm:$0xff]
        %v233 = vld [vmem:[%s1 + $0x128] sm:$0xff]
        %v234 = vld [vmem:[%s1 + $0x130] sm:$0xff]
        %v235 = vld [vmem:[%s1 + $0x138] sm:$0xff]
        %v236 = vld [vmem:[%s1 + $0x140] sm:$0xff]
        %v237 = vld [vmem:[%s1 + $0x148] sm:$0xff]
        %v238 = vld [vmem:[%s1 + $0x150] sm:$0xff]
        %v239 = vld [vmem:[%s1 + $0x158] sm:$0xff]
        %v240 = vld [vmem:[%s1 + $0x160] sm:$0xff]
        %v241 = vld [vmem:[%s1 + $0x168] sm:$0xff]
        %v242 = vld [vmem:[%s1 + $0x170] sm:$0xff]
        %v243 = vld [vmem:[%s1 + $0x178] sm:$0xff]
        %v244 = vld [vmem:[%s1 + $0x180] sm:$0xff]
        %v245 = vld [vmem:[%s1 + $0x188] sm:$0xff]
        %v246 = vld [vmem:[%s1 + $0x190] sm:$0xff]
        %v247 = vld [vmem:[%s1 + $0x198] sm:$0xff]
        %v248 = vld [vmem:[%s1 + $0x1a0] sm:$0xff]
        %v249 = vld [vmem:[%s1 + $0x1a8] sm:$0xff]
        %v250 = vld [vmem:[%s1 + $0x1b0] sm:$0xff]
        %v251 = vld [vmem:[%s1 + $0x1b8] sm:$0xff]
        %v252 = vld [vmem:[%s1 + $0x1c0] sm:$0xff]
        %v253 = vld [vmem:[%s1 + $0x1c8] sm:$0xff]
        %v254 = vld [vmem:[%s1 + $0x1d0] sm:$0xff]
        %v255 = vld [vmem:[%s1 + $0x1d8] sm:$0xff]
        %v256 = vld [vmem:[%s1 + $0x1e0] sm:$0xff]
        %v257 = vld [vmem:[%s1 + $0x1e8] sm:$0xff]
        %v258 = vld [vmem:[%s1 + $0x1f0] sm:$0xff]
        %v259 = vld [vmem:[%s1 + $0x1f8] sm:$0xff]
        %v260 = vld [vmem:[%s2] sm:$0xff]
        %v261 = vld [vmem:[%s2 + $0x8] sm:$0xff]
        %v262 = vld [vmem:[%s2 + $0x10] sm:$0xff]
        %v263 = vld [vmem:[%s2 + $0x18] sm:$0xff]
        %v264 = vld [vmem:[%s2 + $0x20] sm:$0xff]
        %v265 = vld [vmem:[%s2 + $0x28] sm:$0xff]
        %v266 = vld [vmem:[%s2 + $0x30] sm:$0xff]
        %v267 = vld [vmem:[%s2 + $0x38] sm:$0xff]
        %v268 = vld [vmem:[%s2 + $0x40] sm:$0xff]
        %v269 = vld [vmem:[%s2 + $0x48] sm:$0xff]
        %v270 = vld [vmem:[%s2 + $0x50] sm:$0xff]
        %v271 = vld [vmem:[%s2 + $0x58] sm:$0xff]
        %v272 = vld [vmem:[%s2 + $0x60] sm:$0xff]
        %v273 = vld [vmem:[%s2 + $0x68] sm:$0xff]
        %v274 = vld [vmem:[%s2 + $0x70] sm:$0xff]
        %v275 = vld [vmem:[%s2 + $0x78] sm:$0xff]
        %v276 = vld [vmem:[%s2 + $0x80] sm:$0xff]
        %v277 = vld [vmem:[%s2 + $0x88] sm:$0xff]
        %v278 = vld [vmem:[%s2 + $0x90] sm:$0xff]
        %v279 = vld [vmem:[%s2 + $0x98] sm:$0xff]
        %v280 = vld [vmem:[%s2 + $0xa0] sm:$0xff]
        %v281 = vld [vmem:[%s2 + $0xa8] sm:$0xff]
        %v282 = vld [vmem:[%s2 + $0xb0] sm:$0xff]
        %v283 = vld [vmem:[%s2 + $0xb8] sm:$0xff]
        %v284 = vld [vmem:[%s2 + $0xc0] sm:$0xff]
        %v285 = vld [vmem:[%s2 + $0xc8] sm:$0xff]
        %v286 = vld [vmem:[%s2 + $0xd0] sm:$0xff]
        %v287 = vld [vmem:[%s2 + $0xd8] sm:$0xff]
        %v288 = vld [vmem:[%s2 + $0xe0] sm:$0xff]
        %v289 = vld [vmem:[%s2 + $0xe8] sm:$0xff]
        %v290 = vld [vmem:[%s2 + $0xf0] sm:$0xff]
        %v291 = vld [vmem:[%s2 + $0xf8] sm:$0xff]
        %v292 = vld [vmem:[%s3] sm:$0xff]
        %v293 = vld [vmem:[%s3 + $0x8] sm:$0xff]
        %v294 = vld [vmem:[%s3 + $0x10] sm:$0xff]
        %v295 = vld [vmem:[%s3 + $0x18] sm:$0xff]
        %v296 = vld [vmem:[%s3 + $0x20] sm:$0xff]
        %v297 = vld [vmem:[%s3 + $0x28] sm:$0xff]
        %v298 = vld [vmem:[%s3 + $0x30] sm:$0xff]
        %v299 = vld [vmem:[%s3 + $0x38] sm:$0xff]
        %v300 = vld [vmem:[%s3 + $0x40] sm:$0xff]
        %v301 = vld [vmem:[%s3 + $0x48] sm:$0xff]
        %v302 = vld [vmem:[%s3 + $0x50] sm:$0xff]
        %v303 = vld [vmem:[%s3 + $0x58] sm:$0xff]
        %v304 = vld [vmem:[%s3 + $0x60] sm:$0xff]
        %v305 = vld [vmem:[%s3 + $0x68] sm:$0xff]
        %v306 = vld [vmem:[%s3 + $0x70] sm:$0xff]
        %v307 = vld [vmem:[%s3 + $0x78] sm:$0xff]
        %v308 = vlaneseq
        %v309 = vshrl.u32 %v308, 7
        %v310 = vadd.s32 %v309, 8
        %v311 = vadd.s32 %v309, 16
        %v312 = vadd.s32 %v309, 24
        %v313 = vadd.s32 %v309, 32
        %v314 = vadd.s32 %v309, 40
        %v315 = vadd.s32 %v309, 48
        %v316 = vadd.s32 %v309, 56
        %v317 = vadd.s32 %v309, 64
        %v318 = vadd.s32 %v309, 72
        %v319 = vadd.s32 %v309, 80
        %v320 = vadd.s32 %v309, 88
        %v321 = vadd.s32 %v309, 96
        %v322 = vadd.s32 %v309, 104
        %v323 = vadd.s32 %v309, 112
        %v324 = vadd.s32 %v309, 120
        %v325 = vadd.s32 %v309, 128
        %v326 = vadd.s32 %v309, 136
        %v327 = vadd.s32 %v309, 144
        %v328 = vadd.s32 %v309, 152
        %v329 = vadd.s32 %v309, 160
        %v330 = vadd.s32 %v309, 168
        %v331 = vadd.s32 %v309, 176
        %v332 = vadd.s32 %v309, 184
        %v333 = vadd.s32 %v309, 192
        %v334 = vadd.s32 %v309, 200
        %v335 = vadd.s32 %v309, 208
        %v336 = vadd.s32 %v309, 216
        %v337 = vadd.s32 %v309, 224
        %v338 = vadd.s32 %v309, 232
        %v339 = vadd.s32 %v309, 240
        %v340 = vadd.s32 %v309, 248
        %vm341 = vcmp.lt.s32.totalorder %v309, 0
        %v342 = vsub.s32 0, %v309
        %v343 = vsel %vm341, %v342, %v309
        %v344 = vshrl.u32 %v343, 7
        %v345 = vand.u32 %v343, 127
        %v346 = vsub.s32 0, %v345
        %v347 = vsel %vm341, %v346, %v345
        %vm348 = vcmp.lt.s32.totalorder %v310, 0
        %v349 = vsub.s32 0, %v310
        %v350 = vsel %vm348, %v349, %v310
        %v351 = vshrl.u32 %v350, 7
        %v352 = vand.u32 %v350, 127
        %v353 = vsub.s32 0, %v352
        %v354 = vsel %vm348, %v353, %v352
        %vm355 = vcmp.lt.s32.totalorder %v311, 0
        %v356 = vsub.s32 0, %v311
        %v357 = vsel %vm355, %v356, %v311
        %v358 = vshrl.u32 %v357, 7
        %v359 = vand.u32 %v357, 127
        %v360 = vsub.s32 0, %v359
        %v361 = vsel %vm355, %v360, %v359
        %vm362 = vcmp.lt.s32.totalorder %v312, 0
        %v363 = vsub.s32 0, %v312
        %v364 = vsel %vm362, %v363, %v312
        %v365 = vshrl.u32 %v364, 7
        %v366 = vand.u32 %v364, 127
        %v367 = vsub.s32 0, %v366
        %v368 = vsel %vm362, %v367, %v366
        %vm369 = vcmp.lt.s32.totalorder %v313, 0
        %v370 = vsub.s32 0, %v313
        %v371 = vsel %vm369, %v370, %v313
        %v372 = vshrl.u32 %v371, 7
        %v373 = vand.u32 %v371, 127
        %v374 = vsub.s32 0, %v373
        %v375 = vsel %vm369, %v374, %v373
        %vm376 = vcmp.lt.s32.totalorder %v314, 0
        %v377 = vsub.s32 0, %v314
        %v378 = vsel %vm376, %v377, %v314
        %v379 = vshrl.u32 %v378, 7
        %v380 = vand.u32 %v378, 127
        %v381 = vsub.s32 0, %v380
        %v382 = vsel %vm376, %v381, %v380
        %vm383 = vcmp.lt.s32.totalorder %v315, 0
        %v384 = vsub.s32 0, %v315
        %v385 = vsel %vm383, %v384, %v315
        %v386 = vshrl.u32 %v385, 7
        %v387 = vand.u32 %v385, 127
        %v388 = vsub.s32 0, %v387
        %v389 = vsel %vm383, %v388, %v387
        %vm390 = vcmp.lt.s32.totalorder %v316, 0
        %v391 = vsub.s32 0, %v316
        %v392 = vsel %vm390, %v391, %v316
        %v393 = vshrl.u32 %v392, 7
        %v394 = vand.u32 %v392, 127
        %v395 = vsub.s32 0, %v394
        %v396 = vsel %vm390, %v395, %v394
        %vm397 = vcmp.lt.s32.totalorder %v317, 0
        %v398 = vsub.s32 0, %v317
        %v399 = vsel %vm397, %v398, %v317
        %v400 = vshrl.u32 %v399, 7
        %v401 = vand.u32 %v399, 127
        %v402 = vsub.s32 0, %v401
        %v403 = vsel %vm397, %v402, %v401
        %vm404 = vcmp.lt.s32.totalorder %v318, 0
        %v405 = vsub.s32 0, %v318
        %v406 = vsel %vm404, %v405, %v318
        %v407 = vshrl.u32 %v406, 7
        %v408 = vand.u32 %v406, 127
        %v409 = vsub.s32 0, %v408
        %v410 = vsel %vm404, %v409, %v408
        %vm411 = vcmp.lt.s32.totalorder %v319, 0
        %v412 = vsub.s32 0, %v319
        %v413 = vsel %vm411, %v412, %v319
        %v414 = vshrl.u32 %v413, 7
        %v415 = vand.u32 %v413, 127
        %v416 = vsub.s32 0, %v415
        %v417 = vsel %vm411, %v416, %v415
        %vm418 = vcmp.lt.s32.totalorder %v320, 0
        %v419 = vsub.s32 0, %v320
        %v420 = vsel %vm418, %v419, %v320
        %v421 = vshrl.u32 %v420, 7
        %v422 = vand.u32 %v420, 127
        %v423 = vsub.s32 0, %v422
        %v424 = vsel %vm418, %v423, %v422
        %vm425 = vcmp.lt.s32.totalorder %v321, 0
        %v426 = vsub.s32 0, %v321
        %v427 = vsel %vm425, %v426, %v321
        %v428 = vshrl.u32 %v427, 7
        %v429 = vand.u32 %v427, 127
        %v430 = vsub.s32 0, %v429
        %v431 = vsel %vm425, %v430, %v429
        %vm432 = vcmp.lt.s32.totalorder %v322, 0
        %v433 = vsub.s32 0, %v322
        %v434 = vsel %vm432, %v433, %v322
        %v435 = vshrl.u32 %v434, 7
        %v436 = vand.u32 %v434, 127
        %v437 = vsub.s32 0, %v436
        %v438 = vsel %vm432, %v437, %v436
        %vm439 = vcmp.lt.s32.totalorder %v323, 0
        %v440 = vsub.s32 0, %v323
        %v441 = vsel %vm439, %v440, %v323
        %v442 = vshrl.u32 %v441, 7
        %v443 = vand.u32 %v441, 127
        %v444 = vsub.s32 0, %v443
        %v445 = vsel %vm439, %v444, %v443
        %vm446 = vcmp.lt.s32.totalorder %v324, 0
        %v447 = vsub.s32 0, %v324
        %v448 = vsel %vm446, %v447, %v324
        %v449 = vshrl.u32 %v448, 7
        %v450 = vand.u32 %v448, 127
        %v451 = vsub.s32 0, %v450
        %v452 = vsel %vm446, %v451, %v450
        %vm453 = vcmp.lt.s32.totalorder %v325, 0
        %v454 = vsub.s32 0, %v325
        %v455 = vsel %vm453, %v454, %v325
        %v456 = vshrl.u32 %v455, 7
        %v457 = vand.u32 %v455, 127
        %v458 = vsub.s32 0, %v457
        %v459 = vsel %vm453, %v458, %v457
        %vm460 = vcmp.lt.s32.totalorder %v326, 0
        %v461 = vsub.s32 0, %v326
        %v462 = vsel %vm460, %v461, %v326
        %v463 = vshrl.u32 %v462, 7
        %v464 = vand.u32 %v462, 127
        %v465 = vsub.s32 0, %v464
        %v466 = vsel %vm460, %v465, %v464
        %vm467 = vcmp.lt.s32.totalorder %v327, 0
        %v468 = vsub.s32 0, %v327
        %v469 = vsel %vm467, %v468, %v327
        %v470 = vshrl.u32 %v469, 7
        %v471 = vand.u32 %v469, 127
        %v472 = vsub.s32 0, %v471
        %v473 = vsel %vm467, %v472, %v471
        %vm474 = vcmp.lt.s32.totalorder %v328, 0
        %v475 = vsub.s32 0, %v328
        %v476 = vsel %vm474, %v475, %v328
        %v477 = vshrl.u32 %v476, 7
        %v478 = vand.u32 %v476, 127
        %v479 = vsub.s32 0, %v478
        %v480 = vsel %vm474, %v479, %v478
        %vm481 = vcmp.lt.s32.totalorder %v329, 0
        %v482 = vsub.s32 0, %v329
        %v483 = vsel %vm481, %v482, %v329
        %v484 = vshrl.u32 %v483, 7
        %v485 = vand.u32 %v483, 127
        %v486 = vsub.s32 0, %v485
        %v487 = vsel %vm481, %v486, %v485
        %vm488 = vcmp.lt.s32.totalorder %v330, 0
        %v489 = vsub.s32 0, %v330
        %v490 = vsel %vm488, %v489, %v330
        %v491 = vshrl.u32 %v490, 7
        %v492 = vand.u32 %v490, 127
        %v493 = vsub.s32 0, %v492
        %v494 = vsel %vm488, %v493, %v492
        %vm495 = vcmp.lt.s32.totalorder %v331, 0
        %v496 = vsub.s32 0, %v331
        %v497 = vsel %vm495, %v496, %v331
        %v498 = vshrl.u32 %v497, 7
        %v499 = vand.u32 %v497, 127
        %v500 = vsub.s32 0, %v499
        %v501 = vsel %vm495, %v500, %v499
        %vm502 = vcmp.lt.s32.totalorder %v332, 0
        %v503 = vsub.s32 0, %v332
        %v504 = vsel %vm502, %v503, %v332
        %v505 = vshrl.u32 %v504, 7
        %v506 = vand.u32 %v504, 127
        %v507 = vsub.s32 0, %v506
        %v508 = vsel %vm502, %v507, %v506
        %vm509 = vcmp.lt.s32.totalorder %v333, 0
        %v510 = vsub.s32 0, %v333
        %v511 = vsel %vm509, %v510, %v333
        %v512 = vshrl.u32 %v511, 7
        %v513 = vand.u32 %v511, 127
        %v514 = vsub.s32 0, %v513
        %v515 = vsel %vm509, %v514, %v513
        %vm516 = vcmp.lt.s32.totalorder %v334, 0
        %v517 = vsub.s32 0, %v334
        %v518 = vsel %vm516, %v517, %v334
        %v519 = vshrl.u32 %v518, 7
        %v520 = vand.u32 %v518, 127
        %v521 = vsub.s32 0, %v520
        %v522 = vsel %vm516, %v521, %v520
        %vm523 = vcmp.lt.s32.totalorder %v335, 0
        %v524 = vsub.s32 0, %v335
        %v525 = vsel %vm523, %v524, %v335
        %v526 = vshrl.u32 %v525, 7
        %v527 = vand.u32 %v525, 127
        %v528 = vsub.s32 0, %v527
        %v529 = vsel %vm523, %v528, %v527
        %vm530 = vcmp.lt.s32.totalorder %v336, 0
        %v531 = vsub.s32 0, %v336
        %v532 = vsel %vm530, %v531, %v336
        %v533 = vshrl.u32 %v532, 7
        %v534 = vand.u32 %v532, 127
        %v535 = vsub.s32 0, %v534
        %v536 = vsel %vm530, %v535, %v534
        %vm537 = vcmp.lt.s32.totalorder %v337, 0
        %v538 = vsub.s32 0, %v337
        %v539 = vsel %vm537, %v538, %v337
        %v540 = vshrl.u32 %v539, 7
        %v541 = vand.u32 %v539, 127
        %v542 = vsub.s32 0, %v541
        %v543 = vsel %vm537, %v542, %v541
        %vm544 = vcmp.lt.s32.totalorder %v338, 0
        %v545 = vsub.s32 0, %v338
        %v546 = vsel %vm544, %v545, %v338
        %v547 = vshrl.u32 %v546, 7
        %v548 = vand.u32 %v546, 127
        %v549 = vsub.s32 0, %v548
        %v550 = vsel %vm544, %v549, %v548
        %vm551 = vcmp.lt.s32.totalorder %v339, 0
        %v552 = vsub.s32 0, %v339
        %v553 = vsel %vm551, %v552, %v339
        %v554 = vshrl.u32 %v553, 7
        %v555 = vand.u32 %v553, 127
        %v556 = vsub.s32 0, %v555
        %v557 = vsel %vm551, %v556, %v555
        %vm558 = vcmp.lt.s32.totalorder %v340, 0
        %v559 = vsub.s32 0, %v340
        %v560 = vsel %vm558, %v559, %v340
        %v561 = vshrl.u32 %v560, 7
        %v562 = vand.u32 %v560, 127
        %v563 = vsub.s32 0, %v562
        %v564 = vsel %vm558, %v563, %v562
        %vm565 = vcmp.ne.s32.totalorder %v347, 0
        %vm566 = vcmp.ne.s32.totalorder %v354, 0
        %vm567 = vcmp.ne.s32.totalorder %v361, 0
        %vm568 = vcmp.ne.s32.totalorder %v368, 0
        %vm569 = vcmp.ne.s32.totalorder %v375, 0
        %vm570 = vcmp.ne.s32.totalorder %v382, 0
        %vm571 = vcmp.ne.s32.totalorder %v389, 0
        %vm572 = vcmp.ne.s32.totalorder %v396, 0
        %vm573 = vcmp.ne.s32.totalorder %v403, 0
        %vm574 = vcmp.ne.s32.totalorder %v410, 0
        %vm575 = vcmp.ne.s32.totalorder %v417, 0
        %vm576 = vcmp.ne.s32.totalorder %v424, 0
        %vm577 = vcmp.ne.s32.totalorder %v431, 0
        %vm578 = vcmp.ne.s32.totalorder %v438, 0
        %vm579 = vcmp.ne.s32.totalorder %v445, 0
        %vm580 = vcmp.ne.s32.totalorder %v452, 0
        %vm581 = vcmp.ne.s32.totalorder %v459, 0
        %vm582 = vcmp.ne.s32.totalorder %v466, 0
        %vm583 = vcmp.ne.s32.totalorder %v473, 0
        %vm584 = vcmp.ne.s32.totalorder %v480, 0
        %vm585 = vcmp.ne.s32.totalorder %v487, 0
        %vm586 = vcmp.ne.s32.totalorder %v494, 0
        %vm587 = vcmp.ne.s32.totalorder %v501, 0
        %vm588 = vcmp.ne.s32.totalorder %v508, 0
        %vm589 = vcmp.ne.s32.totalorder %v515, 0
        %vm590 = vcmp.ne.s32.totalorder %v522, 0
        %vm591 = vcmp.ne.s32.totalorder %v529, 0
        %vm592 = vcmp.ne.s32.totalorder %v536, 0
        %vm593 = vcmp.ne.s32.totalorder %v543, 0
        %vm594 = vcmp.ne.s32.totalorder %v550, 0
        %vm595 = vcmp.ne.s32.totalorder %v557, 0
        %vm596 = vcmp.ne.s32.totalorder %v564, 0
        %vm597 = vcmp.lt.s32.totalorder %v347, 0
        %vm598 = vcmp.lt.s32.totalorder %v354, 0
        %vm599 = vcmp.lt.s32.totalorder %v361, 0
        %vm600 = vcmp.lt.s32.totalorder %v368, 0
        %vm601 = vcmp.lt.s32.totalorder %v375, 0
        %vm602 = vcmp.lt.s32.totalorder %v382, 0
        %vm603 = vcmp.lt.s32.totalorder %v389, 0
        %vm604 = vcmp.lt.s32.totalorder %v396, 0
        %vm605 = vcmp.lt.s32.totalorder %v403, 0
        %vm606 = vcmp.lt.s32.totalorder %v410, 0
        %vm607 = vcmp.lt.s32.totalorder %v417, 0
        %vm608 = vcmp.lt.s32.totalorder %v424, 0
        %vm609 = vcmp.lt.s32.totalorder %v431, 0
        %vm610 = vcmp.lt.s32.totalorder %v438, 0
        %vm611 = vcmp.lt.s32.totalorder %v445, 0
        %vm612 = vcmp.lt.s32.totalorder %v452, 0
        %vm613 = vcmp.lt.s32.totalorder %v459, 0
        %vm614 = vcmp.lt.s32.totalorder %v466, 0
        %vm615 = vcmp.lt.s32.totalorder %v473, 0
        %vm616 = vcmp.lt.s32.totalorder %v480, 0
        %vm617 = vcmp.lt.s32.totalorder %v487, 0
        %vm618 = vcmp.lt.s32.totalorder %v494, 0
        %vm619 = vcmp.lt.s32.totalorder %v501, 0
        %vm620 = vcmp.lt.s32.totalorder %v508, 0
        %vm621 = vcmp.lt.s32.totalorder %v515, 0
        %vm622 = vcmp.lt.s32.totalorder %v522, 0
        %vm623 = vcmp.lt.s32.totalorder %v529, 0
        %vm624 = vcmp.lt.s32.totalorder %v536, 0
        %vm625 = vcmp.lt.s32.totalorder %v543, 0
        %vm626 = vcmp.lt.s32.totalorder %v550, 0
        %vm627 = vcmp.lt.s32.totalorder %v557, 0
        %vm628 = vcmp.lt.s32.totalorder %v564, 0
        %vm629 = vmand %vm597, %vm565
        %vm630 = vmand %vm598, %vm566
        %vm631 = vmand %vm599, %vm567
        %vm632 = vmand %vm600, %vm568
        %vm633 = vmand %vm601, %vm569
        %vm634 = vmand %vm602, %vm570
        %vm635 = vmand %vm603, %vm571
        %vm636 = vmand %vm604, %vm572
        %vm637 = vmand %vm605, %vm573
        %vm638 = vmand %vm606, %vm574
        %vm639 = vmand %vm607, %vm575
        %vm640 = vmand %vm608, %vm576
        %vm641 = vmand %vm609, %vm577
        %vm642 = vmand %vm610, %vm578
        %vm643 = vmand %vm611, %vm579
        %vm644 = vmand %vm612, %vm580
        %vm645 = vmand %vm613, %vm581
        %vm646 = vmand %vm614, %vm582
        %vm647 = vmand %vm615, %vm583
        %vm648 = vmand %vm616, %vm584
        %vm649 = vmand %vm617, %vm585
        %vm650 = vmand %vm618, %vm586
        %vm651 = vmand %vm619, %vm587
        %vm652 = vmand %vm620, %vm588
        %vm653 = vmand %vm621, %vm589
        %vm654 = vmand %vm622, %vm590
        %vm655 = vmand %vm623, %vm591
        %vm656 = vmand %vm624, %vm592
        %vm657 = vmand %vm625, %vm593
        %vm658 = vmand %vm626, %vm594
        %vm659 = vmand %vm627, %vm595
        %vm660 = vmand %vm628, %vm596
        %v661 = vadd.s32 %v347, 128
        %v662 = vadd.s32 %v354, 128
        %v663 = vadd.s32 %v361, 128
        %v664 = vadd.s32 %v368, 128
        %v665 = vadd.s32 %v375, 128
        %v666 = vadd.s32 %v382, 128
        %v667 = vadd.s32 %v389, 128
        %v668 = vadd.s32 %v396, 128
        %v669 = vadd.s32 %v403, 128
        %v670 = vadd.s32 %v410, 128
        %v671 = vadd.s32 %v417, 128
        %v672 = vadd.s32 %v424, 128
        %v673 = vadd.s32 %v431, 128
        %v674 = vadd.s32 %v438, 128
        %v675 = vadd.s32 %v445, 128
        %v676 = vadd.s32 %v452, 128
        %v677 = vadd.s32 %v459, 128
        %v678 = vadd.s32 %v466, 128
        %v679 = vadd.s32 %v473, 128
        %v680 = vadd.s32 %v480, 128
        %v681 = vadd.s32 %v487, 128
        %v682 = vadd.s32 %v494, 128
        %v683 = vadd.s32 %v501, 128
        %v684 = vadd.s32 %v508, 128
        %v685 = vadd.s32 %v515, 128
        %v686 = vadd.s32 %v522, 128
        %v687 = vadd.s32 %v529, 128
        %v688 = vadd.s32 %v536, 128
        %v689 = vadd.s32 %v543, 128
        %v690 = vadd.s32 %v550, 128
        %v691 = vadd.s32 %v557, 128
        %v692 = vadd.s32 %v564, 128
        %v693 = vsel %vm629, %v661, %v347
        %v694 = vsel %vm630, %v662, %v354
        %v695 = vsel %vm631, %v663, %v361
        %v696 = vsel %vm632, %v664, %v368
        %v697 = vsel %vm633, %v665, %v375
        %v698 = vsel %vm634, %v666, %v382
        %v699 = vsel %vm635, %v667, %v389
        %v700 = vsel %vm636, %v668, %v396
        %v701 = vsel %vm637, %v669, %v403
        %v702 = vsel %vm638, %v670, %v410
        %v703 = vsel %vm639, %v671, %v417
        %v704 = vsel %vm640, %v672, %v424
        %v705 = vsel %vm641, %v673, %v431
        %v706 = vsel %vm642, %v674, %v438
        %v707 = vsel %vm643, %v675, %v445
        %v708 = vsel %vm644, %v676, %v452
        %v709 = vsel %vm645, %v677, %v459
        %v710 = vsel %vm646, %v678, %v466
        %v711 = vsel %vm647, %v679, %v473
        %v712 = vsel %vm648, %v680, %v480
        %v713 = vsel %vm649, %v681, %v487
        %v714 = vsel %vm650, %v682, %v494
        %v715 = vsel %vm651, %v683, %v501
        %v716 = vsel %vm652, %v684, %v508
        %v717 = vsel %vm653, %v685, %v515
        %v718 = vsel %vm654, %v686, %v522
        %v719 = vsel %vm655, %v687, %v529
        %v720 = vsel %vm656, %v688, %v536
        %v721 = vsel %vm657, %v689, %v543
        %v722 = vsel %vm658, %v690, %v550
        %v723 = vsel %vm659, %v691, %v557
        %v724 = vsel %vm660, %v692, %v564
        %v725 = vlaneseq
        %v726 = vand.u32 %v725, 127
        %vm727 = vcmp.le.s32.totalorder %v726, %v693
        %vm728 = vcmp.le.s32.totalorder %v726, %v694
        %vm729 = vcmp.le.s32.totalorder %v726, %v695
        %vm730 = vcmp.le.s32.totalorder %v726, %v696
        %vm731 = vcmp.le.s32.totalorder %v726, %v697
        %vm732 = vcmp.le.s32.totalorder %v726, %v698
        %vm733 = vcmp.le.s32.totalorder %v726, %v699
        %vm734 = vcmp.le.s32.totalorder %v726, %v700
        %vm735 = vcmp.le.s32.totalorder %v726, %v701
        %vm736 = vcmp.le.s32.totalorder %v726, %v702
        %vm737 = vcmp.le.s32.totalorder %v726, %v703
        %vm738 = vcmp.le.s32.totalorder %v726, %v704
        %vm739 = vcmp.le.s32.totalorder %v726, %v705
        %vm740 = vcmp.le.s32.totalorder %v726, %v706
        %vm741 = vcmp.le.s32.totalorder %v726, %v707
        %vm742 = vcmp.le.s32.totalorder %v726, %v708
        %vm743 = vcmp.le.s32.totalorder %v726, %v709
        %vm744 = vcmp.le.s32.totalorder %v726, %v710
        %vm745 = vcmp.le.s32.totalorder %v726, %v711
        %vm746 = vcmp.le.s32.totalorder %v726, %v712
        %vm747 = vcmp.le.s32.totalorder %v726, %v713
        %vm748 = vcmp.le.s32.totalorder %v726, %v714
        %vm749 = vcmp.le.s32.totalorder %v726, %v715
        %vm750 = vcmp.le.s32.totalorder %v726, %v716
        %vm751 = vcmp.le.s32.totalorder %v726, %v717
        %vm752 = vcmp.le.s32.totalorder %v726, %v718
        %vm753 = vcmp.le.s32.totalorder %v726, %v719
        %vm754 = vcmp.le.s32.totalorder %v726, %v720
        %vm755 = vcmp.le.s32.totalorder %v726, %v721
        %vm756 = vcmp.le.s32.totalorder %v726, %v722
        %vm757 = vcmp.le.s32.totalorder %v726, %v723
        %vm758 = vcmp.le.s32.totalorder %v726, %v724
        %v759 = vld [vmem:[%s195] sm:$0xff]
        %v760 = vld [vmem:[%s195 + $0x8] sm:$0xff]
        %v761 = vld [vmem:[%s195 + $0x10] sm:$0xff]
        %v762 = vld [vmem:[%s195 + $0x18] sm:$0xff]
        %v763 = vld [vmem:[%s195 + $0x20] sm:$0xff]
        %v764 = vld [vmem:[%s195 + $0x28] sm:$0xff]
        %v765 = vld [vmem:[%s195 + $0x30] sm:$0xff]
        %v766 = vld [vmem:[%s195 + $0x38] sm:$0xff]
        %v767 = vld [vmem:[%s195 + $0x40] sm:$0xff]
        %v768 = vld [vmem:[%s195 + $0x48] sm:$0xff]
        %v769 = vld [vmem:[%s195 + $0x50] sm:$0xff]
        %v770 = vld [vmem:[%s195 + $0x58] sm:$0xff]
        %v771 = vld [vmem:[%s195 + $0x60] sm:$0xff]
        %v772 = vld [vmem:[%s195 + $0x68] sm:$0xff]
        %v773 = vld [vmem:[%s195 + $0x70] sm:$0xff]
        %v774 = vld [vmem:[%s195 + $0x78] sm:$0xff]
        %v791 = vunpack.c.l.b16 %v759
        %v792 = vunpack.c.h.b16 %v759
        %v793 = vunpack.c.l.b16 %v760
        %v794 = vunpack.c.h.b16 %v760
        %v795 = vunpack.c.l.b16 %v761
        %v796 = vunpack.c.h.b16 %v761
        %v797 = vunpack.c.l.b16 %v762
        %v798 = vunpack.c.h.b16 %v762
        %v799 = vunpack.c.l.b16 %v763
        %v800 = vunpack.c.h.b16 %v763
        %v801 = vunpack.c.l.b16 %v764
        %v802 = vunpack.c.h.b16 %v764
        %v803 = vunpack.c.l.b16 %v765
        %v804 = vunpack.c.h.b16 %v765
        %v805 = vunpack.c.l.b16 %v766
        %v806 = vunpack.c.h.b16 %v766
        %v807 = vunpack.c.l.b16 %v767
        %v808 = vunpack.c.h.b16 %v767
        %v809 = vunpack.c.l.b16 %v768
        %v810 = vunpack.c.h.b16 %v768
        %v811 = vunpack.c.l.b16 %v769
        %v812 = vunpack.c.h.b16 %v769
        %v813 = vunpack.c.l.b16 %v770
        %v814 = vunpack.c.h.b16 %v770
        %v815 = vunpack.c.l.b16 %v771
        %v816 = vunpack.c.h.b16 %v771
        %v817 = vunpack.c.l.b16 %v772
        %v818 = vunpack.c.h.b16 %v772
        %v819 = vunpack.c.l.b16 %v773
        %v820 = vunpack.c.h.b16 %v773
        %v821 = vunpack.c.l.b16 %v774
        %v822 = vunpack.c.h.b16 %v774
        %v823 = vpack.c.b16 %v793, %v791
        %v824 = vpack.c.b16 %v794, %v792
        %v825 = vpack.c.b16 %v797, %v795
        %v826 = vpack.c.b16 %v798, %v796
        %v827 = vpack.c.b16 %v801, %v799
        %v828 = vpack.c.b16 %v802, %v800
        %v829 = vpack.c.b16 %v805, %v803
        %v830 = vpack.c.b16 %v806, %v804
        %v831 = vpack.c.b16 %v809, %v807
        %v832 = vpack.c.b16 %v810, %v808
        %v833 = vpack.c.b16 %v813, %v811
        %v834 = vpack.c.b16 %v814, %v812
        %v835 = vpack.c.b16 %v817, %v815
        %v836 = vpack.c.b16 %v818, %v816
        %v837 = vpack.c.b16 %v821, %v819
        %v838 = vpack.c.b16 %v822, %v820
        %v919 = vunpack.c.l.b16 %v196
        %v920 = vunpack.c.h.b16 %v196
        %v921 = vunpack.c.l.b16 %v197
        %v922 = vunpack.c.h.b16 %v197
        %v923 = vunpack.c.l.b16 %v198
        %v924 = vunpack.c.h.b16 %v198
        %v925 = vunpack.c.l.b16 %v199
        %v926 = vunpack.c.h.b16 %v199
        %v927 = vunpack.c.l.b16 %v200
        %v928 = vunpack.c.h.b16 %v200
        %v929 = vunpack.c.l.b16 %v201
        %v930 = vunpack.c.h.b16 %v201
        %v931 = vunpack.c.l.b16 %v202
        %v932 = vunpack.c.h.b16 %v202
        %v933 = vunpack.c.l.b16 %v203
        %v934 = vunpack.c.h.b16 %v203
        %v935 = vunpack.c.l.b16 %v204
        %v936 = vunpack.c.h.b16 %v204
        %v937 = vunpack.c.l.b16 %v205
        %v938 = vunpack.c.h.b16 %v205
        %v939 = vunpack.c.l.b16 %v206
        %v940 = vunpack.c.h.b16 %v206
        %v941 = vunpack.c.l.b16 %v207
        %v942 = vunpack.c.h.b16 %v207
        %v943 = vunpack.c.l.b16 %v208
        %v944 = vunpack.c.h.b16 %v208
        %v945 = vunpack.c.l.b16 %v209
        %v946 = vunpack.c.h.b16 %v209
        %v947 = vunpack.c.l.b16 %v210
        %v948 = vunpack.c.h.b16 %v210
        %v949 = vunpack.c.l.b16 %v211
        %v950 = vunpack.c.h.b16 %v211
        %v951 = vunpack.c.l.b16 %v212
        %v952 = vunpack.c.h.b16 %v212
        %v953 = vunpack.c.l.b16 %v213
        %v954 = vunpack.c.h.b16 %v213
        %v955 = vunpack.c.l.b16 %v214
        %v956 = vunpack.c.h.b16 %v214
        %v957 = vunpack.c.l.b16 %v215
        %v958 = vunpack.c.h.b16 %v215
        %v959 = vunpack.c.l.b16 %v216
        %v960 = vunpack.c.h.b16 %v216
        %v961 = vunpack.c.l.b16 %v217
        %v962 = vunpack.c.h.b16 %v217
        %v963 = vunpack.c.l.b16 %v218
        %v964 = vunpack.c.h.b16 %v218
        %v965 = vunpack.c.l.b16 %v219
        %v966 = vunpack.c.h.b16 %v219
        %v967 = vunpack.c.l.b16 %v220
        %v968 = vunpack.c.h.b16 %v220
        %v969 = vunpack.c.l.b16 %v221
        %v970 = vunpack.c.h.b16 %v221
        %v971 = vunpack.c.l.b16 %v222
        %v972 = vunpack.c.h.b16 %v222
        %v973 = vunpack.c.l.b16 %v223
        %v974 = vunpack.c.h.b16 %v223
        %v975 = vunpack.c.l.b16 %v224
        %v976 = vunpack.c.h.b16 %v224
        %v977 = vunpack.c.l.b16 %v225
        %v978 = vunpack.c.h.b16 %v225
        %v979 = vunpack.c.l.b16 %v226
        %v980 = vunpack.c.h.b16 %v226
        %v981 = vunpack.c.l.b16 %v227
        %v982 = vunpack.c.h.b16 %v227
        %v983 = vunpack.c.l.b16 %v228
        %v984 = vunpack.c.h.b16 %v228
        %v985 = vunpack.c.l.b16 %v229
        %v986 = vunpack.c.h.b16 %v229
        %v987 = vunpack.c.l.b16 %v230
        %v988 = vunpack.c.h.b16 %v230
        %v989 = vunpack.c.l.b16 %v231
        %v990 = vunpack.c.h.b16 %v231
        %v991 = vunpack.c.l.b16 %v232
        %v992 = vunpack.c.h.b16 %v232
        %v993 = vunpack.c.l.b16 %v233
        %v994 = vunpack.c.h.b16 %v233
        %v995 = vunpack.c.l.b16 %v234
        %v996 = vunpack.c.h.b16 %v234
        %v997 = vunpack.c.l.b16 %v235
        %v998 = vunpack.c.h.b16 %v235
        %v999 = vunpack.c.l.b16 %v236
        %v1000 = vunpack.c.h.b16 %v236
        %v1001 = vunpack.c.l.b16 %v237
        %v1002 = vunpack.c.h.b16 %v237
        %v1003 = vunpack.c.l.b16 %v238
        %v1004 = vunpack.c.h.b16 %v238
        %v1005 = vunpack.c.l.b16 %v239
        %v1006 = vunpack.c.h.b16 %v239
        %v1007 = vunpack.c.l.b16 %v240
        %v1008 = vunpack.c.h.b16 %v240
        %v1009 = vunpack.c.l.b16 %v241
        %v1010 = vunpack.c.h.b16 %v241
        %v1011 = vunpack.c.l.b16 %v242
        %v1012 = vunpack.c.h.b16 %v242
        %v1013 = vunpack.c.l.b16 %v243
        %v1014 = vunpack.c.h.b16 %v243
        %v1015 = vunpack.c.l.b16 %v244
        %v1016 = vunpack.c.h.b16 %v244
        %v1017 = vunpack.c.l.b16 %v245
        %v1018 = vunpack.c.h.b16 %v245
        %v1019 = vunpack.c.l.b16 %v246
        %v1020 = vunpack.c.h.b16 %v246
        %v1021 = vunpack.c.l.b16 %v247
        %v1022 = vunpack.c.h.b16 %v247
        %v1023 = vunpack.c.l.b16 %v248
        %v1024 = vunpack.c.h.b16 %v248
        %v1025 = vunpack.c.l.b16 %v249
        %v1026 = vunpack.c.h.b16 %v249
        %v1027 = vunpack.c.l.b16 %v250
        %v1028 = vunpack.c.h.b16 %v250
        %v1029 = vunpack.c.l.b16 %v251
        %v1030 = vunpack.c.h.b16 %v251
        %v1031 = vunpack.c.l.b16 %v252
        %v1032 = vunpack.c.h.b16 %v252
        %v1033 = vunpack.c.l.b16 %v253
        %v1034 = vunpack.c.h.b16 %v253
        %v1035 = vunpack.c.l.b16 %v254
        %v1036 = vunpack.c.h.b16 %v254
        %v1037 = vunpack.c.l.b16 %v255
        %v1038 = vunpack.c.h.b16 %v255
        %v1039 = vunpack.c.l.b16 %v256
        %v1040 = vunpack.c.h.b16 %v256
        %v1041 = vunpack.c.l.b16 %v257
        %v1042 = vunpack.c.h.b16 %v257
        %v1043 = vunpack.c.l.b16 %v258
        %v1044 = vunpack.c.h.b16 %v258
        %v1045 = vunpack.c.l.b16 %v259
        %v1046 = vunpack.c.h.b16 %v259
        %v1047 = vpack.c.b16 %v923, %v919
        %v1048 = vpack.c.b16 %v924, %v920
        %v1049 = vpack.c.b16 %v925, %v921
        %v1050 = vpack.c.b16 %v926, %v922
        %v1051 = vpack.c.b16 %v931, %v927
        %v1052 = vpack.c.b16 %v932, %v928
        %v1053 = vpack.c.b16 %v933, %v929
        %v1054 = vpack.c.b16 %v934, %v930
        %v1055 = vpack.c.b16 %v939, %v935
        %v1056 = vpack.c.b16 %v940, %v936
        %v1057 = vpack.c.b16 %v941, %v937
        %v1058 = vpack.c.b16 %v942, %v938
        %v1059 = vpack.c.b16 %v947, %v943
        %v1060 = vpack.c.b16 %v948, %v944
        %v1061 = vpack.c.b16 %v949, %v945
        %v1062 = vpack.c.b16 %v950, %v946
        %v1063 = vpack.c.b16 %v955, %v951
        %v1064 = vpack.c.b16 %v956, %v952
        %v1065 = vpack.c.b16 %v957, %v953
        %v1066 = vpack.c.b16 %v958, %v954
        %v1067 = vpack.c.b16 %v963, %v959
        %v1068 = vpack.c.b16 %v964, %v960
        %v1069 = vpack.c.b16 %v965, %v961
        %v1070 = vpack.c.b16 %v966, %v962
        %v1071 = vpack.c.b16 %v971, %v967
        %v1072 = vpack.c.b16 %v972, %v968
        %v1073 = vpack.c.b16 %v973, %v969
        %v1074 = vpack.c.b16 %v974, %v970
        %v1075 = vpack.c.b16 %v979, %v975
        %v1076 = vpack.c.b16 %v980, %v976
        %v1077 = vpack.c.b16 %v981, %v977
        %v1078 = vpack.c.b16 %v982, %v978
        %v1079 = vpack.c.b16 %v987, %v983
        %v1080 = vpack.c.b16 %v988, %v984
        %v1081 = vpack.c.b16 %v989, %v985
        %v1082 = vpack.c.b16 %v990, %v986
        %v1083 = vpack.c.b16 %v995, %v991
        %v1084 = vpack.c.b16 %v996, %v992
        %v1085 = vpack.c.b16 %v997, %v993
        %v1086 = vpack.c.b16 %v998, %v994
        %v1087 = vpack.c.b16 %v1003, %v999
        %v1088 = vpack.c.b16 %v1004, %v1000
        %v1089 = vpack.c.b16 %v1005, %v1001
        %v1090 = vpack.c.b16 %v1006, %v1002
        %v1091 = vpack.c.b16 %v1011, %v1007
        %v1092 = vpack.c.b16 %v1012, %v1008
        %v1093 = vpack.c.b16 %v1013, %v1009
        %v1094 = vpack.c.b16 %v1014, %v1010
        %v1095 = vpack.c.b16 %v1019, %v1015
        %v1096 = vpack.c.b16 %v1020, %v1016
        %v1097 = vpack.c.b16 %v1021, %v1017
        %v1098 = vpack.c.b16 %v1022, %v1018
        %v1099 = vpack.c.b16 %v1027, %v1023
        %v1100 = vpack.c.b16 %v1028, %v1024
        %v1101 = vpack.c.b16 %v1029, %v1025
        %v1102 = vpack.c.b16 %v1030, %v1026
        %v1103 = vpack.c.b16 %v1035, %v1031
        %v1104 = vpack.c.b16 %v1036, %v1032
        %v1105 = vpack.c.b16 %v1037, %v1033
        %v1106 = vpack.c.b16 %v1038, %v1034
        %v1107 = vpack.c.b16 %v1043, %v1039
        %v1108 = vpack.c.b16 %v1044, %v1040
        %v1109 = vpack.c.b16 %v1045, %v1041
        %v1110 = vpack.c.b16 %v1046, %v1042
        %1175 = vmatpush.bf16.msra.mxu0 %v1075
        %1176 = vmatpush.bf16.msra.mxu0 %v1071
        %1177 = vmatpush.bf16.msra.mxu0 %v1067
        %1178 = vmatpush.bf16.msra.mxu0 %v1063
        %1179 = vmatpush.bf16.msra.mxu0 %v1059
        %1180 = vmatpush.bf16.msra.mxu0 %v1055
        %1181 = vmatpush.bf16.msra.mxu0 %v1051
        %1182 = vmatpush.bf16.msra.mxu0 %v1047
        %1183 = vmatmul.bf16.gmra.mxu0 %v823
        %v1184 = vpop.f32.mrf.mxu0
        %v1185 = vadd.f32 0.0, %v1184
        %v1186 = vpop.f32.mrf.mxu0
        %v1187 = vadd.f32 0.0, %v1186
        %1188 = vmatmul.bf16.gmra.mxu0 %v825
        %v1189 = vpop.f32.mrf.mxu0
        %v1190 = vadd.f32 0.0, %v1189
        %v1191 = vpop.f32.mrf.mxu0
        %v1192 = vadd.f32 0.0, %v1191
        %1193 = vmatmul.bf16.gmra.mxu0 %v827
        %v1194 = vpop.f32.mrf.mxu0
        %v1195 = vadd.f32 0.0, %v1194
        %v1196 = vpop.f32.mrf.mxu0
        %v1197 = vadd.f32 0.0, %v1196
        %1198 = vmatmul.bf16.gmra.mxu0 %v829
        %v1199 = vpop.f32.mrf.mxu0
        %v1200 = vadd.f32 0.0, %v1199
        %v1201 = vpop.f32.mrf.mxu0
        %v1202 = vadd.f32 0.0, %v1201
        %1203 = vmatmul.bf16.gmra.mxu0 %v831
        %v1204 = vpop.f32.mrf.mxu0
        %v1205 = vadd.f32 0.0, %v1204
        %v1206 = vpop.f32.mrf.mxu0
        %v1207 = vadd.f32 0.0, %v1206
        %1208 = vmatmul.bf16.gmra.mxu0 %v833
        %v1209 = vpop.f32.mrf.mxu0
        %v1210 = vadd.f32 0.0, %v1209
        %v1211 = vpop.f32.mrf.mxu0
        %v1212 = vadd.f32 0.0, %v1211
        %1213 = vmatmul.bf16.gmra.mxu0 %v835
        %v1214 = vpop.f32.mrf.mxu0
        %v1215 = vadd.f32 0.0, %v1214
        %v1216 = vpop.f32.mrf.mxu0
        %v1217 = vadd.f32 0.0, %v1216
        %1218 = vmatmul.bf16.gmra.mxu0 %v837
        %v1219 = vpop.f32.mrf.mxu0
        %v1220 = vadd.f32 0.0, %v1219
        %v1221 = vpop.f32.mrf.mxu0
        %v1222 = vadd.f32 0.0, %v1221
        %1223 = vdwg.mxu0
        %1224 = vmatpush.bf16.msra.mxu0 %v1107
        %1225 = vmatpush.bf16.msra.mxu0 %v1103
        %1226 = vmatpush.bf16.msra.mxu0 %v1099
        %1227 = vmatpush.bf16.msra.mxu0 %v1095
        %1228 = vmatpush.bf16.msra.mxu0 %v1091
        %1229 = vmatpush.bf16.msra.mxu0 %v1087
        %1230 = vmatpush.bf16.msra.mxu0 %v1083
        %1231 = vmatpush.bf16.msra.mxu0 %v1079
        %1232 = vmatmul.bf16.gmra.mxu0 %v824
        %v1233 = vpop.f32.mrf.mxu0
        %v1234 = vadd.f32 %v1185, %v1233
        %v1235 = vpop.f32.mrf.mxu0
        %v1236 = vadd.f32 %v1187, %v1235
        %1237 = vmatmul.bf16.gmra.mxu0 %v826
        %v1238 = vpop.f32.mrf.mxu0
        %v1239 = vadd.f32 %v1190, %v1238
        %v1240 = vpop.f32.mrf.mxu0
        %v1241 = vadd.f32 %v1192, %v1240
        %1242 = vmatmul.bf16.gmra.mxu0 %v828
        %v1243 = vpop.f32.mrf.mxu0
        %v1244 = vadd.f32 %v1195, %v1243
        %v1245 = vpop.f32.mrf.mxu0
        %v1246 = vadd.f32 %v1197, %v1245
        %1247 = vmatmul.bf16.gmra.mxu0 %v830
        %v1248 = vpop.f32.mrf.mxu0
        %v1249 = vadd.f32 %v1200, %v1248
        %v1250 = vpop.f32.mrf.mxu0
        %v1251 = vadd.f32 %v1202, %v1250
        %1252 = vmatmul.bf16.gmra.mxu0 %v832
        %v1253 = vpop.f32.mrf.mxu0
        %v1254 = vadd.f32 %v1205, %v1253
        %v1255 = vpop.f32.mrf.mxu0
        %v1256 = vadd.f32 %v1207, %v1255
        %1257 = vmatmul.bf16.gmra.mxu0 %v834
        %v1258 = vpop.f32.mrf.mxu0
        %v1259 = vadd.f32 %v1210, %v1258
        %v1260 = vpop.f32.mrf.mxu0
        %v1261 = vadd.f32 %v1212, %v1260
        %1262 = vmatmul.bf16.gmra.mxu0 %v836
        %v1263 = vpop.f32.mrf.mxu0
        %v1264 = vadd.f32 %v1215, %v1263
        %v1265 = vpop.f32.mrf.mxu0
        %v1266 = vadd.f32 %v1217, %v1265
        %1267 = vmatmul.bf16.gmra.mxu0 %v838
        %v1268 = vpop.f32.mrf.mxu0
        %v1269 = vadd.f32 %v1220, %v1268
        %v1270 = vpop.f32.mrf.mxu0
        %v1271 = vadd.f32 %v1222, %v1270
        %1272 = vdwg.mxu0
        %1273 = vmatpush.bf16.msra.mxu0 %v1076
        %1274 = vmatpush.bf16.msra.mxu0 %v1072
        %1275 = vmatpush.bf16.msra.mxu0 %v1068
        %1276 = vmatpush.bf16.msra.mxu0 %v1064
        %1277 = vmatpush.bf16.msra.mxu0 %v1060
        %1278 = vmatpush.bf16.msra.mxu0 %v1056
        %1279 = vmatpush.bf16.msra.mxu0 %v1052
        %1280 = vmatpush.bf16.msra.mxu0 %v1048
        %1281 = vmatmul.bf16.gmra.mxu0 %v823
        %v1282 = vpop.f32.mrf.mxu0
        %v1283 = vadd.f32 0.0, %v1282
        %v1284 = vpop.f32.mrf.mxu0
        %v1285 = vadd.f32 0.0, %v1284
        %1286 = vmatmul.bf16.gmra.mxu0 %v825
        %v1287 = vpop.f32.mrf.mxu0
        %v1288 = vadd.f32 0.0, %v1287
        %v1289 = vpop.f32.mrf.mxu0
        %v1290 = vadd.f32 0.0, %v1289
        %1291 = vmatmul.bf16.gmra.mxu0 %v827
        %v1292 = vpop.f32.mrf.mxu0
        %v1293 = vadd.f32 0.0, %v1292
        %v1294 = vpop.f32.mrf.mxu0
        %v1295 = vadd.f32 0.0, %v1294
        %1296 = vmatmul.bf16.gmra.mxu0 %v829
        %v1297 = vpop.f32.mrf.mxu0
        %v1298 = vadd.f32 0.0, %v1297
        %v1299 = vpop.f32.mrf.mxu0
        %v1300 = vadd.f32 0.0, %v1299
        %1301 = vmatmul.bf16.gmra.mxu0 %v831
        %v1302 = vpop.f32.mrf.mxu0
        %v1303 = vadd.f32 0.0, %v1302
        %v1304 = vpop.f32.mrf.mxu0
        %v1305 = vadd.f32 0.0, %v1304
        %1306 = vmatmul.bf16.gmra.mxu0 %v833
        %v1307 = vpop.f32.mrf.mxu0
        %v1308 = vadd.f32 0.0, %v1307
        %v1309 = vpop.f32.mrf.mxu0
        %v1310 = vadd.f32 0.0, %v1309
        %1311 = vmatmul.bf16.gmra.mxu0 %v835
        %v1312 = vpop.f32.mrf.mxu0
        %v1313 = vadd.f32 0.0, %v1312
        %v1314 = vpop.f32.mrf.mxu0
        %v1315 = vadd.f32 0.0, %v1314
        %1316 = vmatmul.bf16.gmra.mxu0 %v837
        %v1317 = vpop.f32.mrf.mxu0
        %v1318 = vadd.f32 0.0, %v1317
        %v1319 = vpop.f32.mrf.mxu0
        %v1320 = vadd.f32 0.0, %v1319
        %1321 = vdwg.mxu0
        %1322 = vmatpush.bf16.msra.mxu0 %v1108
        %1323 = vmatpush.bf16.msra.mxu0 %v1104
        %1324 = vmatpush.bf16.msra.mxu0 %v1100
        %1325 = vmatpush.bf16.msra.mxu0 %v1096
        %1326 = vmatpush.bf16.msra.mxu0 %v1092
        %1327 = vmatpush.bf16.msra.mxu0 %v1088
        %1328 = vmatpush.bf16.msra.mxu0 %v1084
        %1329 = vmatpush.bf16.msra.mxu0 %v1080
        %1330 = vmatmul.bf16.gmra.mxu0 %v824
        %v1331 = vpop.f32.mrf.mxu0
        %v1332 = vadd.f32 %v1283, %v1331
        %v1333 = vpop.f32.mrf.mxu0
        %v1334 = vadd.f32 %v1285, %v1333
        %1335 = vmatmul.bf16.gmra.mxu0 %v826
        %v1336 = vpop.f32.mrf.mxu0
        %v1337 = vadd.f32 %v1288, %v1336
        %v1338 = vpop.f32.mrf.mxu0
        %v1339 = vadd.f32 %v1290, %v1338
        %1340 = vmatmul.bf16.gmra.mxu0 %v828
        %v1341 = vpop.f32.mrf.mxu0
        %v1342 = vadd.f32 %v1293, %v1341
        %v1343 = vpop.f32.mrf.mxu0
        %v1344 = vadd.f32 %v1295, %v1343
        %1345 = vmatmul.bf16.gmra.mxu0 %v830
        %v1346 = vpop.f32.mrf.mxu0
        %v1347 = vadd.f32 %v1298, %v1346
        %v1348 = vpop.f32.mrf.mxu0
        %v1349 = vadd.f32 %v1300, %v1348
        %1350 = vmatmul.bf16.gmra.mxu0 %v832
        %v1351 = vpop.f32.mrf.mxu0
        %v1352 = vadd.f32 %v1303, %v1351
        %v1353 = vpop.f32.mrf.mxu0
        %v1354 = vadd.f32 %v1305, %v1353
        %1355 = vmatmul.bf16.gmra.mxu0 %v834
        %v1356 = vpop.f32.mrf.mxu0
        %v1357 = vadd.f32 %v1308, %v1356
        %v1358 = vpop.f32.mrf.mxu0
        %v1359 = vadd.f32 %v1310, %v1358
        %1360 = vmatmul.bf16.gmra.mxu0 %v836
        %v1361 = vpop.f32.mrf.mxu0
        %v1362 = vadd.f32 %v1313, %v1361
        %v1363 = vpop.f32.mrf.mxu0
        %v1364 = vadd.f32 %v1315, %v1363
        %1365 = vmatmul.bf16.gmra.mxu0 %v838
        %v1366 = vpop.f32.mrf.mxu0
        %v1367 = vadd.f32 %v1318, %v1366
        %v1368 = vpop.f32.mrf.mxu0
        %v1369 = vadd.f32 %v1320, %v1368
        %1370 = vdwg.mxu0
        %1371 = vmatpush.bf16.msra.mxu0 %v1077
        %1372 = vmatpush.bf16.msra.mxu0 %v1073
        %1373 = vmatpush.bf16.msra.mxu0 %v1069
        %1374 = vmatpush.bf16.msra.mxu0 %v1065
        %1375 = vmatpush.bf16.msra.mxu0 %v1061
        %1376 = vmatpush.bf16.msra.mxu0 %v1057
        %1377 = vmatpush.bf16.msra.mxu0 %v1053
        %1378 = vmatpush.bf16.msra.mxu0 %v1049
        %1379 = vmatmul.bf16.gmra.mxu0 %v823
        %v1380 = vpop.f32.mrf.mxu0
        %v1381 = vadd.f32 0.0, %v1380
        %v1382 = vpop.f32.mrf.mxu0
        %v1383 = vadd.f32 0.0, %v1382
        %1384 = vmatmul.bf16.gmra.mxu0 %v825
        %v1385 = vpop.f32.mrf.mxu0
        %v1386 = vadd.f32 0.0, %v1385
        %v1387 = vpop.f32.mrf.mxu0
        %v1388 = vadd.f32 0.0, %v1387
        %1389 = vmatmul.bf16.gmra.mxu0 %v827
        %v1390 = vpop.f32.mrf.mxu0
        %v1391 = vadd.f32 0.0, %v1390
        %v1392 = vpop.f32.mrf.mxu0
        %v1393 = vadd.f32 0.0, %v1392
        %1394 = vmatmul.bf16.gmra.mxu0 %v829
        %v1395 = vpop.f32.mrf.mxu0
        %v1396 = vadd.f32 0.0, %v1395
        %v1397 = vpop.f32.mrf.mxu0
        %v1398 = vadd.f32 0.0, %v1397
        %1399 = vmatmul.bf16.gmra.mxu0 %v831
        %v1400 = vpop.f32.mrf.mxu0
        %v1401 = vadd.f32 0.0, %v1400
        %v1402 = vpop.f32.mrf.mxu0
        %v1403 = vadd.f32 0.0, %v1402
        %1404 = vmatmul.bf16.gmra.mxu0 %v833
        %v1405 = vpop.f32.mrf.mxu0
        %v1406 = vadd.f32 0.0, %v1405
        %v1407 = vpop.f32.mrf.mxu0
        %v1408 = vadd.f32 0.0, %v1407
        %1409 = vmatmul.bf16.gmra.mxu0 %v835
        %v1410 = vpop.f32.mrf.mxu0
        %v1411 = vadd.f32 0.0, %v1410
        %v1412 = vpop.f32.mrf.mxu0
        %v1413 = vadd.f32 0.0, %v1412
        %1414 = vmatmul.bf16.gmra.mxu0 %v837
        %v1415 = vpop.f32.mrf.mxu0
        %v1416 = vadd.f32 0.0, %v1415
        %v1417 = vpop.f32.mrf.mxu0
        %v1418 = vadd.f32 0.0, %v1417
        %1419 = vdwg.mxu0
        %1420 = vmatpush.bf16.msra.mxu0 %v1109
        %1421 = vmatpush.bf16.msra.mxu0 %v1105
        %1422 = vmatpush.bf16.msra.mxu0 %v1101
        %1423 = vmatpush.bf16.msra.mxu0 %v1097
        %1424 = vmatpush.bf16.msra.mxu0 %v1093
        %1425 = vmatpush.bf16.msra.mxu0 %v1089
        %1426 = vmatpush.bf16.msra.mxu0 %v1085
        %1427 = vmatpush.bf16.msra.mxu0 %v1081
        %1428 = vmatmul.bf16.gmra.mxu0 %v824
        %v1429 = vpop.f32.mrf.mxu0
        %v1430 = vadd.f32 %v1381, %v1429
        %v1431 = vpop.f32.mrf.mxu0
        %v1432 = vadd.f32 %v1383, %v1431
        %1433 = vmatmul.bf16.gmra.mxu0 %v826
        %v1434 = vpop.f32.mrf.mxu0
        %v1435 = vadd.f32 %v1386, %v1434
        %v1436 = vpop.f32.mrf.mxu0
        %v1437 = vadd.f32 %v1388, %v1436
        %1438 = vmatmul.bf16.gmra.mxu0 %v828
        %v1439 = vpop.f32.mrf.mxu0
        %v1440 = vadd.f32 %v1391, %v1439
        %v1441 = vpop.f32.mrf.mxu0
        %v1442 = vadd.f32 %v1393, %v1441
        %1443 = vmatmul.bf16.gmra.mxu0 %v830
        %v1444 = vpop.f32.mrf.mxu0
        %v1445 = vadd.f32 %v1396, %v1444
        %v1446 = vpop.f32.mrf.mxu0
        %v1447 = vadd.f32 %v1398, %v1446
        %1448 = vmatmul.bf16.gmra.mxu0 %v832
        %v1449 = vpop.f32.mrf.mxu0
        %v1450 = vadd.f32 %v1401, %v1449
        %v1451 = vpop.f32.mrf.mxu0
        %v1452 = vadd.f32 %v1403, %v1451
        %1453 = vmatmul.bf16.gmra.mxu0 %v834
        %v1454 = vpop.f32.mrf.mxu0
        %v1455 = vadd.f32 %v1406, %v1454
        %v1456 = vpop.f32.mrf.mxu0
        %v1457 = vadd.f32 %v1408, %v1456
        %1458 = vmatmul.bf16.gmra.mxu0 %v836
        %v1459 = vpop.f32.mrf.mxu0
        %v1460 = vadd.f32 %v1411, %v1459
        %v1461 = vpop.f32.mrf.mxu0
        %v1462 = vadd.f32 %v1413, %v1461
        %1463 = vmatmul.bf16.gmra.mxu0 %v838
        %v1464 = vpop.f32.mrf.mxu0
        %v1465 = vadd.f32 %v1416, %v1464
        %v1466 = vpop.f32.mrf.mxu0
        %v1467 = vadd.f32 %v1418, %v1466
        %1468 = vdwg.mxu0
        %1469 = vmatpush.bf16.msra.mxu0 %v1078
        %1470 = vmatpush.bf16.msra.mxu0 %v1074
        %1471 = vmatpush.bf16.msra.mxu0 %v1070
        %1472 = vmatpush.bf16.msra.mxu0 %v1066
        %1473 = vmatpush.bf16.msra.mxu0 %v1062
        %1474 = vmatpush.bf16.msra.mxu0 %v1058
        %1475 = vmatpush.bf16.msra.mxu0 %v1054
        %1476 = vmatpush.bf16.msra.mxu0 %v1050
        %1477 = vmatmul.bf16.gmra.mxu0 %v823
        %v1478 = vpop.f32.mrf.mxu0
        %v1479 = vadd.f32 0.0, %v1478
        %v1480 = vpop.f32.mrf.mxu0
        %v1481 = vadd.f32 0.0, %v1480
        %1482 = vmatmul.bf16.gmra.mxu0 %v825
        %v1483 = vpop.f32.mrf.mxu0
        %v1484 = vadd.f32 0.0, %v1483
        %v1485 = vpop.f32.mrf.mxu0
        %v1486 = vadd.f32 0.0, %v1485
        %1487 = vmatmul.bf16.gmra.mxu0 %v827
        %v1488 = vpop.f32.mrf.mxu0
        %v1489 = vadd.f32 0.0, %v1488
        %v1490 = vpop.f32.mrf.mxu0
        %v1491 = vadd.f32 0.0, %v1490
        %1492 = vmatmul.bf16.gmra.mxu0 %v829
        %v1493 = vpop.f32.mrf.mxu0
        %v1494 = vadd.f32 0.0, %v1493
        %v1495 = vpop.f32.mrf.mxu0
        %v1496 = vadd.f32 0.0, %v1495
        %1497 = vmatmul.bf16.gmra.mxu0 %v831
        %v1498 = vpop.f32.mrf.mxu0
        %v1499 = vadd.f32 0.0, %v1498
        %v1500 = vpop.f32.mrf.mxu0
        %v1501 = vadd.f32 0.0, %v1500
        %1502 = vmatmul.bf16.gmra.mxu0 %v833
        %v1503 = vpop.f32.mrf.mxu0
        %v1504 = vadd.f32 0.0, %v1503
        %v1505 = vpop.f32.mrf.mxu0
        %v1506 = vadd.f32 0.0, %v1505
        %1507 = vmatmul.bf16.gmra.mxu0 %v835
        %v1508 = vpop.f32.mrf.mxu0
        %v1509 = vadd.f32 0.0, %v1508
        %v1510 = vpop.f32.mrf.mxu0
        %v1511 = vadd.f32 0.0, %v1510
        %1512 = vmatmul.bf16.gmra.mxu0 %v837
        %v1513 = vpop.f32.mrf.mxu0
        %v1514 = vadd.f32 0.0, %v1513
        %v1515 = vpop.f32.mrf.mxu0
        %v1516 = vadd.f32 0.0, %v1515
        %1517 = vdwg.mxu0
        %1518 = vmatpush.bf16.msra.mxu0 %v1110
        %1519 = vmatpush.bf16.msra.mxu0 %v1106
        %1520 = vmatpush.bf16.msra.mxu0 %v1102
        %1521 = vmatpush.bf16.msra.mxu0 %v1098
        %1522 = vmatpush.bf16.msra.mxu0 %v1094
        %1523 = vmatpush.bf16.msra.mxu0 %v1090
        %1524 = vmatpush.bf16.msra.mxu0 %v1086
        %1525 = vmatpush.bf16.msra.mxu0 %v1082
        %1526 = vmatmul.bf16.gmra.mxu0 %v824
        %v1527 = vpop.f32.mrf.mxu0
        %v1528 = vadd.f32 %v1479, %v1527
        %v1529 = vpop.f32.mrf.mxu0
        %v1530 = vadd.f32 %v1481, %v1529
        %1531 = vmatmul.bf16.gmra.mxu0 %v826
        %v1532 = vpop.f32.mrf.mxu0
        %v1533 = vadd.f32 %v1484, %v1532
        %v1534 = vpop.f32.mrf.mxu0
        %v1535 = vadd.f32 %v1486, %v1534
        %1536 = vmatmul.bf16.gmra.mxu0 %v828
        %v1537 = vpop.f32.mrf.mxu0
        %v1538 = vadd.f32 %v1489, %v1537
        %v1539 = vpop.f32.mrf.mxu0
        %v1540 = vadd.f32 %v1491, %v1539
        %1541 = vmatmul.bf16.gmra.mxu0 %v830
        %v1542 = vpop.f32.mrf.mxu0
        %v1543 = vadd.f32 %v1494, %v1542
        %v1544 = vpop.f32.mrf.mxu0
        %v1545 = vadd.f32 %v1496, %v1544
        %1546 = vmatmul.bf16.gmra.mxu0 %v832
        %v1547 = vpop.f32.mrf.mxu0
        %v1548 = vadd.f32 %v1499, %v1547
        %v1549 = vpop.f32.mrf.mxu0
        %v1550 = vadd.f32 %v1501, %v1549
        %1551 = vmatmul.bf16.gmra.mxu0 %v834
        %v1552 = vpop.f32.mrf.mxu0
        %v1553 = vadd.f32 %v1504, %v1552
        %v1554 = vpop.f32.mrf.mxu0
        %v1555 = vadd.f32 %v1506, %v1554
        %1556 = vmatmul.bf16.gmra.mxu0 %v836
        %v1557 = vpop.f32.mrf.mxu0
        %v1558 = vadd.f32 %v1509, %v1557
        %v1559 = vpop.f32.mrf.mxu0
        %v1560 = vadd.f32 %v1511, %v1559
        %1561 = vmatmul.bf16.gmra.mxu0 %v838
        %v1562 = vpop.f32.mrf.mxu0
        %v1563 = vadd.f32 %v1514, %v1562
        %v1564 = vpop.f32.mrf.mxu0
        %v1565 = vadd.f32 %v1516, %v1564
        %1566 = vdwg.mxu0
        %1583 = vrot.lane.b32.xlu0 %v1430, 96
        %v1584 = vpop.permute.xlu0 %1583
        %1585 = vrot.lane.b32.xlu0 %v1432, 96
        %v1586 = vpop.permute.xlu0 %1585
        %1587 = vrot.lane.b32.xlu0 %v1435, 96
        %v1588 = vpop.permute.xlu0 %1587
        %1589 = vrot.lane.b32.xlu0 %v1437, 96
        %v1590 = vpop.permute.xlu0 %1589
        %1591 = vrot.lane.b32.xlu0 %v1440, 96
        %v1592 = vpop.permute.xlu0 %1591
        %1593 = vrot.lane.b32.xlu0 %v1442, 96
        %v1594 = vpop.permute.xlu0 %1593
        %1595 = vrot.lane.b32.xlu0 %v1445, 96
        %v1596 = vpop.permute.xlu0 %1595
        %1597 = vrot.lane.b32.xlu0 %v1447, 96
        %v1598 = vpop.permute.xlu0 %1597
        %1599 = vrot.lane.b32.xlu0 %v1450, 96
        %v1600 = vpop.permute.xlu0 %1599
        %1601 = vrot.lane.b32.xlu0 %v1452, 96
        %v1602 = vpop.permute.xlu0 %1601
        %1603 = vrot.lane.b32.xlu0 %v1455, 96
        %v1604 = vpop.permute.xlu0 %1603
        %1605 = vrot.lane.b32.xlu0 %v1457, 96
        %v1606 = vpop.permute.xlu0 %1605
        %1607 = vrot.lane.b32.xlu0 %v1460, 96
        %v1608 = vpop.permute.xlu0 %1607
        %1609 = vrot.lane.b32.xlu0 %v1462, 96
        %v1610 = vpop.permute.xlu0 %1609
        %1611 = vrot.lane.b32.xlu0 %v1465, 96
        %v1612 = vpop.permute.xlu0 %1611
        %1613 = vrot.lane.b32.xlu0 %v1467, 96
        %v1614 = vpop.permute.xlu0 %1613
        %1631 = vrot.lane.b32.xlu0 %v1430, 32
        %v1632 = vpop.permute.xlu0 %1631
        %1633 = vrot.lane.b32.xlu0 %v1432, 32
        %v1634 = vpop.permute.xlu0 %1633
        %1635 = vrot.lane.b32.xlu0 %v1435, 32
        %v1636 = vpop.permute.xlu0 %1635
        %1637 = vrot.lane.b32.xlu0 %v1437, 32
        %v1638 = vpop.permute.xlu0 %1637
        %1639 = vrot.lane.b32.xlu0 %v1440, 32
        %v1640 = vpop.permute.xlu0 %1639
        %1641 = vrot.lane.b32.xlu0 %v1442, 32
        %v1642 = vpop.permute.xlu0 %1641
        %1643 = vrot.lane.b32.xlu0 %v1445, 32
        %v1644 = vpop.permute.xlu0 %1643
        %1645 = vrot.lane.b32.xlu0 %v1447, 32
        %v1646 = vpop.permute.xlu0 %1645
        %1647 = vrot.lane.b32.xlu0 %v1450, 32
        %v1648 = vpop.permute.xlu0 %1647
        %1649 = vrot.lane.b32.xlu0 %v1452, 32
        %v1650 = vpop.permute.xlu0 %1649
        %1651 = vrot.lane.b32.xlu0 %v1455, 32
        %v1652 = vpop.permute.xlu0 %1651
        %1653 = vrot.lane.b32.xlu0 %v1457, 32
        %v1654 = vpop.permute.xlu0 %1653
        %1655 = vrot.lane.b32.xlu0 %v1460, 32
        %v1656 = vpop.permute.xlu0 %1655
        %1657 = vrot.lane.b32.xlu0 %v1462, 32
        %v1658 = vpop.permute.xlu0 %1657
        %1659 = vrot.lane.b32.xlu0 %v1465, 32
        %v1660 = vpop.permute.xlu0 %1659
        %1661 = vrot.lane.b32.xlu0 %v1467, 32
        %v1662 = vpop.permute.xlu0 %1661
        %vm1679 = vcmask 261120
        %v1680 = vsel %vm1679, %v1584, %v1632
        %v1681 = vsel %vm1679, %v1586, %v1634
        %v1682 = vsel %vm1679, %v1588, %v1636
        %v1683 = vsel %vm1679, %v1590, %v1638
        %v1684 = vsel %vm1679, %v1592, %v1640
        %v1685 = vsel %vm1679, %v1594, %v1642
        %v1686 = vsel %vm1679, %v1596, %v1644
        %v1687 = vsel %vm1679, %v1598, %v1646
        %v1688 = vsel %vm1679, %v1600, %v1648
        %v1689 = vsel %vm1679, %v1602, %v1650
        %v1690 = vsel %vm1679, %v1604, %v1652
        %v1691 = vsel %vm1679, %v1606, %v1654
        %v1692 = vsel %vm1679, %v1608, %v1656
        %v1693 = vsel %vm1679, %v1610, %v1658
        %v1694 = vsel %vm1679, %v1612, %v1660
        %v1695 = vsel %vm1679, %v1614, %v1662
        %v1696 = vmul.f32 %v1430, %v292
        %v1697 = vmul.f32 %v1432, %v293
        %v1698 = vmul.f32 %v1435, %v294
        %v1699 = vmul.f32 %v1437, %v295
        %v1700 = vmul.f32 %v1440, %v296
        %v1701 = vmul.f32 %v1442, %v297
        %v1702 = vmul.f32 %v1445, %v298
        %v1703 = vmul.f32 %v1447, %v299
        %v1704 = vmul.f32 %v1450, %v300
        %v1705 = vmul.f32 %v1452, %v301
        %v1706 = vmul.f32 %v1455, %v302
        %v1707 = vmul.f32 %v1457, %v303
        %v1708 = vmul.f32 %v1460, %v304
        %v1709 = vmul.f32 %v1462, %v305
        %v1710 = vmul.f32 %v1465, %v306
        %v1711 = vmul.f32 %v1467, %v307
        %1728 = vrot.lane.b32.xlu0 %v292, 64
        %v1729 = vpop.permute.xlu0 %1728
        %1730 = vrot.lane.b32.xlu0 %v293, 64
        %v1731 = vpop.permute.xlu0 %1730
        %1732 = vrot.lane.b32.xlu0 %v294, 64
        %v1733 = vpop.permute.xlu0 %1732
        %1734 = vrot.lane.b32.xlu0 %v295, 64
        %v1735 = vpop.permute.xlu0 %1734
        %1736 = vrot.lane.b32.xlu0 %v296, 64
        %v1737 = vpop.permute.xlu0 %1736
        %1738 = vrot.lane.b32.xlu0 %v297, 64
        %v1739 = vpop.permute.xlu0 %1738
        %1740 = vrot.lane.b32.xlu0 %v298, 64
        %v1741 = vpop.permute.xlu0 %1740
        %1742 = vrot.lane.b32.xlu0 %v299, 64
        %v1743 = vpop.permute.xlu0 %1742
        %1744 = vrot.lane.b32.xlu0 %v300, 64
        %v1745 = vpop.permute.xlu0 %1744
        %1746 = vrot.lane.b32.xlu0 %v301, 64
        %v1747 = vpop.permute.xlu0 %1746
        %1748 = vrot.lane.b32.xlu0 %v302, 64
        %v1749 = vpop.permute.xlu0 %1748
        %1750 = vrot.lane.b32.xlu0 %v303, 64
        %v1751 = vpop.permute.xlu0 %1750
        %1752 = vrot.lane.b32.xlu0 %v304, 64
        %v1753 = vpop.permute.xlu0 %1752
        %1754 = vrot.lane.b32.xlu0 %v305, 64
        %v1755 = vpop.permute.xlu0 %1754
        %1756 = vrot.lane.b32.xlu0 %v306, 64
        %v1757 = vpop.permute.xlu0 %1756
        %1758 = vrot.lane.b32.xlu0 %v307, 64
        %v1759 = vpop.permute.xlu0 %1758
        %v1776 = vmul.f32 %v1680, %v1729
        %v1777 = vmul.f32 %v1681, %v1731
        %v1778 = vmul.f32 %v1682, %v1733
        %v1779 = vmul.f32 %v1683, %v1735
        %v1780 = vmul.f32 %v1684, %v1737
        %v1781 = vmul.f32 %v1685, %v1739
        %v1782 = vmul.f32 %v1686, %v1741
        %v1783 = vmul.f32 %v1687, %v1743
        %v1784 = vmul.f32 %v1688, %v1745
        %v1785 = vmul.f32 %v1689, %v1747
        %v1786 = vmul.f32 %v1690, %v1749
        %v1787 = vmul.f32 %v1691, %v1751
        %v1788 = vmul.f32 %v1692, %v1753
        %v1789 = vmul.f32 %v1693, %v1755
        %v1790 = vmul.f32 %v1694, %v1757
        %v1791 = vmul.f32 %v1695, %v1759
        %v1792 = vadd.f32 %v1696, %v1776
        %v1793 = vadd.f32 %v1697, %v1777
        %v1794 = vadd.f32 %v1698, %v1778
        %v1795 = vadd.f32 %v1699, %v1779
        %v1796 = vadd.f32 %v1700, %v1780
        %v1797 = vadd.f32 %v1701, %v1781
        %v1798 = vadd.f32 %v1702, %v1782
        %v1799 = vadd.f32 %v1703, %v1783
        %v1800 = vadd.f32 %v1704, %v1784
        %v1801 = vadd.f32 %v1705, %v1785
        %v1802 = vadd.f32 %v1706, %v1786
        %v1803 = vadd.f32 %v1707, %v1787
        %v1804 = vadd.f32 %v1708, %v1788
        %v1805 = vadd.f32 %v1709, %v1789
        %v1806 = vadd.f32 %v1710, %v1790
        %v1807 = vadd.f32 %v1711, %v1791
        %v1808 = vpack.c.bf16 %v1793, %v1792
        %v1809 = vpack.c.bf16 %v1795, %v1794
        %v1810 = vpack.c.bf16 %v1797, %v1796
        %v1811 = vpack.c.bf16 %v1799, %v1798
        %v1812 = vpack.c.bf16 %v1801, %v1800
        %v1813 = vpack.c.bf16 %v1803, %v1802
        %v1814 = vpack.c.bf16 %v1805, %v1804
        %v1815 = vpack.c.bf16 %v1807, %v1806
        %v1816 = vpack.c.bf16 %v1530, %v1528
        %v1817 = vpack.c.bf16 %v1535, %v1533
        %v1818 = vpack.c.bf16 %v1540, %v1538
        %v1819 = vpack.c.bf16 %v1545, %v1543
        %v1820 = vpack.c.bf16 %v1550, %v1548
        %v1821 = vpack.c.bf16 %v1555, %v1553
        %v1822 = vpack.c.bf16 %v1560, %v1558
        %v1823 = vpack.c.bf16 %v1565, %v1563
        %1840 = vrot.lane.b32.xlu0 %v1234, 96
        %v1841 = vpop.permute.xlu0 %1840
        %1842 = vrot.lane.b32.xlu0 %v1236, 96
        %v1843 = vpop.permute.xlu0 %1842
        %1844 = vrot.lane.b32.xlu0 %v1239, 96
        %v1845 = vpop.permute.xlu0 %1844
        %1846 = vrot.lane.b32.xlu0 %v1241, 96
        %v1847 = vpop.permute.xlu0 %1846
        %1848 = vrot.lane.b32.xlu0 %v1244, 96
        %v1849 = vpop.permute.xlu0 %1848
        %1850 = vrot.lane.b32.xlu0 %v1246, 96
        %v1851 = vpop.permute.xlu0 %1850
        %1852 = vrot.lane.b32.xlu0 %v1249, 96
        %v1853 = vpop.permute.xlu0 %1852
        %1854 = vrot.lane.b32.xlu0 %v1251, 96
        %v1855 = vpop.permute.xlu0 %1854
        %1856 = vrot.lane.b32.xlu0 %v1254, 96
        %v1857 = vpop.permute.xlu0 %1856
        %1858 = vrot.lane.b32.xlu0 %v1256, 96
        %v1859 = vpop.permute.xlu0 %1858
        %1860 = vrot.lane.b32.xlu0 %v1259, 96
        %v1861 = vpop.permute.xlu0 %1860
        %1862 = vrot.lane.b32.xlu0 %v1261, 96
        %v1863 = vpop.permute.xlu0 %1862
        %1864 = vrot.lane.b32.xlu0 %v1264, 96
        %v1865 = vpop.permute.xlu0 %1864
        %1866 = vrot.lane.b32.xlu0 %v1266, 96
        %v1867 = vpop.permute.xlu0 %1866
        %1868 = vrot.lane.b32.xlu0 %v1269, 96
        %v1869 = vpop.permute.xlu0 %1868
        %1870 = vrot.lane.b32.xlu0 %v1271, 96
        %v1871 = vpop.permute.xlu0 %1870
        %1888 = vrot.lane.b32.xlu0 %v1234, 32
        %v1889 = vpop.permute.xlu0 %1888
        %1890 = vrot.lane.b32.xlu0 %v1236, 32
        %v1891 = vpop.permute.xlu0 %1890
        %1892 = vrot.lane.b32.xlu0 %v1239, 32
        %v1893 = vpop.permute.xlu0 %1892
        %1894 = vrot.lane.b32.xlu0 %v1241, 32
        %v1895 = vpop.permute.xlu0 %1894
        %1896 = vrot.lane.b32.xlu0 %v1244, 32
        %v1897 = vpop.permute.xlu0 %1896
        %1898 = vrot.lane.b32.xlu0 %v1246, 32
        %v1899 = vpop.permute.xlu0 %1898
        %1900 = vrot.lane.b32.xlu0 %v1249, 32
        %v1901 = vpop.permute.xlu0 %1900
        %1902 = vrot.lane.b32.xlu0 %v1251, 32
        %v1903 = vpop.permute.xlu0 %1902
        %1904 = vrot.lane.b32.xlu0 %v1254, 32
        %v1905 = vpop.permute.xlu0 %1904
        %1906 = vrot.lane.b32.xlu0 %v1256, 32
        %v1907 = vpop.permute.xlu0 %1906
        %1908 = vrot.lane.b32.xlu0 %v1259, 32
        %v1909 = vpop.permute.xlu0 %1908
        %1910 = vrot.lane.b32.xlu0 %v1261, 32
        %v1911 = vpop.permute.xlu0 %1910
        %1912 = vrot.lane.b32.xlu0 %v1264, 32
        %v1913 = vpop.permute.xlu0 %1912
        %1914 = vrot.lane.b32.xlu0 %v1266, 32
        %v1915 = vpop.permute.xlu0 %1914
        %1916 = vrot.lane.b32.xlu0 %v1269, 32
        %v1917 = vpop.permute.xlu0 %1916
        %1918 = vrot.lane.b32.xlu0 %v1271, 32
        %v1919 = vpop.permute.xlu0 %1918
        %v1936 = vsel %vm1679, %v1841, %v1889
        %v1937 = vsel %vm1679, %v1843, %v1891
        %v1938 = vsel %vm1679, %v1845, %v1893
        %v1939 = vsel %vm1679, %v1847, %v1895
        %v1940 = vsel %vm1679, %v1849, %v1897
        %v1941 = vsel %vm1679, %v1851, %v1899
        %v1942 = vsel %vm1679, %v1853, %v1901
        %v1943 = vsel %vm1679, %v1855, %v1903
        %v1944 = vsel %vm1679, %v1857, %v1905
        %v1945 = vsel %vm1679, %v1859, %v1907
        %v1946 = vsel %vm1679, %v1861, %v1909
        %v1947 = vsel %vm1679, %v1863, %v1911
        %v1948 = vsel %vm1679, %v1865, %v1913
        %v1949 = vsel %vm1679, %v1867, %v1915
        %v1950 = vsel %vm1679, %v1869, %v1917
        %v1951 = vsel %vm1679, %v1871, %v1919
        %v1952 = vmul.f32 %v1234, %v292
        %v1953 = vmul.f32 %v1236, %v293
        %v1954 = vmul.f32 %v1239, %v294
        %v1955 = vmul.f32 %v1241, %v295
        %v1956 = vmul.f32 %v1244, %v296
        %v1957 = vmul.f32 %v1246, %v297
        %v1958 = vmul.f32 %v1249, %v298
        %v1959 = vmul.f32 %v1251, %v299
        %v1960 = vmul.f32 %v1254, %v300
        %v1961 = vmul.f32 %v1256, %v301
        %v1962 = vmul.f32 %v1259, %v302
        %v1963 = vmul.f32 %v1261, %v303
        %v1964 = vmul.f32 %v1264, %v304
        %v1965 = vmul.f32 %v1266, %v305
        %v1966 = vmul.f32 %v1269, %v306
        %v1967 = vmul.f32 %v1271, %v307
        %v1968 = vmul.f32 %v1936, %v1729
        %v1969 = vmul.f32 %v1937, %v1731
        %v1970 = vmul.f32 %v1938, %v1733
        %v1971 = vmul.f32 %v1939, %v1735
        %v1972 = vmul.f32 %v1940, %v1737
        %v1973 = vmul.f32 %v1941, %v1739
        %v1974 = vmul.f32 %v1942, %v1741
        %v1975 = vmul.f32 %v1943, %v1743
        %v1976 = vmul.f32 %v1944, %v1745
        %v1977 = vmul.f32 %v1945, %v1747
        %v1978 = vmul.f32 %v1946, %v1749
        %v1979 = vmul.f32 %v1947, %v1751
        %v1980 = vmul.f32 %v1948, %v1753
        %v1981 = vmul.f32 %v1949, %v1755
        %v1982 = vmul.f32 %v1950, %v1757
        %v1983 = vmul.f32 %v1951, %v1759
        %v1984 = vadd.f32 %v1952, %v1968
        %v1985 = vadd.f32 %v1953, %v1969
        %v1986 = vadd.f32 %v1954, %v1970
        %v1987 = vadd.f32 %v1955, %v1971
        %v1988 = vadd.f32 %v1956, %v1972
        %v1989 = vadd.f32 %v1957, %v1973
        %v1990 = vadd.f32 %v1958, %v1974
        %v1991 = vadd.f32 %v1959, %v1975
        %v1992 = vadd.f32 %v1960, %v1976
        %v1993 = vadd.f32 %v1961, %v1977
        %v1994 = vadd.f32 %v1962, %v1978
        %v1995 = vadd.f32 %v1963, %v1979
        %v1996 = vadd.f32 %v1964, %v1980
        %v1997 = vadd.f32 %v1965, %v1981
        %v1998 = vadd.f32 %v1966, %v1982
        %v1999 = vadd.f32 %v1967, %v1983
        %v2000 = vsel %vm1679, %v1889, %v1841
        %v2001 = vsel %vm1679, %v1891, %v1843
        %v2002 = vsel %vm1679, %v1893, %v1845
        %v2003 = vsel %vm1679, %v1895, %v1847
        %v2004 = vsel %vm1679, %v1897, %v1849
        %v2005 = vsel %vm1679, %v1899, %v1851
        %v2006 = vsel %vm1679, %v1901, %v1853
        %v2007 = vsel %vm1679, %v1903, %v1855
        %v2008 = vsel %vm1679, %v1905, %v1857
        %v2009 = vsel %vm1679, %v1907, %v1859
        %v2010 = vsel %vm1679, %v1909, %v1861
        %v2011 = vsel %vm1679, %v1911, %v1863
        %v2012 = vsel %vm1679, %v1913, %v1865
        %v2013 = vsel %vm1679, %v1915, %v1867
        %v2014 = vsel %vm1679, %v1917, %v1869
        %v2015 = vsel %vm1679, %v1919, %v1871
        %v2016 = vmul.f32 %v1234, %v1729
        %v2017 = vmul.f32 %v1236, %v1731
        %v2018 = vmul.f32 %v1239, %v1733
        %v2019 = vmul.f32 %v1241, %v1735
        %v2020 = vmul.f32 %v1244, %v1737
        %v2021 = vmul.f32 %v1246, %v1739
        %v2022 = vmul.f32 %v1249, %v1741
        %v2023 = vmul.f32 %v1251, %v1743
        %v2024 = vmul.f32 %v1254, %v1745
        %v2025 = vmul.f32 %v1256, %v1747
        %v2026 = vmul.f32 %v1259, %v1749
        %v2027 = vmul.f32 %v1261, %v1751
        %v2028 = vmul.f32 %v1264, %v1753
        %v2029 = vmul.f32 %v1266, %v1755
        %v2030 = vmul.f32 %v1269, %v1757
        %v2031 = vmul.f32 %v1271, %v1759
        %v2032 = vmul.f32 %v2000, %v1729
        %v2033 = vmul.f32 %v2001, %v1731
        %v2034 = vmul.f32 %v2002, %v1733
        %v2035 = vmul.f32 %v2003, %v1735
        %v2036 = vmul.f32 %v2004, %v1737
        %v2037 = vmul.f32 %v2005, %v1739
        %v2038 = vmul.f32 %v2006, %v1741
        %v2039 = vmul.f32 %v2007, %v1743
        %v2040 = vmul.f32 %v2008, %v1745
        %v2041 = vmul.f32 %v2009, %v1747
        %v2042 = vmul.f32 %v2010, %v1749
        %v2043 = vmul.f32 %v2011, %v1751
        %v2044 = vmul.f32 %v2012, %v1753
        %v2045 = vmul.f32 %v2013, %v1755
        %v2046 = vmul.f32 %v2014, %v1757
        %v2047 = vmul.f32 %v2015, %v1759
        %2064 = vrot.lane.b32.xlu0 %v2032, 64
        %v2065 = vpop.permute.xlu0 %2064
        %2066 = vrot.lane.b32.xlu0 %v2033, 64
        %v2067 = vpop.permute.xlu0 %2066
        %2068 = vrot.lane.b32.xlu0 %v2034, 64
        %v2069 = vpop.permute.xlu0 %2068
        %2070 = vrot.lane.b32.xlu0 %v2035, 64
        %v2071 = vpop.permute.xlu0 %2070
        %2072 = vrot.lane.b32.xlu0 %v2036, 64
        %v2073 = vpop.permute.xlu0 %2072
        %2074 = vrot.lane.b32.xlu0 %v2037, 64
        %v2075 = vpop.permute.xlu0 %2074
        %2076 = vrot.lane.b32.xlu0 %v2038, 64
        %v2077 = vpop.permute.xlu0 %2076
        %2078 = vrot.lane.b32.xlu0 %v2039, 64
        %v2079 = vpop.permute.xlu0 %2078
        %2080 = vrot.lane.b32.xlu0 %v2040, 64
        %v2081 = vpop.permute.xlu0 %2080
        %2082 = vrot.lane.b32.xlu0 %v2041, 64
        %v2083 = vpop.permute.xlu0 %2082
        %2084 = vrot.lane.b32.xlu0 %v2042, 64
        %v2085 = vpop.permute.xlu0 %2084
        %2086 = vrot.lane.b32.xlu0 %v2043, 64
        %v2087 = vpop.permute.xlu0 %2086
        %2088 = vrot.lane.b32.xlu0 %v2044, 64
        %v2089 = vpop.permute.xlu0 %2088
        %2090 = vrot.lane.b32.xlu0 %v2045, 64
        %v2091 = vpop.permute.xlu0 %2090
        %2092 = vrot.lane.b32.xlu0 %v2046, 64
        %v2093 = vpop.permute.xlu0 %2092
        %2094 = vrot.lane.b32.xlu0 %v2047, 64
        %v2095 = vpop.permute.xlu0 %2094
        %v2112 = vadd.f32 %v2016, %v2065
        %v2113 = vadd.f32 %v2017, %v2067
        %v2114 = vadd.f32 %v2018, %v2069
        %v2115 = vadd.f32 %v2019, %v2071
        %v2116 = vadd.f32 %v2020, %v2073
        %v2117 = vadd.f32 %v2021, %v2075
        %v2118 = vadd.f32 %v2022, %v2077
        %v2119 = vadd.f32 %v2023, %v2079
        %v2120 = vadd.f32 %v2024, %v2081
        %v2121 = vadd.f32 %v2025, %v2083
        %v2122 = vadd.f32 %v2026, %v2085
        %v2123 = vadd.f32 %v2027, %v2087
        %v2124 = vadd.f32 %v2028, %v2089
        %v2125 = vadd.f32 %v2029, %v2091
        %v2126 = vadd.f32 %v2030, %v2093
        %v2127 = vadd.f32 %v2031, %v2095
        %2144 = vrot.lane.b32.xlu0 %v2112, 64
        %v2145 = vpop.permute.xlu0 %2144
        %2146 = vrot.lane.b32.xlu0 %v2113, 64
        %v2147 = vpop.permute.xlu0 %2146
        %2148 = vrot.lane.b32.xlu0 %v2114, 64
        %v2149 = vpop.permute.xlu0 %2148
        %2150 = vrot.lane.b32.xlu0 %v2115, 64
        %v2151 = vpop.permute.xlu0 %2150
        %2152 = vrot.lane.b32.xlu0 %v2116, 64
        %v2153 = vpop.permute.xlu0 %2152
        %2154 = vrot.lane.b32.xlu0 %v2117, 64
        %v2155 = vpop.permute.xlu0 %2154
        %2156 = vrot.lane.b32.xlu0 %v2118, 64
        %v2157 = vpop.permute.xlu0 %2156
        %2158 = vrot.lane.b32.xlu0 %v2119, 64
        %v2159 = vpop.permute.xlu0 %2158
        %2160 = vrot.lane.b32.xlu0 %v2120, 64
        %v2161 = vpop.permute.xlu0 %2160
        %2162 = vrot.lane.b32.xlu0 %v2121, 64
        %v2163 = vpop.permute.xlu0 %2162
        %2164 = vrot.lane.b32.xlu0 %v2122, 64
        %v2165 = vpop.permute.xlu0 %2164
        %2166 = vrot.lane.b32.xlu0 %v2123, 64
        %v2167 = vpop.permute.xlu0 %2166
        %2168 = vrot.lane.b32.xlu0 %v2124, 64
        %v2169 = vpop.permute.xlu0 %2168
        %2170 = vrot.lane.b32.xlu0 %v2125, 64
        %v2171 = vpop.permute.xlu0 %2170
        %2172 = vrot.lane.b32.xlu0 %v2126, 64
        %v2173 = vpop.permute.xlu0 %2172
        %2174 = vrot.lane.b32.xlu0 %v2127, 64
        %v2175 = vpop.permute.xlu0 %2174
        %v2192 = vmul.f32 %v1984, 0.125
        %v2193 = vmul.f32 %v1985, 0.125
        %v2194 = vmul.f32 %v1986, 0.125
        %v2195 = vmul.f32 %v1987, 0.125
        %v2196 = vmul.f32 %v1988, 0.125
        %v2197 = vmul.f32 %v1989, 0.125
        %v2198 = vmul.f32 %v1990, 0.125
        %v2199 = vmul.f32 %v1991, 0.125
        %v2200 = vmul.f32 %v1992, 0.125
        %v2201 = vmul.f32 %v1993, 0.125
        %v2202 = vmul.f32 %v1994, 0.125
        %v2203 = vmul.f32 %v1995, 0.125
        %v2204 = vmul.f32 %v1996, 0.125
        %v2205 = vmul.f32 %v1997, 0.125
        %v2206 = vmul.f32 %v1998, 0.125
        %v2207 = vmul.f32 %v1999, 0.125
        %v2208 = vmul.f32 %v2145, 0.125
        %v2209 = vmul.f32 %v2147, 0.125
        %v2210 = vmul.f32 %v2149, 0.125
        %v2211 = vmul.f32 %v2151, 0.125
        %v2212 = vmul.f32 %v2153, 0.125
        %v2213 = vmul.f32 %v2155, 0.125
        %v2214 = vmul.f32 %v2157, 0.125
        %v2215 = vmul.f32 %v2159, 0.125
        %v2216 = vmul.f32 %v2161, 0.125
        %v2217 = vmul.f32 %v2163, 0.125
        %v2218 = vmul.f32 %v2165, 0.125
        %v2219 = vmul.f32 %v2167, 0.125
        %v2220 = vmul.f32 %v2169, 0.125
        %v2221 = vmul.f32 %v2171, 0.125
        %v2222 = vmul.f32 %v2173, 0.125
        %v2223 = vmul.f32 %v2175, 0.125
        %v2224 = vpack.c.bf16 %v2193, %v2192
        %v2225 = vpack.c.bf16 %v2195, %v2194
        %v2226 = vpack.c.bf16 %v2197, %v2196
        %v2227 = vpack.c.bf16 %v2199, %v2198
        %v2228 = vpack.c.bf16 %v2201, %v2200
        %v2229 = vpack.c.bf16 %v2203, %v2202
        %v2230 = vpack.c.bf16 %v2205, %v2204
        %v2231 = vpack.c.bf16 %v2207, %v2206
        %v2232 = vpack.c.bf16 %v2209, %v2208
        %v2233 = vpack.c.bf16 %v2211, %v2210
        %v2234 = vpack.c.bf16 %v2213, %v2212
        %v2235 = vpack.c.bf16 %v2215, %v2214
        %v2236 = vpack.c.bf16 %v2217, %v2216
        %v2237 = vpack.c.bf16 %v2219, %v2218
        %v2238 = vpack.c.bf16 %v2221, %v2220
        %v2239 = vpack.c.bf16 %v2223, %v2222
        %vm2240 = vcmask 523264
        %v2242 = vsel %vm2240, %v2224, 0
        %v2245 = vsel %vm2240, %v2225, 0
        %v2248 = vsel %vm2240, %v2226, 0
        %v2251 = vsel %vm2240, %v2227, 0
        %v2254 = vsel %vm2240, %v2228, 0
        %v2257 = vsel %vm2240, %v2229, 0
        %v2260 = vsel %vm2240, %v2230, 0
        %v2263 = vsel %vm2240, %v2231, 0
        %v2266 = vsel %vm2240, %v2232, 0
        %v2269 = vsel %vm2240, %v2233, 0
        %v2272 = vsel %vm2240, %v2234, 0
        %v2275 = vsel %vm2240, %v2235, 0
        %v2278 = vsel %vm2240, %v2236, 0
        %v2281 = vsel %vm2240, %v2237, 0
        %v2284 = vsel %vm2240, %v2238, 0
        %v2287 = vsel %vm2240, %v2239, 0
        %v2290 = vsel %vm2240, %v1808, 0
        %v2293 = vsel %vm2240, %v1809, 0
        %v2296 = vsel %vm2240, %v1810, 0
        %v2299 = vsel %vm2240, %v1811, 0
        %v2302 = vsel %vm2240, %v1812, 0
        %v2305 = vsel %vm2240, %v1813, 0
        %v2308 = vsel %vm2240, %v1814, 0
        %v2311 = vsel %vm2240, %v1815, 0
        %2313 = vmatpush.bf16.xpose.msra.mxu0 %v2311
        %2314 = vmatpush.bf16.xpose.msra.mxu0 %v2308
        %2315 = vmatpush.bf16.xpose.msra.mxu0 %v2305
        %2316 = vmatpush.bf16.xpose.msra.mxu0 %v2302
        %2317 = vmatpush.bf16.xpose.msra.mxu0 %v2299
        %2318 = vmatpush.bf16.xpose.msra.mxu0 %v2296
        %2319 = vmatpush.bf16.xpose.msra.mxu0 %v2293
        %2320 = vmatpush.bf16.xpose.msra.mxu0 %v2290
        %2321 = vmatmul.bf16.gmra.mxu0 %v2242
        %v2322 = vpop.f32.mrf.mxu0
        %v2323 = vadd.f32 0.0, %v2322
        %v2324 = vpop.f32.mrf.mxu0
        %v2325 = vadd.f32 0.0, %v2324
        %2326 = vmatmul.bf16.gmra.mxu0 %v2245
        %v2327 = vpop.f32.mrf.mxu0
        %v2328 = vadd.f32 0.0, %v2327
        %v2329 = vpop.f32.mrf.mxu0
        %v2330 = vadd.f32 0.0, %v2329
        %2331 = vmatmul.bf16.gmra.mxu0 %v2248
        %v2332 = vpop.f32.mrf.mxu0
        %v2333 = vadd.f32 0.0, %v2332
        %v2334 = vpop.f32.mrf.mxu0
        %v2335 = vadd.f32 0.0, %v2334
        %2336 = vmatmul.bf16.gmra.mxu0 %v2251
        %v2337 = vpop.f32.mrf.mxu0
        %v2338 = vadd.f32 0.0, %v2337
        %v2339 = vpop.f32.mrf.mxu0
        %v2340 = vadd.f32 0.0, %v2339
        %2341 = vmatmul.bf16.gmra.mxu0 %v2254
        %v2342 = vpop.f32.mrf.mxu0
        %v2343 = vadd.f32 0.0, %v2342
        %v2344 = vpop.f32.mrf.mxu0
        %v2345 = vadd.f32 0.0, %v2344
        %2346 = vmatmul.bf16.gmra.mxu0 %v2257
        %v2347 = vpop.f32.mrf.mxu0
        %v2348 = vadd.f32 0.0, %v2347
        %v2349 = vpop.f32.mrf.mxu0
        %v2350 = vadd.f32 0.0, %v2349
        %2351 = vmatmul.bf16.gmra.mxu0 %v2260
        %v2352 = vpop.f32.mrf.mxu0
        %v2353 = vadd.f32 0.0, %v2352
        %v2354 = vpop.f32.mrf.mxu0
        %v2355 = vadd.f32 0.0, %v2354
        %2356 = vmatmul.bf16.gmra.mxu0 %v2263
        %v2357 = vpop.f32.mrf.mxu0
        %v2358 = vadd.f32 0.0, %v2357
        %v2359 = vpop.f32.mrf.mxu0
        %v2360 = vadd.f32 0.0, %v2359
        %2361 = vmatmul.bf16.gmra.mxu0 %v2266
        %v2362 = vpop.f32.mrf.mxu0
        %v2363 = vadd.f32 0.0, %v2362
        %v2364 = vpop.f32.mrf.mxu0
        %v2365 = vadd.f32 0.0, %v2364
        %2366 = vmatmul.bf16.gmra.mxu0 %v2269
        %v2367 = vpop.f32.mrf.mxu0
        %v2368 = vadd.f32 0.0, %v2367
        %v2369 = vpop.f32.mrf.mxu0
        %v2370 = vadd.f32 0.0, %v2369
        %2371 = vmatmul.bf16.gmra.mxu0 %v2272
        %v2372 = vpop.f32.mrf.mxu0
        %v2373 = vadd.f32 0.0, %v2372
        %v2374 = vpop.f32.mrf.mxu0
        %v2375 = vadd.f32 0.0, %v2374
        %2376 = vmatmul.bf16.gmra.mxu0 %v2275
        %v2377 = vpop.f32.mrf.mxu0
        %v2378 = vadd.f32 0.0, %v2377
        %v2379 = vpop.f32.mrf.mxu0
        %v2380 = vadd.f32 0.0, %v2379
        %2381 = vmatmul.bf16.gmra.mxu0 %v2278
        %v2382 = vpop.f32.mrf.mxu0
        %v2383 = vadd.f32 0.0, %v2382
        %v2384 = vpop.f32.mrf.mxu0
        %v2385 = vadd.f32 0.0, %v2384
        %2386 = vmatmul.bf16.gmra.mxu0 %v2281
        %v2387 = vpop.f32.mrf.mxu0
        %v2388 = vadd.f32 0.0, %v2387
        %v2389 = vpop.f32.mrf.mxu0
        %v2390 = vadd.f32 0.0, %v2389
        %2391 = vmatmul.bf16.gmra.mxu0 %v2284
        %v2392 = vpop.f32.mrf.mxu0
        %v2393 = vadd.f32 0.0, %v2392
        %v2394 = vpop.f32.mrf.mxu0
        %v2395 = vadd.f32 0.0, %v2394
        %2396 = vmatmul.bf16.gmra.mxu0 %v2287
        %v2397 = vpop.f32.mrf.mxu0
        %v2398 = vadd.f32 0.0, %v2397
        %v2399 = vpop.f32.mrf.mxu0
        %v2400 = vadd.f32 0.0, %v2399
        %2401 = vdwg.mxu0
        %2402 = vmax.xlane.f32.xlu0 %v2323
        %v2403 = vpop.xlane.xlu0 %2402
        %2404 = vmax.xlane.f32.xlu0 %v2325
        %v2405 = vpop.xlane.xlu0 %2404
        %2406 = vmax.xlane.f32.xlu0 %v2328
        %v2407 = vpop.xlane.xlu0 %2406
        %2408 = vmax.xlane.f32.xlu0 %v2330
        %v2409 = vpop.xlane.xlu0 %2408
        %2410 = vmax.xlane.f32.xlu0 %v2333
        %v2411 = vpop.xlane.xlu0 %2410
        %2412 = vmax.xlane.f32.xlu0 %v2335
        %v2413 = vpop.xlane.xlu0 %2412
        %2414 = vmax.xlane.f32.xlu0 %v2338
        %v2415 = vpop.xlane.xlu0 %2414
        %2416 = vmax.xlane.f32.xlu0 %v2340
        %v2417 = vpop.xlane.xlu0 %2416
        %2418 = vmax.xlane.f32.xlu0 %v2343
        %v2419 = vpop.xlane.xlu0 %2418
        %2420 = vmax.xlane.f32.xlu0 %v2345
        %v2421 = vpop.xlane.xlu0 %2420
        %2422 = vmax.xlane.f32.xlu0 %v2348
        %v2423 = vpop.xlane.xlu0 %2422
        %2424 = vmax.xlane.f32.xlu0 %v2350
        %v2425 = vpop.xlane.xlu0 %2424
        %2426 = vmax.xlane.f32.xlu0 %v2353
        %v2427 = vpop.xlane.xlu0 %2426
        %2428 = vmax.xlane.f32.xlu0 %v2355
        %v2429 = vpop.xlane.xlu0 %2428
        %2430 = vmax.xlane.f32.xlu0 %v2358
        %v2431 = vpop.xlane.xlu0 %2430
        %2432 = vmax.xlane.f32.xlu0 %v2360
        %v2433 = vpop.xlane.xlu0 %2432
        %2434 = vmax.xlane.f32.xlu0 %v2363
        %v2435 = vpop.xlane.xlu0 %2434
        %2436 = vmax.xlane.f32.xlu0 %v2365
        %v2437 = vpop.xlane.xlu0 %2436
        %2438 = vmax.xlane.f32.xlu0 %v2368
        %v2439 = vpop.xlane.xlu0 %2438
        %2440 = vmax.xlane.f32.xlu0 %v2370
        %v2441 = vpop.xlane.xlu0 %2440
        %2442 = vmax.xlane.f32.xlu0 %v2373
        %v2443 = vpop.xlane.xlu0 %2442
        %2444 = vmax.xlane.f32.xlu0 %v2375
        %v2445 = vpop.xlane.xlu0 %2444
        %2446 = vmax.xlane.f32.xlu0 %v2378
        %v2447 = vpop.xlane.xlu0 %2446
        %2448 = vmax.xlane.f32.xlu0 %v2380
        %v2449 = vpop.xlane.xlu0 %2448
        %2450 = vmax.xlane.f32.xlu0 %v2383
        %v2451 = vpop.xlane.xlu0 %2450
        %2452 = vmax.xlane.f32.xlu0 %v2385
        %v2453 = vpop.xlane.xlu0 %2452
        %2454 = vmax.xlane.f32.xlu0 %v2388
        %v2455 = vpop.xlane.xlu0 %2454
        %2456 = vmax.xlane.f32.xlu0 %v2390
        %v2457 = vpop.xlane.xlu0 %2456
        %2458 = vmax.xlane.f32.xlu0 %v2393
        %v2459 = vpop.xlane.xlu0 %2458
        %2460 = vmax.xlane.f32.xlu0 %v2395
        %v2461 = vpop.xlane.xlu0 %2460
        %2462 = vmax.xlane.f32.xlu0 %v2398
        %v2463 = vpop.xlane.xlu0 %2462
        %2464 = vmax.xlane.f32.xlu0 %v2400
        %v2465 = vpop.xlane.xlu0 %2464
        %v2466 = vsub.f32 %v2323, %v2403
        %v2467 = vsub.f32 %v2325, %v2405
        %v2468 = vsub.f32 %v2328, %v2407
        %v2469 = vsub.f32 %v2330, %v2409
        %v2470 = vsub.f32 %v2333, %v2411
        %v2471 = vsub.f32 %v2335, %v2413
        %v2472 = vsub.f32 %v2338, %v2415
        %v2473 = vsub.f32 %v2340, %v2417
        %v2474 = vsub.f32 %v2343, %v2419
        %v2475 = vsub.f32 %v2345, %v2421
        %v2476 = vsub.f32 %v2348, %v2423
        %v2477 = vsub.f32 %v2350, %v2425
        %v2478 = vsub.f32 %v2353, %v2427
        %v2479 = vsub.f32 %v2355, %v2429
        %v2480 = vsub.f32 %v2358, %v2431
        %v2481 = vsub.f32 %v2360, %v2433
        %v2482 = vsub.f32 %v2363, %v2435
        %v2483 = vsub.f32 %v2365, %v2437
        %v2484 = vsub.f32 %v2368, %v2439
        %v2485 = vsub.f32 %v2370, %v2441
        %v2486 = vsub.f32 %v2373, %v2443
        %v2487 = vsub.f32 %v2375, %v2445
        %v2488 = vsub.f32 %v2378, %v2447
        %v2489 = vsub.f32 %v2380, %v2449
        %v2490 = vsub.f32 %v2383, %v2451
        %v2491 = vsub.f32 %v2385, %v2453
        %v2492 = vsub.f32 %v2388, %v2455
        %v2493 = vsub.f32 %v2390, %v2457
        %v2494 = vsub.f32 %v2393, %v2459
        %v2495 = vsub.f32 %v2395, %v2461
        %v2496 = vsub.f32 %v2398, %v2463
        %v2497 = vsub.f32 %v2400, %v2465
        %v2498 = vmul.f32 %v2466, 1.442695
        %v2499 = vpow.pop %v2498
        %v2500 = vmul.f32 %v2467, 1.442695
        %v2501 = vpow.pop %v2500
        %v2502 = vmul.f32 %v2468, 1.442695
        %v2503 = vpow.pop %v2502
        %v2504 = vmul.f32 %v2469, 1.442695
        %v2505 = vpow.pop %v2504
        %v2506 = vmul.f32 %v2470, 1.442695
        %v2507 = vpow.pop %v2506
        %v2508 = vmul.f32 %v2471, 1.442695
        %v2509 = vpow.pop %v2508
        %v2510 = vmul.f32 %v2472, 1.442695
        %v2511 = vpow.pop %v2510
        %v2512 = vmul.f32 %v2473, 1.442695
        %v2513 = vpow.pop %v2512
        %v2514 = vmul.f32 %v2474, 1.442695
        %v2515 = vpow.pop %v2514
        %v2516 = vmul.f32 %v2475, 1.442695
        %v2517 = vpow.pop %v2516
        %v2518 = vmul.f32 %v2476, 1.442695
        %v2519 = vpow.pop %v2518
        %v2520 = vmul.f32 %v2477, 1.442695
        %v2521 = vpow.pop %v2520
        %v2522 = vmul.f32 %v2478, 1.442695
        %v2523 = vpow.pop %v2522
        %v2524 = vmul.f32 %v2479, 1.442695
        %v2525 = vpow.pop %v2524
        %v2526 = vmul.f32 %v2480, 1.442695
        %v2527 = vpow.pop %v2526
        %v2528 = vmul.f32 %v2481, 1.442695
        %v2529 = vpow.pop %v2528
        %v2530 = vmul.f32 %v2482, 1.442695
        %v2531 = vpow.pop %v2530
        %v2532 = vmul.f32 %v2483, 1.442695
        %v2533 = vpow.pop %v2532
        %v2534 = vmul.f32 %v2484, 1.442695
        %v2535 = vpow.pop %v2534
        %v2536 = vmul.f32 %v2485, 1.442695
        %v2537 = vpow.pop %v2536
        %v2538 = vmul.f32 %v2486, 1.442695
        %v2539 = vpow.pop %v2538
        %v2540 = vmul.f32 %v2487, 1.442695
        %v2541 = vpow.pop %v2540
        %v2542 = vmul.f32 %v2488, 1.442695
        %v2543 = vpow.pop %v2542
        %v2544 = vmul.f32 %v2489, 1.442695
        %v2545 = vpow.pop %v2544
        %v2546 = vmul.f32 %v2490, 1.442695
        %v2547 = vpow.pop %v2546
        %v2548 = vmul.f32 %v2491, 1.442695
        %v2549 = vpow.pop %v2548
        %v2550 = vmul.f32 %v2492, 1.442695
        %v2551 = vpow.pop %v2550
        %v2552 = vmul.f32 %v2493, 1.442695
        %v2553 = vpow.pop %v2552
        %v2554 = vmul.f32 %v2494, 1.442695
        %v2555 = vpow.pop %v2554
        %v2556 = vmul.f32 %v2495, 1.442695
        %v2557 = vpow.pop %v2556
        %v2558 = vmul.f32 %v2496, 1.442695
        %v2559 = vpow.pop %v2558
        %v2560 = vmul.f32 %v2497, 1.442695
        %v2561 = vpow.pop %v2560
        %v2562 = vsel %vm727, %v2499, 0.0
        %v2563 = vsel %vm728, %v2501, 0.0
        %v2564 = vsel %vm729, %v2503, 0.0
        %v2565 = vsel %vm730, %v2505, 0.0
        %v2566 = vsel %vm731, %v2507, 0.0
        %v2567 = vsel %vm732, %v2509, 0.0
        %v2568 = vsel %vm733, %v2511, 0.0
        %v2569 = vsel %vm734, %v2513, 0.0
        %v2570 = vsel %vm735, %v2515, 0.0
        %v2571 = vsel %vm736, %v2517, 0.0
        %v2572 = vsel %vm737, %v2519, 0.0
        %v2573 = vsel %vm738, %v2521, 0.0
        %v2574 = vsel %vm739, %v2523, 0.0
        %v2575 = vsel %vm740, %v2525, 0.0
        %v2576 = vsel %vm741, %v2527, 0.0
        %v2577 = vsel %vm742, %v2529, 0.0
        %v2578 = vsel %vm743, %v2531, 0.0
        %v2579 = vsel %vm744, %v2533, 0.0
        %v2580 = vsel %vm745, %v2535, 0.0
        %v2581 = vsel %vm746, %v2537, 0.0
        %v2582 = vsel %vm747, %v2539, 0.0
        %v2583 = vsel %vm748, %v2541, 0.0
        %v2584 = vsel %vm749, %v2543, 0.0
        %v2585 = vsel %vm750, %v2545, 0.0
        %v2586 = vsel %vm751, %v2547, 0.0
        %v2587 = vsel %vm752, %v2549, 0.0
        %v2588 = vsel %vm753, %v2551, 0.0
        %v2589 = vsel %vm754, %v2553, 0.0
        %v2590 = vsel %vm755, %v2555, 0.0
        %v2591 = vsel %vm756, %v2557, 0.0
        %v2592 = vsel %vm757, %v2559, 0.0
        %v2593 = vsel %vm758, %v2561, 0.0
        %2594 = vadd.xlane.f32.xlu0 %v2562
        %v2595 = vpop.xlane.xlu0 %2594
        %2596 = vadd.xlane.f32.xlu0 %v2563
        %v2597 = vpop.xlane.xlu0 %2596
        %2598 = vadd.xlane.f32.xlu0 %v2564
        %v2599 = vpop.xlane.xlu0 %2598
        %2600 = vadd.xlane.f32.xlu0 %v2565
        %v2601 = vpop.xlane.xlu0 %2600
        %2602 = vadd.xlane.f32.xlu0 %v2566
        %v2603 = vpop.xlane.xlu0 %2602
        %2604 = vadd.xlane.f32.xlu0 %v2567
        %v2605 = vpop.xlane.xlu0 %2604
        %2606 = vadd.xlane.f32.xlu0 %v2568
        %v2607 = vpop.xlane.xlu0 %2606
        %2608 = vadd.xlane.f32.xlu0 %v2569
        %v2609 = vpop.xlane.xlu0 %2608
        %2610 = vadd.xlane.f32.xlu0 %v2570
        %v2611 = vpop.xlane.xlu0 %2610
        %2612 = vadd.xlane.f32.xlu0 %v2571
        %v2613 = vpop.xlane.xlu0 %2612
        %2614 = vadd.xlane.f32.xlu0 %v2572
        %v2615 = vpop.xlane.xlu0 %2614
        %2616 = vadd.xlane.f32.xlu0 %v2573
        %v2617 = vpop.xlane.xlu0 %2616
        %2618 = vadd.xlane.f32.xlu0 %v2574
        %v2619 = vpop.xlane.xlu0 %2618
        %2620 = vadd.xlane.f32.xlu0 %v2575
        %v2621 = vpop.xlane.xlu0 %2620
        %2622 = vadd.xlane.f32.xlu0 %v2576
        %v2623 = vpop.xlane.xlu0 %2622
        %2624 = vadd.xlane.f32.xlu0 %v2577
        %v2625 = vpop.xlane.xlu0 %2624
        %2626 = vadd.xlane.f32.xlu0 %v2578
        %v2627 = vpop.xlane.xlu0 %2626
        %2628 = vadd.xlane.f32.xlu0 %v2579
        %v2629 = vpop.xlane.xlu0 %2628
        %2630 = vadd.xlane.f32.xlu0 %v2580
        %v2631 = vpop.xlane.xlu0 %2630
        %2632 = vadd.xlane.f32.xlu0 %v2581
        %v2633 = vpop.xlane.xlu0 %2632
        %2634 = vadd.xlane.f32.xlu0 %v2582
        %v2635 = vpop.xlane.xlu0 %2634
        %2636 = vadd.xlane.f32.xlu0 %v2583
        %v2637 = vpop.xlane.xlu0 %2636
        %2638 = vadd.xlane.f32.xlu0 %v2584
        %v2639 = vpop.xlane.xlu0 %2638
        %2640 = vadd.xlane.f32.xlu0 %v2585
        %v2641 = vpop.xlane.xlu0 %2640
        %2642 = vadd.xlane.f32.xlu0 %v2586
        %v2643 = vpop.xlane.xlu0 %2642
        %2644 = vadd.xlane.f32.xlu0 %v2587
        %v2645 = vpop.xlane.xlu0 %2644
        %2646 = vadd.xlane.f32.xlu0 %v2588
        %v2647 = vpop.xlane.xlu0 %2646
        %2648 = vadd.xlane.f32.xlu0 %v2589
        %v2649 = vpop.xlane.xlu0 %2648
        %2650 = vadd.xlane.f32.xlu0 %v2590
        %v2651 = vpop.xlane.xlu0 %2650
        %2652 = vadd.xlane.f32.xlu0 %v2591
        %v2653 = vpop.xlane.xlu0 %2652
        %2654 = vadd.xlane.f32.xlu0 %v2592
        %v2655 = vpop.xlane.xlu0 %2654
        %2656 = vadd.xlane.f32.xlu0 %v2593
        %v2657 = vpop.xlane.xlu0 %2656
        %v2658 = vpack.c.bf16 %v2563, %v2562
        %v2659 = vpack.c.bf16 %v2565, %v2564
        %v2660 = vpack.c.bf16 %v2567, %v2566
        %v2661 = vpack.c.bf16 %v2569, %v2568
        %v2662 = vpack.c.bf16 %v2571, %v2570
        %v2663 = vpack.c.bf16 %v2573, %v2572
        %v2664 = vpack.c.bf16 %v2575, %v2574
        %v2665 = vpack.c.bf16 %v2577, %v2576
        %v2666 = vpack.c.bf16 %v2579, %v2578
        %v2667 = vpack.c.bf16 %v2581, %v2580
        %v2668 = vpack.c.bf16 %v2583, %v2582
        %v2669 = vpack.c.bf16 %v2585, %v2584
        %v2670 = vpack.c.bf16 %v2587, %v2586
        %v2671 = vpack.c.bf16 %v2589, %v2588
        %v2672 = vpack.c.bf16 %v2591, %v2590
        %v2673 = vpack.c.bf16 %v2593, %v2592
        %2674 = vmatpush.bf16.msra.mxu0 %v1823
        %2675 = vmatpush.bf16.msra.mxu0 %v1822
        %2676 = vmatpush.bf16.msra.mxu0 %v1821
        %2677 = vmatpush.bf16.msra.mxu0 %v1820
        %2678 = vmatpush.bf16.msra.mxu0 %v1819
        %2679 = vmatpush.bf16.msra.mxu0 %v1818
        %2680 = vmatpush.bf16.msra.mxu0 %v1817
        %2681 = vmatpush.bf16.msra.mxu0 %v1816
        %2682 = vmatmul.bf16.gmra.mxu0 %v2658
        %v2683 = vpop.f32.mrf.mxu0
        %v2684 = vadd.f32 0.0, %v2683
        %v2685 = vpop.f32.mrf.mxu0
        %v2686 = vadd.f32 0.0, %v2685
        %2687 = vmatmul.bf16.gmra.mxu0 %v2659
        %v2688 = vpop.f32.mrf.mxu0
        %v2689 = vadd.f32 0.0, %v2688
        %v2690 = vpop.f32.mrf.mxu0
        %v2691 = vadd.f32 0.0, %v2690
        %2692 = vmatmul.bf16.gmra.mxu0 %v2660
        %v2693 = vpop.f32.mrf.mxu0
        %v2694 = vadd.f32 0.0, %v2693
        %v2695 = vpop.f32.mrf.mxu0
        %v2696 = vadd.f32 0.0, %v2695
        %2697 = vmatmul.bf16.gmra.mxu0 %v2661
        %v2698 = vpop.f32.mrf.mxu0
        %v2699 = vadd.f32 0.0, %v2698
        %v2700 = vpop.f32.mrf.mxu0
        %v2701 = vadd.f32 0.0, %v2700
        %2702 = vmatmul.bf16.gmra.mxu0 %v2662
        %v2703 = vpop.f32.mrf.mxu0
        %v2704 = vadd.f32 0.0, %v2703
        %v2705 = vpop.f32.mrf.mxu0
        %v2706 = vadd.f32 0.0, %v2705
        %2707 = vmatmul.bf16.gmra.mxu0 %v2663
        %v2708 = vpop.f32.mrf.mxu0
        %v2709 = vadd.f32 0.0, %v2708
        %v2710 = vpop.f32.mrf.mxu0
        %v2711 = vadd.f32 0.0, %v2710
        %2712 = vmatmul.bf16.gmra.mxu0 %v2664
        %v2713 = vpop.f32.mrf.mxu0
        %v2714 = vadd.f32 0.0, %v2713
        %v2715 = vpop.f32.mrf.mxu0
        %v2716 = vadd.f32 0.0, %v2715
        %2717 = vmatmul.bf16.gmra.mxu0 %v2665
        %v2718 = vpop.f32.mrf.mxu0
        %v2719 = vadd.f32 0.0, %v2718
        %v2720 = vpop.f32.mrf.mxu0
        %v2721 = vadd.f32 0.0, %v2720
        %2722 = vmatmul.bf16.gmra.mxu0 %v2666
        %v2723 = vpop.f32.mrf.mxu0
        %v2724 = vadd.f32 0.0, %v2723
        %v2725 = vpop.f32.mrf.mxu0
        %v2726 = vadd.f32 0.0, %v2725
        %2727 = vmatmul.bf16.gmra.mxu0 %v2667
        %v2728 = vpop.f32.mrf.mxu0
        %v2729 = vadd.f32 0.0, %v2728
        %v2730 = vpop.f32.mrf.mxu0
        %v2731 = vadd.f32 0.0, %v2730
        %2732 = vmatmul.bf16.gmra.mxu0 %v2668
        %v2733 = vpop.f32.mrf.mxu0
        %v2734 = vadd.f32 0.0, %v2733
        %v2735 = vpop.f32.mrf.mxu0
        %v2736 = vadd.f32 0.0, %v2735
        %2737 = vmatmul.bf16.gmra.mxu0 %v2669
        %v2738 = vpop.f32.mrf.mxu0
        %v2739 = vadd.f32 0.0, %v2738
        %v2740 = vpop.f32.mrf.mxu0
        %v2741 = vadd.f32 0.0, %v2740
        %2742 = vmatmul.bf16.gmra.mxu0 %v2670
        %v2743 = vpop.f32.mrf.mxu0
        %v2744 = vadd.f32 0.0, %v2743
        %v2745 = vpop.f32.mrf.mxu0
        %v2746 = vadd.f32 0.0, %v2745
        %2747 = vmatmul.bf16.gmra.mxu0 %v2671
        %v2748 = vpop.f32.mrf.mxu0
        %v2749 = vadd.f32 0.0, %v2748
        %v2750 = vpop.f32.mrf.mxu0
        %v2751 = vadd.f32 0.0, %v2750
        %2752 = vmatmul.bf16.gmra.mxu0 %v2672
        %v2753 = vpop.f32.mrf.mxu0
        %v2754 = vadd.f32 0.0, %v2753
        %v2755 = vpop.f32.mrf.mxu0
        %v2756 = vadd.f32 0.0, %v2755
        %2757 = vmatmul.bf16.gmra.mxu0 %v2673
        %v2758 = vpop.f32.mrf.mxu0
        %v2759 = vadd.f32 0.0, %v2758
        %v2760 = vpop.f32.mrf.mxu0
        %v2761 = vadd.f32 0.0, %v2760
        %2762 = vdwg.mxu0
        %v2763 = vrcp.pop %v2595
        %v2764 = vrcp.pop %v2597
        %v2765 = vrcp.pop %v2599
        %v2766 = vrcp.pop %v2601
        %v2767 = vrcp.pop %v2603
        %v2768 = vrcp.pop %v2605
        %v2769 = vrcp.pop %v2607
        %v2770 = vrcp.pop %v2609
        %v2771 = vrcp.pop %v2611
        %v2772 = vrcp.pop %v2613
        %v2773 = vrcp.pop %v2615
        %v2774 = vrcp.pop %v2617
        %v2775 = vrcp.pop %v2619
        %v2776 = vrcp.pop %v2621
        %v2777 = vrcp.pop %v2623
        %v2778 = vrcp.pop %v2625
        %v2779 = vrcp.pop %v2627
        %v2780 = vrcp.pop %v2629
        %v2781 = vrcp.pop %v2631
        %v2782 = vrcp.pop %v2633
        %v2783 = vrcp.pop %v2635
        %v2784 = vrcp.pop %v2637
        %v2785 = vrcp.pop %v2639
        %v2786 = vrcp.pop %v2641
        %v2787 = vrcp.pop %v2643
        %v2788 = vrcp.pop %v2645
        %v2789 = vrcp.pop %v2647
        %v2790 = vrcp.pop %v2649
        %v2791 = vrcp.pop %v2651
        %v2792 = vrcp.pop %v2653
        %v2793 = vrcp.pop %v2655
        %v2794 = vrcp.pop %v2657
        %v2795 = vmul.f32 %v2684, %v2763
        %v2796 = vmul.f32 %v2686, %v2764
        %v2797 = vmul.f32 %v2689, %v2765
        %v2798 = vmul.f32 %v2691, %v2766
        %v2799 = vmul.f32 %v2694, %v2767
        %v2800 = vmul.f32 %v2696, %v2768
        %v2801 = vmul.f32 %v2699, %v2769
        %v2802 = vmul.f32 %v2701, %v2770
        %v2803 = vmul.f32 %v2704, %v2771
        %v2804 = vmul.f32 %v2706, %v2772
        %v2805 = vmul.f32 %v2709, %v2773
        %v2806 = vmul.f32 %v2711, %v2774
        %v2807 = vmul.f32 %v2714, %v2775
        %v2808 = vmul.f32 %v2716, %v2776
        %v2809 = vmul.f32 %v2719, %v2777
        %v2810 = vmul.f32 %v2721, %v2778
        %v2811 = vmul.f32 %v2724, %v2779
        %v2812 = vmul.f32 %v2726, %v2780
        %v2813 = vmul.f32 %v2729, %v2781
        %v2814 = vmul.f32 %v2731, %v2782
        %v2815 = vmul.f32 %v2734, %v2783
        %v2816 = vmul.f32 %v2736, %v2784
        %v2817 = vmul.f32 %v2739, %v2785
        %v2818 = vmul.f32 %v2741, %v2786
        %v2819 = vmul.f32 %v2744, %v2787
        %v2820 = vmul.f32 %v2746, %v2788
        %v2821 = vmul.f32 %v2749, %v2789
        %v2822 = vmul.f32 %v2751, %v2790
        %v2823 = vmul.f32 %v2754, %v2791
        %v2824 = vmul.f32 %v2756, %v2792
        %v2825 = vmul.f32 %v2759, %v2793
        %v2826 = vmul.f32 %v2761, %v2794
        %2843 = vrot.lane.b32.xlu0 %v2811, 64
        %v2844 = vpop.permute.xlu0 %2843
        %2845 = vrot.lane.b32.xlu0 %v2812, 64
        %v2846 = vpop.permute.xlu0 %2845
        %2847 = vrot.lane.b32.xlu0 %v2813, 64
        %v2848 = vpop.permute.xlu0 %2847
        %2849 = vrot.lane.b32.xlu0 %v2814, 64
        %v2850 = vpop.permute.xlu0 %2849
        %2851 = vrot.lane.b32.xlu0 %v2815, 64
        %v2852 = vpop.permute.xlu0 %2851
        %2853 = vrot.lane.b32.xlu0 %v2816, 64
        %v2854 = vpop.permute.xlu0 %2853
        %2855 = vrot.lane.b32.xlu0 %v2817, 64
        %v2856 = vpop.permute.xlu0 %2855
        %2857 = vrot.lane.b32.xlu0 %v2818, 64
        %v2858 = vpop.permute.xlu0 %2857
        %2859 = vrot.lane.b32.xlu0 %v2819, 64
        %v2860 = vpop.permute.xlu0 %2859
        %2861 = vrot.lane.b32.xlu0 %v2820, 64
        %v2862 = vpop.permute.xlu0 %2861
        %2863 = vrot.lane.b32.xlu0 %v2821, 64
        %v2864 = vpop.permute.xlu0 %2863
        %2865 = vrot.lane.b32.xlu0 %v2822, 64
        %v2866 = vpop.permute.xlu0 %2865
        %2867 = vrot.lane.b32.xlu0 %v2823, 64
        %v2868 = vpop.permute.xlu0 %2867
        %2869 = vrot.lane.b32.xlu0 %v2824, 64
        %v2870 = vpop.permute.xlu0 %2869
        %2871 = vrot.lane.b32.xlu0 %v2825, 64
        %v2872 = vpop.permute.xlu0 %2871
        %2873 = vrot.lane.b32.xlu0 %v2826, 64
        %v2874 = vpop.permute.xlu0 %2873
        %v2891 = vsel %vm2240, %v2795, %v2844
        %v2892 = vsel %vm2240, %v2796, %v2846
        %v2893 = vsel %vm2240, %v2797, %v2848
        %v2894 = vsel %vm2240, %v2798, %v2850
        %v2895 = vsel %vm2240, %v2799, %v2852
        %v2896 = vsel %vm2240, %v2800, %v2854
        %v2897 = vsel %vm2240, %v2801, %v2856
        %v2898 = vsel %vm2240, %v2802, %v2858
        %v2899 = vsel %vm2240, %v2803, %v2860
        %v2900 = vsel %vm2240, %v2804, %v2862
        %v2901 = vsel %vm2240, %v2805, %v2864
        %v2902 = vsel %vm2240, %v2806, %v2866
        %v2903 = vsel %vm2240, %v2807, %v2868
        %v2904 = vsel %vm2240, %v2808, %v2870
        %v2905 = vsel %vm2240, %v2809, %v2872
        %v2906 = vsel %vm2240, %v2810, %v2874
        %v2907 = vsel %vm1679, %v1632, %v1584
        %v2908 = vsel %vm1679, %v1634, %v1586
        %v2909 = vsel %vm1679, %v1636, %v1588
        %v2910 = vsel %vm1679, %v1638, %v1590
        %v2911 = vsel %vm1679, %v1640, %v1592
        %v2912 = vsel %vm1679, %v1642, %v1594
        %v2913 = vsel %vm1679, %v1644, %v1596
        %v2914 = vsel %vm1679, %v1646, %v1598
        %v2915 = vsel %vm1679, %v1648, %v1600
        %v2916 = vsel %vm1679, %v1650, %v1602
        %v2917 = vsel %vm1679, %v1652, %v1604
        %v2918 = vsel %vm1679, %v1654, %v1606
        %v2919 = vsel %vm1679, %v1656, %v1608
        %v2920 = vsel %vm1679, %v1658, %v1610
        %v2921 = vsel %vm1679, %v1660, %v1612
        %v2922 = vsel %vm1679, %v1662, %v1614
        %v2923 = vmul.f32 %v1430, %v1729
        %v2924 = vmul.f32 %v1432, %v1731
        %v2925 = vmul.f32 %v1435, %v1733
        %v2926 = vmul.f32 %v1437, %v1735
        %v2927 = vmul.f32 %v1440, %v1737
        %v2928 = vmul.f32 %v1442, %v1739
        %v2929 = vmul.f32 %v1445, %v1741
        %v2930 = vmul.f32 %v1447, %v1743
        %v2931 = vmul.f32 %v1450, %v1745
        %v2932 = vmul.f32 %v1452, %v1747
        %v2933 = vmul.f32 %v1455, %v1749
        %v2934 = vmul.f32 %v1457, %v1751
        %v2935 = vmul.f32 %v1460, %v1753
        %v2936 = vmul.f32 %v1462, %v1755
        %v2937 = vmul.f32 %v1465, %v1757
        %v2938 = vmul.f32 %v1467, %v1759
        %v2939 = vmul.f32 %v2907, %v1729
        %v2940 = vmul.f32 %v2908, %v1731
        %v2941 = vmul.f32 %v2909, %v1733
        %v2942 = vmul.f32 %v2910, %v1735
        %v2943 = vmul.f32 %v2911, %v1737
        %v2944 = vmul.f32 %v2912, %v1739
        %v2945 = vmul.f32 %v2913, %v1741
        %v2946 = vmul.f32 %v2914, %v1743
        %v2947 = vmul.f32 %v2915, %v1745
        %v2948 = vmul.f32 %v2916, %v1747
        %v2949 = vmul.f32 %v2917, %v1749
        %v2950 = vmul.f32 %v2918, %v1751
        %v2951 = vmul.f32 %v2919, %v1753
        %v2952 = vmul.f32 %v2920, %v1755
        %v2953 = vmul.f32 %v2921, %v1757
        %v2954 = vmul.f32 %v2922, %v1759
        %2971 = vrot.lane.b32.xlu0 %v2939, 64
        %v2972 = vpop.permute.xlu0 %2971
        %2973 = vrot.lane.b32.xlu0 %v2940, 64
        %v2974 = vpop.permute.xlu0 %2973
        %2975 = vrot.lane.b32.xlu0 %v2941, 64
        %v2976 = vpop.permute.xlu0 %2975
        %2977 = vrot.lane.b32.xlu0 %v2942, 64
        %v2978 = vpop.permute.xlu0 %2977
        %2979 = vrot.lane.b32.xlu0 %v2943, 64
        %v2980 = vpop.permute.xlu0 %2979
        %2981 = vrot.lane.b32.xlu0 %v2944, 64
        %v2982 = vpop.permute.xlu0 %2981
        %2983 = vrot.lane.b32.xlu0 %v2945, 64
        %v2984 = vpop.permute.xlu0 %2983
        %2985 = vrot.lane.b32.xlu0 %v2946, 64
        %v2986 = vpop.permute.xlu0 %2985
        %2987 = vrot.lane.b32.xlu0 %v2947, 64
        %v2988 = vpop.permute.xlu0 %2987
        %2989 = vrot.lane.b32.xlu0 %v2948, 64
        %v2990 = vpop.permute.xlu0 %2989
        %2991 = vrot.lane.b32.xlu0 %v2949, 64
        %v2992 = vpop.permute.xlu0 %2991
        %2993 = vrot.lane.b32.xlu0 %v2950, 64
        %v2994 = vpop.permute.xlu0 %2993
        %2995 = vrot.lane.b32.xlu0 %v2951, 64
        %v2996 = vpop.permute.xlu0 %2995
        %2997 = vrot.lane.b32.xlu0 %v2952, 64
        %v2998 = vpop.permute.xlu0 %2997
        %2999 = vrot.lane.b32.xlu0 %v2953, 64
        %v3000 = vpop.permute.xlu0 %2999
        %3001 = vrot.lane.b32.xlu0 %v2954, 64
        %v3002 = vpop.permute.xlu0 %3001
        %v3019 = vadd.f32 %v2923, %v2972
        %v3020 = vadd.f32 %v2924, %v2974
        %v3021 = vadd.f32 %v2925, %v2976
        %v3022 = vadd.f32 %v2926, %v2978
        %v3023 = vadd.f32 %v2927, %v2980
        %v3024 = vadd.f32 %v2928, %v2982
        %v3025 = vadd.f32 %v2929, %v2984
        %v3026 = vadd.f32 %v2930, %v2986
        %v3027 = vadd.f32 %v2931, %v2988
        %v3028 = vadd.f32 %v2932, %v2990
        %v3029 = vadd.f32 %v2933, %v2992
        %v3030 = vadd.f32 %v2934, %v2994
        %v3031 = vadd.f32 %v2935, %v2996
        %v3032 = vadd.f32 %v2936, %v2998
        %v3033 = vadd.f32 %v2937, %v3000
        %v3034 = vadd.f32 %v2938, %v3002
        %v3035 = vpack.c.bf16 %v3020, %v3019
        %v3036 = vpack.c.bf16 %v3022, %v3021
        %v3037 = vpack.c.bf16 %v3024, %v3023
        %v3038 = vpack.c.bf16 %v3026, %v3025
        %v3039 = vpack.c.bf16 %v3028, %v3027
        %v3040 = vpack.c.bf16 %v3030, %v3029
        %v3041 = vpack.c.bf16 %v3032, %v3031
        %v3042 = vpack.c.bf16 %v3034, %v3033
        %3059 = vrot.lane.b32.xlu0 %v1332, 96
        %v3060 = vpop.permute.xlu0 %3059
        %3061 = vrot.lane.b32.xlu0 %v1334, 96
        %v3062 = vpop.permute.xlu0 %3061
        %3063 = vrot.lane.b32.xlu0 %v1337, 96
        %v3064 = vpop.permute.xlu0 %3063
        %3065 = vrot.lane.b32.xlu0 %v1339, 96
        %v3066 = vpop.permute.xlu0 %3065
        %3067 = vrot.lane.b32.xlu0 %v1342, 96
        %v3068 = vpop.permute.xlu0 %3067
        %3069 = vrot.lane.b32.xlu0 %v1344, 96
        %v3070 = vpop.permute.xlu0 %3069
        %3071 = vrot.lane.b32.xlu0 %v1347, 96
        %v3072 = vpop.permute.xlu0 %3071
        %3073 = vrot.lane.b32.xlu0 %v1349, 96
        %v3074 = vpop.permute.xlu0 %3073
        %3075 = vrot.lane.b32.xlu0 %v1352, 96
        %v3076 = vpop.permute.xlu0 %3075
        %3077 = vrot.lane.b32.xlu0 %v1354, 96
        %v3078 = vpop.permute.xlu0 %3077
        %3079 = vrot.lane.b32.xlu0 %v1357, 96
        %v3080 = vpop.permute.xlu0 %3079
        %3081 = vrot.lane.b32.xlu0 %v1359, 96
        %v3082 = vpop.permute.xlu0 %3081
        %3083 = vrot.lane.b32.xlu0 %v1362, 96
        %v3084 = vpop.permute.xlu0 %3083
        %3085 = vrot.lane.b32.xlu0 %v1364, 96
        %v3086 = vpop.permute.xlu0 %3085
        %3087 = vrot.lane.b32.xlu0 %v1367, 96
        %v3088 = vpop.permute.xlu0 %3087
        %3089 = vrot.lane.b32.xlu0 %v1369, 96
        %v3090 = vpop.permute.xlu0 %3089
        %3107 = vrot.lane.b32.xlu0 %v1332, 32
        %v3108 = vpop.permute.xlu0 %3107
        %3109 = vrot.lane.b32.xlu0 %v1334, 32
        %v3110 = vpop.permute.xlu0 %3109
        %3111 = vrot.lane.b32.xlu0 %v1337, 32
        %v3112 = vpop.permute.xlu0 %3111
        %3113 = vrot.lane.b32.xlu0 %v1339, 32
        %v3114 = vpop.permute.xlu0 %3113
        %3115 = vrot.lane.b32.xlu0 %v1342, 32
        %v3116 = vpop.permute.xlu0 %3115
        %3117 = vrot.lane.b32.xlu0 %v1344, 32
        %v3118 = vpop.permute.xlu0 %3117
        %3119 = vrot.lane.b32.xlu0 %v1347, 32
        %v3120 = vpop.permute.xlu0 %3119
        %3121 = vrot.lane.b32.xlu0 %v1349, 32
        %v3122 = vpop.permute.xlu0 %3121
        %3123 = vrot.lane.b32.xlu0 %v1352, 32
        %v3124 = vpop.permute.xlu0 %3123
        %3125 = vrot.lane.b32.xlu0 %v1354, 32
        %v3126 = vpop.permute.xlu0 %3125
        %3127 = vrot.lane.b32.xlu0 %v1357, 32
        %v3128 = vpop.permute.xlu0 %3127
        %3129 = vrot.lane.b32.xlu0 %v1359, 32
        %v3130 = vpop.permute.xlu0 %3129
        %3131 = vrot.lane.b32.xlu0 %v1362, 32
        %v3132 = vpop.permute.xlu0 %3131
        %3133 = vrot.lane.b32.xlu0 %v1364, 32
        %v3134 = vpop.permute.xlu0 %3133
        %3135 = vrot.lane.b32.xlu0 %v1367, 32
        %v3136 = vpop.permute.xlu0 %3135
        %3137 = vrot.lane.b32.xlu0 %v1369, 32
        %v3138 = vpop.permute.xlu0 %3137
        %v3155 = vsel %vm1679, %v3060, %v3108
        %v3156 = vsel %vm1679, %v3062, %v3110
        %v3157 = vsel %vm1679, %v3064, %v3112
        %v3158 = vsel %vm1679, %v3066, %v3114
        %v3159 = vsel %vm1679, %v3068, %v3116
        %v3160 = vsel %vm1679, %v3070, %v3118
        %v3161 = vsel %vm1679, %v3072, %v3120
        %v3162 = vsel %vm1679, %v3074, %v3122
        %v3163 = vsel %vm1679, %v3076, %v3124
        %v3164 = vsel %vm1679, %v3078, %v3126
        %v3165 = vsel %vm1679, %v3080, %v3128
        %v3166 = vsel %vm1679, %v3082, %v3130
        %v3167 = vsel %vm1679, %v3084, %v3132
        %v3168 = vsel %vm1679, %v3086, %v3134
        %v3169 = vsel %vm1679, %v3088, %v3136
        %v3170 = vsel %vm1679, %v3090, %v3138
        %v3171 = vmul.f32 %v1332, %v292
        %v3172 = vmul.f32 %v1334, %v293
        %v3173 = vmul.f32 %v1337, %v294
        %v3174 = vmul.f32 %v1339, %v295
        %v3175 = vmul.f32 %v1342, %v296
        %v3176 = vmul.f32 %v1344, %v297
        %v3177 = vmul.f32 %v1347, %v298
        %v3178 = vmul.f32 %v1349, %v299
        %v3179 = vmul.f32 %v1352, %v300
        %v3180 = vmul.f32 %v1354, %v301
        %v3181 = vmul.f32 %v1357, %v302
        %v3182 = vmul.f32 %v1359, %v303
        %v3183 = vmul.f32 %v1362, %v304
        %v3184 = vmul.f32 %v1364, %v305
        %v3185 = vmul.f32 %v1367, %v306
        %v3186 = vmul.f32 %v1369, %v307
        %v3187 = vmul.f32 %v3155, %v1729
        %v3188 = vmul.f32 %v3156, %v1731
        %v3189 = vmul.f32 %v3157, %v1733
        %v3190 = vmul.f32 %v3158, %v1735
        %v3191 = vmul.f32 %v3159, %v1737
        %v3192 = vmul.f32 %v3160, %v1739
        %v3193 = vmul.f32 %v3161, %v1741
        %v3194 = vmul.f32 %v3162, %v1743
        %v3195 = vmul.f32 %v3163, %v1745
        %v3196 = vmul.f32 %v3164, %v1747
        %v3197 = vmul.f32 %v3165, %v1749
        %v3198 = vmul.f32 %v3166, %v1751
        %v3199 = vmul.f32 %v3167, %v1753
        %v3200 = vmul.f32 %v3168, %v1755
        %v3201 = vmul.f32 %v3169, %v1757
        %v3202 = vmul.f32 %v3170, %v1759
        %v3203 = vadd.f32 %v3171, %v3187
        %v3204 = vadd.f32 %v3172, %v3188
        %v3205 = vadd.f32 %v3173, %v3189
        %v3206 = vadd.f32 %v3174, %v3190
        %v3207 = vadd.f32 %v3175, %v3191
        %v3208 = vadd.f32 %v3176, %v3192
        %v3209 = vadd.f32 %v3177, %v3193
        %v3210 = vadd.f32 %v3178, %v3194
        %v3211 = vadd.f32 %v3179, %v3195
        %v3212 = vadd.f32 %v3180, %v3196
        %v3213 = vadd.f32 %v3181, %v3197
        %v3214 = vadd.f32 %v3182, %v3198
        %v3215 = vadd.f32 %v3183, %v3199
        %v3216 = vadd.f32 %v3184, %v3200
        %v3217 = vadd.f32 %v3185, %v3201
        %v3218 = vadd.f32 %v3186, %v3202
        %v3219 = vsel %vm1679, %v3108, %v3060
        %v3220 = vsel %vm1679, %v3110, %v3062
        %v3221 = vsel %vm1679, %v3112, %v3064
        %v3222 = vsel %vm1679, %v3114, %v3066
        %v3223 = vsel %vm1679, %v3116, %v3068
        %v3224 = vsel %vm1679, %v3118, %v3070
        %v3225 = vsel %vm1679, %v3120, %v3072
        %v3226 = vsel %vm1679, %v3122, %v3074
        %v3227 = vsel %vm1679, %v3124, %v3076
        %v3228 = vsel %vm1679, %v3126, %v3078
        %v3229 = vsel %vm1679, %v3128, %v3080
        %v3230 = vsel %vm1679, %v3130, %v3082
        %v3231 = vsel %vm1679, %v3132, %v3084
        %v3232 = vsel %vm1679, %v3134, %v3086
        %v3233 = vsel %vm1679, %v3136, %v3088
        %v3234 = vsel %vm1679, %v3138, %v3090
        %v3235 = vmul.f32 %v1332, %v1729
        %v3236 = vmul.f32 %v1334, %v1731
        %v3237 = vmul.f32 %v1337, %v1733
        %v3238 = vmul.f32 %v1339, %v1735
        %v3239 = vmul.f32 %v1342, %v1737
        %v3240 = vmul.f32 %v1344, %v1739
        %v3241 = vmul.f32 %v1347, %v1741
        %v3242 = vmul.f32 %v1349, %v1743
        %v3243 = vmul.f32 %v1352, %v1745
        %v3244 = vmul.f32 %v1354, %v1747
        %v3245 = vmul.f32 %v1357, %v1749
        %v3246 = vmul.f32 %v1359, %v1751
        %v3247 = vmul.f32 %v1362, %v1753
        %v3248 = vmul.f32 %v1364, %v1755
        %v3249 = vmul.f32 %v1367, %v1757
        %v3250 = vmul.f32 %v1369, %v1759
        %v3251 = vmul.f32 %v3219, %v1729
        %v3252 = vmul.f32 %v3220, %v1731
        %v3253 = vmul.f32 %v3221, %v1733
        %v3254 = vmul.f32 %v3222, %v1735
        %v3255 = vmul.f32 %v3223, %v1737
        %v3256 = vmul.f32 %v3224, %v1739
        %v3257 = vmul.f32 %v3225, %v1741
        %v3258 = vmul.f32 %v3226, %v1743
        %v3259 = vmul.f32 %v3227, %v1745
        %v3260 = vmul.f32 %v3228, %v1747
        %v3261 = vmul.f32 %v3229, %v1749
        %v3262 = vmul.f32 %v3230, %v1751
        %v3263 = vmul.f32 %v3231, %v1753
        %v3264 = vmul.f32 %v3232, %v1755
        %v3265 = vmul.f32 %v3233, %v1757
        %v3266 = vmul.f32 %v3234, %v1759
        %3283 = vrot.lane.b32.xlu0 %v3251, 64
        %v3284 = vpop.permute.xlu0 %3283
        %3285 = vrot.lane.b32.xlu0 %v3252, 64
        %v3286 = vpop.permute.xlu0 %3285
        %3287 = vrot.lane.b32.xlu0 %v3253, 64
        %v3288 = vpop.permute.xlu0 %3287
        %3289 = vrot.lane.b32.xlu0 %v3254, 64
        %v3290 = vpop.permute.xlu0 %3289
        %3291 = vrot.lane.b32.xlu0 %v3255, 64
        %v3292 = vpop.permute.xlu0 %3291
        %3293 = vrot.lane.b32.xlu0 %v3256, 64
        %v3294 = vpop.permute.xlu0 %3293
        %3295 = vrot.lane.b32.xlu0 %v3257, 64
        %v3296 = vpop.permute.xlu0 %3295
        %3297 = vrot.lane.b32.xlu0 %v3258, 64
        %v3298 = vpop.permute.xlu0 %3297
        %3299 = vrot.lane.b32.xlu0 %v3259, 64
        %v3300 = vpop.permute.xlu0 %3299
        %3301 = vrot.lane.b32.xlu0 %v3260, 64
        %v3302 = vpop.permute.xlu0 %3301
        %3303 = vrot.lane.b32.xlu0 %v3261, 64
        %v3304 = vpop.permute.xlu0 %3303
        %3305 = vrot.lane.b32.xlu0 %v3262, 64
        %v3306 = vpop.permute.xlu0 %3305
        %3307 = vrot.lane.b32.xlu0 %v3263, 64
        %v3308 = vpop.permute.xlu0 %3307
        %3309 = vrot.lane.b32.xlu0 %v3264, 64
        %v3310 = vpop.permute.xlu0 %3309
        %3311 = vrot.lane.b32.xlu0 %v3265, 64
        %v3312 = vpop.permute.xlu0 %3311
        %3313 = vrot.lane.b32.xlu0 %v3266, 64
        %v3314 = vpop.permute.xlu0 %3313
        %v3331 = vadd.f32 %v3235, %v3284
        %v3332 = vadd.f32 %v3236, %v3286
        %v3333 = vadd.f32 %v3237, %v3288
        %v3334 = vadd.f32 %v3238, %v3290
        %v3335 = vadd.f32 %v3239, %v3292
        %v3336 = vadd.f32 %v3240, %v3294
        %v3337 = vadd.f32 %v3241, %v3296
        %v3338 = vadd.f32 %v3242, %v3298
        %v3339 = vadd.f32 %v3243, %v3300
        %v3340 = vadd.f32 %v3244, %v3302
        %v3341 = vadd.f32 %v3245, %v3304
        %v3342 = vadd.f32 %v3246, %v3306
        %v3343 = vadd.f32 %v3247, %v3308
        %v3344 = vadd.f32 %v3248, %v3310
        %v3345 = vadd.f32 %v3249, %v3312
        %v3346 = vadd.f32 %v3250, %v3314
        %3363 = vrot.lane.b32.xlu0 %v3331, 64
        %v3364 = vpop.permute.xlu0 %3363
        %3365 = vrot.lane.b32.xlu0 %v3332, 64
        %v3366 = vpop.permute.xlu0 %3365
        %3367 = vrot.lane.b32.xlu0 %v3333, 64
        %v3368 = vpop.permute.xlu0 %3367
        %3369 = vrot.lane.b32.xlu0 %v3334, 64
        %v3370 = vpop.permute.xlu0 %3369
        %3371 = vrot.lane.b32.xlu0 %v3335, 64
        %v3372 = vpop.permute.xlu0 %3371
        %3373 = vrot.lane.b32.xlu0 %v3336, 64
        %v3374 = vpop.permute.xlu0 %3373
        %3375 = vrot.lane.b32.xlu0 %v3337, 64
        %v3376 = vpop.permute.xlu0 %3375
        %3377 = vrot.lane.b32.xlu0 %v3338, 64
        %v3378 = vpop.permute.xlu0 %3377
        %3379 = vrot.lane.b32.xlu0 %v3339, 64
        %v3380 = vpop.permute.xlu0 %3379
        %3381 = vrot.lane.b32.xlu0 %v3340, 64
        %v3382 = vpop.permute.xlu0 %3381
        %3383 = vrot.lane.b32.xlu0 %v3341, 64
        %v3384 = vpop.permute.xlu0 %3383
        %3385 = vrot.lane.b32.xlu0 %v3342, 64
        %v3386 = vpop.permute.xlu0 %3385
        %3387 = vrot.lane.b32.xlu0 %v3343, 64
        %v3388 = vpop.permute.xlu0 %3387
        %3389 = vrot.lane.b32.xlu0 %v3344, 64
        %v3390 = vpop.permute.xlu0 %3389
        %3391 = vrot.lane.b32.xlu0 %v3345, 64
        %v3392 = vpop.permute.xlu0 %3391
        %3393 = vrot.lane.b32.xlu0 %v3346, 64
        %v3394 = vpop.permute.xlu0 %3393
        %v3411 = vmul.f32 %v3203, 0.125
        %v3412 = vmul.f32 %v3204, 0.125
        %v3413 = vmul.f32 %v3205, 0.125
        %v3414 = vmul.f32 %v3206, 0.125
        %v3415 = vmul.f32 %v3207, 0.125
        %v3416 = vmul.f32 %v3208, 0.125
        %v3417 = vmul.f32 %v3209, 0.125
        %v3418 = vmul.f32 %v3210, 0.125
        %v3419 = vmul.f32 %v3211, 0.125
        %v3420 = vmul.f32 %v3212, 0.125
        %v3421 = vmul.f32 %v3213, 0.125
        %v3422 = vmul.f32 %v3214, 0.125
        %v3423 = vmul.f32 %v3215, 0.125
        %v3424 = vmul.f32 %v3216, 0.125
        %v3425 = vmul.f32 %v3217, 0.125
        %v3426 = vmul.f32 %v3218, 0.125
        %v3427 = vmul.f32 %v3364, 0.125
        %v3428 = vmul.f32 %v3366, 0.125
        %v3429 = vmul.f32 %v3368, 0.125
        %v3430 = vmul.f32 %v3370, 0.125
        %v3431 = vmul.f32 %v3372, 0.125
        %v3432 = vmul.f32 %v3374, 0.125
        %v3433 = vmul.f32 %v3376, 0.125
        %v3434 = vmul.f32 %v3378, 0.125
        %v3435 = vmul.f32 %v3380, 0.125
        %v3436 = vmul.f32 %v3382, 0.125
        %v3437 = vmul.f32 %v3384, 0.125
        %v3438 = vmul.f32 %v3386, 0.125
        %v3439 = vmul.f32 %v3388, 0.125
        %v3440 = vmul.f32 %v3390, 0.125
        %v3441 = vmul.f32 %v3392, 0.125
        %v3442 = vmul.f32 %v3394, 0.125
        %v3443 = vpack.c.bf16 %v3412, %v3411
        %v3444 = vpack.c.bf16 %v3414, %v3413
        %v3445 = vpack.c.bf16 %v3416, %v3415
        %v3446 = vpack.c.bf16 %v3418, %v3417
        %v3447 = vpack.c.bf16 %v3420, %v3419
        %v3448 = vpack.c.bf16 %v3422, %v3421
        %v3449 = vpack.c.bf16 %v3424, %v3423
        %v3450 = vpack.c.bf16 %v3426, %v3425
        %v3451 = vpack.c.bf16 %v3428, %v3427
        %v3452 = vpack.c.bf16 %v3430, %v3429
        %v3453 = vpack.c.bf16 %v3432, %v3431
        %v3454 = vpack.c.bf16 %v3434, %v3433
        %v3455 = vpack.c.bf16 %v3436, %v3435
        %v3456 = vpack.c.bf16 %v3438, %v3437
        %v3457 = vpack.c.bf16 %v3440, %v3439
        %v3458 = vpack.c.bf16 %v3442, %v3441
        %3467 = vrot.lane.b32.xlu0 %v3035, 64
        %v3468 = vpop.permute.xlu0 %3467
        %3469 = vrot.lane.b32.xlu0 %v3036, 64
        %v3470 = vpop.permute.xlu0 %3469
        %3471 = vrot.lane.b32.xlu0 %v3037, 64
        %v3472 = vpop.permute.xlu0 %3471
        %3473 = vrot.lane.b32.xlu0 %v3038, 64
        %v3474 = vpop.permute.xlu0 %3473
        %3475 = vrot.lane.b32.xlu0 %v3039, 64
        %v3476 = vpop.permute.xlu0 %3475
        %3477 = vrot.lane.b32.xlu0 %v3040, 64
        %v3478 = vpop.permute.xlu0 %3477
        %3479 = vrot.lane.b32.xlu0 %v3041, 64
        %v3480 = vpop.permute.xlu0 %3479
        %3481 = vrot.lane.b32.xlu0 %v3042, 64
        %v3482 = vpop.permute.xlu0 %3481
        %v3484 = vsel %vm2240, %v3443, 0
        %v3487 = vsel %vm2240, %v3444, 0
        %v3490 = vsel %vm2240, %v3445, 0
        %v3493 = vsel %vm2240, %v3446, 0
        %v3496 = vsel %vm2240, %v3447, 0
        %v3499 = vsel %vm2240, %v3448, 0
        %v3502 = vsel %vm2240, %v3449, 0
        %v3505 = vsel %vm2240, %v3450, 0
        %v3508 = vsel %vm2240, %v3451, 0
        %v3511 = vsel %vm2240, %v3452, 0
        %v3514 = vsel %vm2240, %v3453, 0
        %v3517 = vsel %vm2240, %v3454, 0
        %v3520 = vsel %vm2240, %v3455, 0
        %v3523 = vsel %vm2240, %v3456, 0
        %v3526 = vsel %vm2240, %v3457, 0
        %v3529 = vsel %vm2240, %v3458, 0
        %v3532 = vsel %vm2240, %v3468, 0
        %v3535 = vsel %vm2240, %v3470, 0
        %v3538 = vsel %vm2240, %v3472, 0
        %v3541 = vsel %vm2240, %v3474, 0
        %v3544 = vsel %vm2240, %v3476, 0
        %v3547 = vsel %vm2240, %v3478, 0
        %v3550 = vsel %vm2240, %v3480, 0
        %v3553 = vsel %vm2240, %v3482, 0
        %3555 = vmatpush.bf16.xpose.msra.mxu0 %v3553
        %3556 = vmatpush.bf16.xpose.msra.mxu0 %v3550
        %3557 = vmatpush.bf16.xpose.msra.mxu0 %v3547
        %3558 = vmatpush.bf16.xpose.msra.mxu0 %v3544
        %3559 = vmatpush.bf16.xpose.msra.mxu0 %v3541
        %3560 = vmatpush.bf16.xpose.msra.mxu0 %v3538
        %3561 = vmatpush.bf16.xpose.msra.mxu0 %v3535
        %3562 = vmatpush.bf16.xpose.msra.mxu0 %v3532
        %3563 = vmatmul.bf16.gmra.mxu0 %v3484
        %v3564 = vpop.f32.mrf.mxu0
        %v3565 = vadd.f32 0.0, %v3564
        %v3566 = vpop.f32.mrf.mxu0
        %v3567 = vadd.f32 0.0, %v3566
        %3568 = vmatmul.bf16.gmra.mxu0 %v3487
        %v3569 = vpop.f32.mrf.mxu0
        %v3570 = vadd.f32 0.0, %v3569
        %v3571 = vpop.f32.mrf.mxu0
        %v3572 = vadd.f32 0.0, %v3571
        %3573 = vmatmul.bf16.gmra.mxu0 %v3490
        %v3574 = vpop.f32.mrf.mxu0
        %v3575 = vadd.f32 0.0, %v3574
        %v3576 = vpop.f32.mrf.mxu0
        %v3577 = vadd.f32 0.0, %v3576
        %3578 = vmatmul.bf16.gmra.mxu0 %v3493
        %v3579 = vpop.f32.mrf.mxu0
        %v3580 = vadd.f32 0.0, %v3579
        %v3581 = vpop.f32.mrf.mxu0
        %v3582 = vadd.f32 0.0, %v3581
        %3583 = vmatmul.bf16.gmra.mxu0 %v3496
        %v3584 = vpop.f32.mrf.mxu0
        %v3585 = vadd.f32 0.0, %v3584
        %v3586 = vpop.f32.mrf.mxu0
        %v3587 = vadd.f32 0.0, %v3586
        %3588 = vmatmul.bf16.gmra.mxu0 %v3499
        %v3589 = vpop.f32.mrf.mxu0
        %v3590 = vadd.f32 0.0, %v3589
        %v3591 = vpop.f32.mrf.mxu0
        %v3592 = vadd.f32 0.0, %v3591
        %3593 = vmatmul.bf16.gmra.mxu0 %v3502
        %v3594 = vpop.f32.mrf.mxu0
        %v3595 = vadd.f32 0.0, %v3594
        %v3596 = vpop.f32.mrf.mxu0
        %v3597 = vadd.f32 0.0, %v3596
        %3598 = vmatmul.bf16.gmra.mxu0 %v3505
        %v3599 = vpop.f32.mrf.mxu0
        %v3600 = vadd.f32 0.0, %v3599
        %v3601 = vpop.f32.mrf.mxu0
        %v3602 = vadd.f32 0.0, %v3601
        %3603 = vmatmul.bf16.gmra.mxu0 %v3508
        %v3604 = vpop.f32.mrf.mxu0
        %v3605 = vadd.f32 0.0, %v3604
        %v3606 = vpop.f32.mrf.mxu0
        %v3607 = vadd.f32 0.0, %v3606
        %3608 = vmatmul.bf16.gmra.mxu0 %v3511
        %v3609 = vpop.f32.mrf.mxu0
        %v3610 = vadd.f32 0.0, %v3609
        %v3611 = vpop.f32.mrf.mxu0
        %v3612 = vadd.f32 0.0, %v3611
        %3613 = vmatmul.bf16.gmra.mxu0 %v3514
        %v3614 = vpop.f32.mrf.mxu0
        %v3615 = vadd.f32 0.0, %v3614
        %v3616 = vpop.f32.mrf.mxu0
        %v3617 = vadd.f32 0.0, %v3616
        %3618 = vmatmul.bf16.gmra.mxu0 %v3517
        %v3619 = vpop.f32.mrf.mxu0
        %v3620 = vadd.f32 0.0, %v3619
        %v3621 = vpop.f32.mrf.mxu0
        %v3622 = vadd.f32 0.0, %v3621
        %3623 = vmatmul.bf16.gmra.mxu0 %v3520
        %v3624 = vpop.f32.mrf.mxu0
        %v3625 = vadd.f32 0.0, %v3624
        %v3626 = vpop.f32.mrf.mxu0
        %v3627 = vadd.f32 0.0, %v3626
        %3628 = vmatmul.bf16.gmra.mxu0 %v3523
        %v3629 = vpop.f32.mrf.mxu0
        %v3630 = vadd.f32 0.0, %v3629
        %v3631 = vpop.f32.mrf.mxu0
        %v3632 = vadd.f32 0.0, %v3631
        %3633 = vmatmul.bf16.gmra.mxu0 %v3526
        %v3634 = vpop.f32.mrf.mxu0
        %v3635 = vadd.f32 0.0, %v3634
        %v3636 = vpop.f32.mrf.mxu0
        %v3637 = vadd.f32 0.0, %v3636
        %3638 = vmatmul.bf16.gmra.mxu0 %v3529
        %v3639 = vpop.f32.mrf.mxu0
        %v3640 = vadd.f32 0.0, %v3639
        %v3641 = vpop.f32.mrf.mxu0
        %v3642 = vadd.f32 0.0, %v3641
        %3643 = vdwg.mxu0
        %3644 = vmax.xlane.f32.xlu0 %v3565
        %v3645 = vpop.xlane.xlu0 %3644
        %3646 = vmax.xlane.f32.xlu0 %v3567
        %v3647 = vpop.xlane.xlu0 %3646
        %3648 = vmax.xlane.f32.xlu0 %v3570
        %v3649 = vpop.xlane.xlu0 %3648
        %3650 = vmax.xlane.f32.xlu0 %v3572
        %v3651 = vpop.xlane.xlu0 %3650
        %3652 = vmax.xlane.f32.xlu0 %v3575
        %v3653 = vpop.xlane.xlu0 %3652
        %3654 = vmax.xlane.f32.xlu0 %v3577
        %v3655 = vpop.xlane.xlu0 %3654
        %3656 = vmax.xlane.f32.xlu0 %v3580
        %v3657 = vpop.xlane.xlu0 %3656
        %3658 = vmax.xlane.f32.xlu0 %v3582
        %v3659 = vpop.xlane.xlu0 %3658
        %3660 = vmax.xlane.f32.xlu0 %v3585
        %v3661 = vpop.xlane.xlu0 %3660
        %3662 = vmax.xlane.f32.xlu0 %v3587
        %v3663 = vpop.xlane.xlu0 %3662
        %3664 = vmax.xlane.f32.xlu0 %v3590
        %v3665 = vpop.xlane.xlu0 %3664
        %3666 = vmax.xlane.f32.xlu0 %v3592
        %v3667 = vpop.xlane.xlu0 %3666
        %3668 = vmax.xlane.f32.xlu0 %v3595
        %v3669 = vpop.xlane.xlu0 %3668
        %3670 = vmax.xlane.f32.xlu0 %v3597
        %v3671 = vpop.xlane.xlu0 %3670
        %3672 = vmax.xlane.f32.xlu0 %v3600
        %v3673 = vpop.xlane.xlu0 %3672
        %3674 = vmax.xlane.f32.xlu0 %v3602
        %v3675 = vpop.xlane.xlu0 %3674
        %3676 = vmax.xlane.f32.xlu0 %v3605
        %v3677 = vpop.xlane.xlu0 %3676
        %3678 = vmax.xlane.f32.xlu0 %v3607
        %v3679 = vpop.xlane.xlu0 %3678
        %3680 = vmax.xlane.f32.xlu0 %v3610
        %v3681 = vpop.xlane.xlu0 %3680
        %3682 = vmax.xlane.f32.xlu0 %v3612
        %v3683 = vpop.xlane.xlu0 %3682
        %3684 = vmax.xlane.f32.xlu0 %v3615
        %v3685 = vpop.xlane.xlu0 %3684
        %3686 = vmax.xlane.f32.xlu0 %v3617
        %v3687 = vpop.xlane.xlu0 %3686
        %3688 = vmax.xlane.f32.xlu0 %v3620
        %v3689 = vpop.xlane.xlu0 %3688
        %3690 = vmax.xlane.f32.xlu0 %v3622
        %v3691 = vpop.xlane.xlu0 %3690
        %3692 = vmax.xlane.f32.xlu0 %v3625
        %v3693 = vpop.xlane.xlu0 %3692
        %3694 = vmax.xlane.f32.xlu0 %v3627
        %v3695 = vpop.xlane.xlu0 %3694
        %3696 = vmax.xlane.f32.xlu0 %v3630
        %v3697 = vpop.xlane.xlu0 %3696
        %3698 = vmax.xlane.f32.xlu0 %v3632
        %v3699 = vpop.xlane.xlu0 %3698
        %3700 = vmax.xlane.f32.xlu0 %v3635
        %v3701 = vpop.xlane.xlu0 %3700
        %3702 = vmax.xlane.f32.xlu0 %v3637
        %v3703 = vpop.xlane.xlu0 %3702
        %3704 = vmax.xlane.f32.xlu0 %v3640
        %v3705 = vpop.xlane.xlu0 %3704
        %3706 = vmax.xlane.f32.xlu0 %v3642
        %v3707 = vpop.xlane.xlu0 %3706
        %v3708 = vsub.f32 %v3565, %v3645
        %v3709 = vsub.f32 %v3567, %v3647
        %v3710 = vsub.f32 %v3570, %v3649
        %v3711 = vsub.f32 %v3572, %v3651
        %v3712 = vsub.f32 %v3575, %v3653
        %v3713 = vsub.f32 %v3577, %v3655
        %v3714 = vsub.f32 %v3580, %v3657
        %v3715 = vsub.f32 %v3582, %v3659
        %v3716 = vsub.f32 %v3585, %v3661
        %v3717 = vsub.f32 %v3587, %v3663
        %v3718 = vsub.f32 %v3590, %v3665
        %v3719 = vsub.f32 %v3592, %v3667
        %v3720 = vsub.f32 %v3595, %v3669
        %v3721 = vsub.f32 %v3597, %v3671
        %v3722 = vsub.f32 %v3600, %v3673
        %v3723 = vsub.f32 %v3602, %v3675
        %v3724 = vsub.f32 %v3605, %v3677
        %v3725 = vsub.f32 %v3607, %v3679
        %v3726 = vsub.f32 %v3610, %v3681
        %v3727 = vsub.f32 %v3612, %v3683
        %v3728 = vsub.f32 %v3615, %v3685
        %v3729 = vsub.f32 %v3617, %v3687
        %v3730 = vsub.f32 %v3620, %v3689
        %v3731 = vsub.f32 %v3622, %v3691
        %v3732 = vsub.f32 %v3625, %v3693
        %v3733 = vsub.f32 %v3627, %v3695
        %v3734 = vsub.f32 %v3630, %v3697
        %v3735 = vsub.f32 %v3632, %v3699
        %v3736 = vsub.f32 %v3635, %v3701
        %v3737 = vsub.f32 %v3637, %v3703
        %v3738 = vsub.f32 %v3640, %v3705
        %v3739 = vsub.f32 %v3642, %v3707
        %v3740 = vmul.f32 %v3708, 1.442695
        %v3741 = vpow.pop %v3740
        %v3742 = vmul.f32 %v3709, 1.442695
        %v3743 = vpow.pop %v3742
        %v3744 = vmul.f32 %v3710, 1.442695
        %v3745 = vpow.pop %v3744
        %v3746 = vmul.f32 %v3711, 1.442695
        %v3747 = vpow.pop %v3746
        %v3748 = vmul.f32 %v3712, 1.442695
        %v3749 = vpow.pop %v3748
        %v3750 = vmul.f32 %v3713, 1.442695
        %v3751 = vpow.pop %v3750
        %v3752 = vmul.f32 %v3714, 1.442695
        %v3753 = vpow.pop %v3752
        %v3754 = vmul.f32 %v3715, 1.442695
        %v3755 = vpow.pop %v3754
        %v3756 = vmul.f32 %v3716, 1.442695
        %v3757 = vpow.pop %v3756
        %v3758 = vmul.f32 %v3717, 1.442695
        %v3759 = vpow.pop %v3758
        %v3760 = vmul.f32 %v3718, 1.442695
        %v3761 = vpow.pop %v3760
        %v3762 = vmul.f32 %v3719, 1.442695
        %v3763 = vpow.pop %v3762
        %v3764 = vmul.f32 %v3720, 1.442695
        %v3765 = vpow.pop %v3764
        %v3766 = vmul.f32 %v3721, 1.442695
        %v3767 = vpow.pop %v3766
        %v3768 = vmul.f32 %v3722, 1.442695
        %v3769 = vpow.pop %v3768
        %v3770 = vmul.f32 %v3723, 1.442695
        %v3771 = vpow.pop %v3770
        %v3772 = vmul.f32 %v3724, 1.442695
        %v3773 = vpow.pop %v3772
        %v3774 = vmul.f32 %v3725, 1.442695
        %v3775 = vpow.pop %v3774
        %v3776 = vmul.f32 %v3726, 1.442695
        %v3777 = vpow.pop %v3776
        %v3778 = vmul.f32 %v3727, 1.442695
        %v3779 = vpow.pop %v3778
        %v3780 = vmul.f32 %v3728, 1.442695
        %v3781 = vpow.pop %v3780
        %v3782 = vmul.f32 %v3729, 1.442695
        %v3783 = vpow.pop %v3782
        %v3784 = vmul.f32 %v3730, 1.442695
        %v3785 = vpow.pop %v3784
        %v3786 = vmul.f32 %v3731, 1.442695
        %v3787 = vpow.pop %v3786
        %v3788 = vmul.f32 %v3732, 1.442695
        %v3789 = vpow.pop %v3788
        %v3790 = vmul.f32 %v3733, 1.442695
        %v3791 = vpow.pop %v3790
        %v3792 = vmul.f32 %v3734, 1.442695
        %v3793 = vpow.pop %v3792
        %v3794 = vmul.f32 %v3735, 1.442695
        %v3795 = vpow.pop %v3794
        %v3796 = vmul.f32 %v3736, 1.442695
        %v3797 = vpow.pop %v3796
        %v3798 = vmul.f32 %v3737, 1.442695
        %v3799 = vpow.pop %v3798
        %v3800 = vmul.f32 %v3738, 1.442695
        %v3801 = vpow.pop %v3800
        %v3802 = vmul.f32 %v3739, 1.442695
        %v3803 = vpow.pop %v3802
        %v3804 = vsel %vm727, %v3741, 0.0
        %v3805 = vsel %vm728, %v3743, 0.0
        %v3806 = vsel %vm729, %v3745, 0.0
        %v3807 = vsel %vm730, %v3747, 0.0
        %v3808 = vsel %vm731, %v3749, 0.0
        %v3809 = vsel %vm732, %v3751, 0.0
        %v3810 = vsel %vm733, %v3753, 0.0
        %v3811 = vsel %vm734, %v3755, 0.0
        %v3812 = vsel %vm735, %v3757, 0.0
        %v3813 = vsel %vm736, %v3759, 0.0
        %v3814 = vsel %vm737, %v3761, 0.0
        %v3815 = vsel %vm738, %v3763, 0.0
        %v3816 = vsel %vm739, %v3765, 0.0
        %v3817 = vsel %vm740, %v3767, 0.0
        %v3818 = vsel %vm741, %v3769, 0.0
        %v3819 = vsel %vm742, %v3771, 0.0
        %v3820 = vsel %vm743, %v3773, 0.0
        %v3821 = vsel %vm744, %v3775, 0.0
        %v3822 = vsel %vm745, %v3777, 0.0
        %v3823 = vsel %vm746, %v3779, 0.0
        %v3824 = vsel %vm747, %v3781, 0.0
        %v3825 = vsel %vm748, %v3783, 0.0
        %v3826 = vsel %vm749, %v3785, 0.0
        %v3827 = vsel %vm750, %v3787, 0.0
        %v3828 = vsel %vm751, %v3789, 0.0
        %v3829 = vsel %vm752, %v3791, 0.0
        %v3830 = vsel %vm753, %v3793, 0.0
        %v3831 = vsel %vm754, %v3795, 0.0
        %v3832 = vsel %vm755, %v3797, 0.0
        %v3833 = vsel %vm756, %v3799, 0.0
        %v3834 = vsel %vm757, %v3801, 0.0
        %v3835 = vsel %vm758, %v3803, 0.0
        %3836 = vadd.xlane.f32.xlu0 %v3804
        %v3837 = vpop.xlane.xlu0 %3836
        %3838 = vadd.xlane.f32.xlu0 %v3805
        %v3839 = vpop.xlane.xlu0 %3838
        %3840 = vadd.xlane.f32.xlu0 %v3806
        %v3841 = vpop.xlane.xlu0 %3840
        %3842 = vadd.xlane.f32.xlu0 %v3807
        %v3843 = vpop.xlane.xlu0 %3842
        %3844 = vadd.xlane.f32.xlu0 %v3808
        %v3845 = vpop.xlane.xlu0 %3844
        %3846 = vadd.xlane.f32.xlu0 %v3809
        %v3847 = vpop.xlane.xlu0 %3846
        %3848 = vadd.xlane.f32.xlu0 %v3810
        %v3849 = vpop.xlane.xlu0 %3848
        %3850 = vadd.xlane.f32.xlu0 %v3811
        %v3851 = vpop.xlane.xlu0 %3850
        %3852 = vadd.xlane.f32.xlu0 %v3812
        %v3853 = vpop.xlane.xlu0 %3852
        %3854 = vadd.xlane.f32.xlu0 %v3813
        %v3855 = vpop.xlane.xlu0 %3854
        %3856 = vadd.xlane.f32.xlu0 %v3814
        %v3857 = vpop.xlane.xlu0 %3856
        %3858 = vadd.xlane.f32.xlu0 %v3815
        %v3859 = vpop.xlane.xlu0 %3858
        %3860 = vadd.xlane.f32.xlu0 %v3816
        %v3861 = vpop.xlane.xlu0 %3860
        %3862 = vadd.xlane.f32.xlu0 %v3817
        %v3863 = vpop.xlane.xlu0 %3862
        %3864 = vadd.xlane.f32.xlu0 %v3818
        %v3865 = vpop.xlane.xlu0 %3864
        %3866 = vadd.xlane.f32.xlu0 %v3819
        %v3867 = vpop.xlane.xlu0 %3866
        %3868 = vadd.xlane.f32.xlu0 %v3820
        %v3869 = vpop.xlane.xlu0 %3868
        %3870 = vadd.xlane.f32.xlu0 %v3821
        %v3871 = vpop.xlane.xlu0 %3870
        %3872 = vadd.xlane.f32.xlu0 %v3822
        %v3873 = vpop.xlane.xlu0 %3872
        %3874 = vadd.xlane.f32.xlu0 %v3823
        %v3875 = vpop.xlane.xlu0 %3874
        %3876 = vadd.xlane.f32.xlu0 %v3824
        %v3877 = vpop.xlane.xlu0 %3876
        %3878 = vadd.xlane.f32.xlu0 %v3825
        %v3879 = vpop.xlane.xlu0 %3878
        %3880 = vadd.xlane.f32.xlu0 %v3826
        %v3881 = vpop.xlane.xlu0 %3880
        %3882 = vadd.xlane.f32.xlu0 %v3827
        %v3883 = vpop.xlane.xlu0 %3882
        %3884 = vadd.xlane.f32.xlu0 %v3828
        %v3885 = vpop.xlane.xlu0 %3884
        %3886 = vadd.xlane.f32.xlu0 %v3829
        %v3887 = vpop.xlane.xlu0 %3886
        %3888 = vadd.xlane.f32.xlu0 %v3830
        %v3889 = vpop.xlane.xlu0 %3888
        %3890 = vadd.xlane.f32.xlu0 %v3831
        %v3891 = vpop.xlane.xlu0 %3890
        %3892 = vadd.xlane.f32.xlu0 %v3832
        %v3893 = vpop.xlane.xlu0 %3892
        %3894 = vadd.xlane.f32.xlu0 %v3833
        %v3895 = vpop.xlane.xlu0 %3894
        %3896 = vadd.xlane.f32.xlu0 %v3834
        %v3897 = vpop.xlane.xlu0 %3896
        %3898 = vadd.xlane.f32.xlu0 %v3835
        %v3899 = vpop.xlane.xlu0 %3898
        %v3900 = vpack.c.bf16 %v3805, %v3804
        %v3901 = vpack.c.bf16 %v3807, %v3806
        %v3902 = vpack.c.bf16 %v3809, %v3808
        %v3903 = vpack.c.bf16 %v3811, %v3810
        %v3904 = vpack.c.bf16 %v3813, %v3812
        %v3905 = vpack.c.bf16 %v3815, %v3814
        %v3906 = vpack.c.bf16 %v3817, %v3816
        %v3907 = vpack.c.bf16 %v3819, %v3818
        %v3908 = vpack.c.bf16 %v3821, %v3820
        %v3909 = vpack.c.bf16 %v3823, %v3822
        %v3910 = vpack.c.bf16 %v3825, %v3824
        %v3911 = vpack.c.bf16 %v3827, %v3826
        %v3912 = vpack.c.bf16 %v3829, %v3828
        %v3913 = vpack.c.bf16 %v3831, %v3830
        %v3914 = vpack.c.bf16 %v3833, %v3832
        %v3915 = vpack.c.bf16 %v3835, %v3834
        %3924 = vrot.lane.b32.xlu0 %v1816, 64
        %v3925 = vpop.permute.xlu0 %3924
        %3926 = vrot.lane.b32.xlu0 %v1817, 64
        %v3927 = vpop.permute.xlu0 %3926
        %3928 = vrot.lane.b32.xlu0 %v1818, 64
        %v3929 = vpop.permute.xlu0 %3928
        %3930 = vrot.lane.b32.xlu0 %v1819, 64
        %v3931 = vpop.permute.xlu0 %3930
        %3932 = vrot.lane.b32.xlu0 %v1820, 64
        %v3933 = vpop.permute.xlu0 %3932
        %3934 = vrot.lane.b32.xlu0 %v1821, 64
        %v3935 = vpop.permute.xlu0 %3934
        %3936 = vrot.lane.b32.xlu0 %v1822, 64
        %v3937 = vpop.permute.xlu0 %3936
        %3938 = vrot.lane.b32.xlu0 %v1823, 64
        %v3939 = vpop.permute.xlu0 %3938
        %3948 = vmatpush.bf16.msra.mxu0 %v3939
        %3949 = vmatpush.bf16.msra.mxu0 %v3937
        %3950 = vmatpush.bf16.msra.mxu0 %v3935
        %3951 = vmatpush.bf16.msra.mxu0 %v3933
        %3952 = vmatpush.bf16.msra.mxu0 %v3931
        %3953 = vmatpush.bf16.msra.mxu0 %v3929
        %3954 = vmatpush.bf16.msra.mxu0 %v3927
        %3955 = vmatpush.bf16.msra.mxu0 %v3925
        %3956 = vmatmul.bf16.gmra.mxu0 %v3900
        %v3957 = vpop.f32.mrf.mxu0
        %v3958 = vadd.f32 0.0, %v3957
        %v3959 = vpop.f32.mrf.mxu0
        %v3960 = vadd.f32 0.0, %v3959
        %3961 = vmatmul.bf16.gmra.mxu0 %v3901
        %v3962 = vpop.f32.mrf.mxu0
        %v3963 = vadd.f32 0.0, %v3962
        %v3964 = vpop.f32.mrf.mxu0
        %v3965 = vadd.f32 0.0, %v3964
        %3966 = vmatmul.bf16.gmra.mxu0 %v3902
        %v3967 = vpop.f32.mrf.mxu0
        %v3968 = vadd.f32 0.0, %v3967
        %v3969 = vpop.f32.mrf.mxu0
        %v3970 = vadd.f32 0.0, %v3969
        %3971 = vmatmul.bf16.gmra.mxu0 %v3903
        %v3972 = vpop.f32.mrf.mxu0
        %v3973 = vadd.f32 0.0, %v3972
        %v3974 = vpop.f32.mrf.mxu0
        %v3975 = vadd.f32 0.0, %v3974
        %3976 = vmatmul.bf16.gmra.mxu0 %v3904
        %v3977 = vpop.f32.mrf.mxu0
        %v3978 = vadd.f32 0.0, %v3977
        %v3979 = vpop.f32.mrf.mxu0
        %v3980 = vadd.f32 0.0, %v3979
        %3981 = vmatmul.bf16.gmra.mxu0 %v3905
        %v3982 = vpop.f32.mrf.mxu0
        %v3983 = vadd.f32 0.0, %v3982
        %v3984 = vpop.f32.mrf.mxu0
        %v3985 = vadd.f32 0.0, %v3984
        %3986 = vmatmul.bf16.gmra.mxu0 %v3906
        %v3987 = vpop.f32.mrf.mxu0
        %v3988 = vadd.f32 0.0, %v3987
        %v3989 = vpop.f32.mrf.mxu0
        %v3990 = vadd.f32 0.0, %v3989
        %3991 = vmatmul.bf16.gmra.mxu0 %v3907
        %v3992 = vpop.f32.mrf.mxu0
        %v3993 = vadd.f32 0.0, %v3992
        %v3994 = vpop.f32.mrf.mxu0
        %v3995 = vadd.f32 0.0, %v3994
        %3996 = vmatmul.bf16.gmra.mxu0 %v3908
        %v3997 = vpop.f32.mrf.mxu0
        %v3998 = vadd.f32 0.0, %v3997
        %v3999 = vpop.f32.mrf.mxu0
        %v4000 = vadd.f32 0.0, %v3999
        %4001 = vmatmul.bf16.gmra.mxu0 %v3909
        %v4002 = vpop.f32.mrf.mxu0
        %v4003 = vadd.f32 0.0, %v4002
        %v4004 = vpop.f32.mrf.mxu0
        %v4005 = vadd.f32 0.0, %v4004
        %4006 = vmatmul.bf16.gmra.mxu0 %v3910
        %v4007 = vpop.f32.mrf.mxu0
        %v4008 = vadd.f32 0.0, %v4007
        %v4009 = vpop.f32.mrf.mxu0
        %v4010 = vadd.f32 0.0, %v4009
        %4011 = vmatmul.bf16.gmra.mxu0 %v3911
        %v4012 = vpop.f32.mrf.mxu0
        %v4013 = vadd.f32 0.0, %v4012
        %v4014 = vpop.f32.mrf.mxu0
        %v4015 = vadd.f32 0.0, %v4014
        %4016 = vmatmul.bf16.gmra.mxu0 %v3912
        %v4017 = vpop.f32.mrf.mxu0
        %v4018 = vadd.f32 0.0, %v4017
        %v4019 = vpop.f32.mrf.mxu0
        %v4020 = vadd.f32 0.0, %v4019
        %4021 = vmatmul.bf16.gmra.mxu0 %v3913
        %v4022 = vpop.f32.mrf.mxu0
        %v4023 = vadd.f32 0.0, %v4022
        %v4024 = vpop.f32.mrf.mxu0
        %v4025 = vadd.f32 0.0, %v4024
        %4026 = vmatmul.bf16.gmra.mxu0 %v3914
        %v4027 = vpop.f32.mrf.mxu0
        %v4028 = vadd.f32 0.0, %v4027
        %v4029 = vpop.f32.mrf.mxu0
        %v4030 = vadd.f32 0.0, %v4029
        %4031 = vmatmul.bf16.gmra.mxu0 %v3915
        %v4032 = vpop.f32.mrf.mxu0
        %v4033 = vadd.f32 0.0, %v4032
        %v4034 = vpop.f32.mrf.mxu0
        %v4035 = vadd.f32 0.0, %v4034
        %4036 = vdwg.mxu0
        %v4037 = vrcp.pop %v3837
        %v4038 = vrcp.pop %v3839
        %v4039 = vrcp.pop %v3841
        %v4040 = vrcp.pop %v3843
        %v4041 = vrcp.pop %v3845
        %v4042 = vrcp.pop %v3847
        %v4043 = vrcp.pop %v3849
        %v4044 = vrcp.pop %v3851
        %v4045 = vrcp.pop %v3853
        %v4046 = vrcp.pop %v3855
        %v4047 = vrcp.pop %v3857
        %v4048 = vrcp.pop %v3859
        %v4049 = vrcp.pop %v3861
        %v4050 = vrcp.pop %v3863
        %v4051 = vrcp.pop %v3865
        %v4052 = vrcp.pop %v3867
        %v4053 = vrcp.pop %v3869
        %v4054 = vrcp.pop %v3871
        %v4055 = vrcp.pop %v3873
        %v4056 = vrcp.pop %v3875
        %v4057 = vrcp.pop %v3877
        %v4058 = vrcp.pop %v3879
        %v4059 = vrcp.pop %v3881
        %v4060 = vrcp.pop %v3883
        %v4061 = vrcp.pop %v3885
        %v4062 = vrcp.pop %v3887
        %v4063 = vrcp.pop %v3889
        %v4064 = vrcp.pop %v3891
        %v4065 = vrcp.pop %v3893
        %v4066 = vrcp.pop %v3895
        %v4067 = vrcp.pop %v3897
        %v4068 = vrcp.pop %v3899
        %v4069 = vmul.f32 %v3958, %v4037
        %v4070 = vmul.f32 %v3960, %v4038
        %v4071 = vmul.f32 %v3963, %v4039
        %v4072 = vmul.f32 %v3965, %v4040
        %v4073 = vmul.f32 %v3968, %v4041
        %v4074 = vmul.f32 %v3970, %v4042
        %v4075 = vmul.f32 %v3973, %v4043
        %v4076 = vmul.f32 %v3975, %v4044
        %v4077 = vmul.f32 %v3978, %v4045
        %v4078 = vmul.f32 %v3980, %v4046
        %v4079 = vmul.f32 %v3983, %v4047
        %v4080 = vmul.f32 %v3985, %v4048
        %v4081 = vmul.f32 %v3988, %v4049
        %v4082 = vmul.f32 %v3990, %v4050
        %v4083 = vmul.f32 %v3993, %v4051
        %v4084 = vmul.f32 %v3995, %v4052
        %v4085 = vmul.f32 %v3998, %v4053
        %v4086 = vmul.f32 %v4000, %v4054
        %v4087 = vmul.f32 %v4003, %v4055
        %v4088 = vmul.f32 %v4005, %v4056
        %v4089 = vmul.f32 %v4008, %v4057
        %v4090 = vmul.f32 %v4010, %v4058
        %v4091 = vmul.f32 %v4013, %v4059
        %v4092 = vmul.f32 %v4015, %v4060
        %v4093 = vmul.f32 %v4018, %v4061
        %v4094 = vmul.f32 %v4020, %v4062
        %v4095 = vmul.f32 %v4023, %v4063
        %v4096 = vmul.f32 %v4025, %v4064
        %v4097 = vmul.f32 %v4028, %v4065
        %v4098 = vmul.f32 %v4030, %v4066
        %v4099 = vmul.f32 %v4033, %v4067
        %v4100 = vmul.f32 %v4035, %v4068
        %4117 = vrot.lane.b32.xlu0 %v4085, 64
        %v4118 = vpop.permute.xlu0 %4117
        %4119 = vrot.lane.b32.xlu0 %v4086, 64
        %v4120 = vpop.permute.xlu0 %4119
        %4121 = vrot.lane.b32.xlu0 %v4087, 64
        %v4122 = vpop.permute.xlu0 %4121
        %4123 = vrot.lane.b32.xlu0 %v4088, 64
        %v4124 = vpop.permute.xlu0 %4123
        %4125 = vrot.lane.b32.xlu0 %v4089, 64
        %v4126 = vpop.permute.xlu0 %4125
        %4127 = vrot.lane.b32.xlu0 %v4090, 64
        %v4128 = vpop.permute.xlu0 %4127
        %4129 = vrot.lane.b32.xlu0 %v4091, 64
        %v4130 = vpop.permute.xlu0 %4129
        %4131 = vrot.lane.b32.xlu0 %v4092, 64
        %v4132 = vpop.permute.xlu0 %4131
        %4133 = vrot.lane.b32.xlu0 %v4093, 64
        %v4134 = vpop.permute.xlu0 %4133
        %4135 = vrot.lane.b32.xlu0 %v4094, 64
        %v4136 = vpop.permute.xlu0 %4135
        %4137 = vrot.lane.b32.xlu0 %v4095, 64
        %v4138 = vpop.permute.xlu0 %4137
        %4139 = vrot.lane.b32.xlu0 %v4096, 64
        %v4140 = vpop.permute.xlu0 %4139
        %4141 = vrot.lane.b32.xlu0 %v4097, 64
        %v4142 = vpop.permute.xlu0 %4141
        %4143 = vrot.lane.b32.xlu0 %v4098, 64
        %v4144 = vpop.permute.xlu0 %4143
        %4145 = vrot.lane.b32.xlu0 %v4099, 64
        %v4146 = vpop.permute.xlu0 %4145
        %4147 = vrot.lane.b32.xlu0 %v4100, 64
        %v4148 = vpop.permute.xlu0 %4147
        %v4165 = vsel %vm2240, %v4069, %v4118
        %v4166 = vsel %vm2240, %v4070, %v4120
        %v4167 = vsel %vm2240, %v4071, %v4122
        %v4168 = vsel %vm2240, %v4072, %v4124
        %v4169 = vsel %vm2240, %v4073, %v4126
        %v4170 = vsel %vm2240, %v4074, %v4128
        %v4171 = vsel %vm2240, %v4075, %v4130
        %v4172 = vsel %vm2240, %v4076, %v4132
        %v4173 = vsel %vm2240, %v4077, %v4134
        %v4174 = vsel %vm2240, %v4078, %v4136
        %v4175 = vsel %vm2240, %v4079, %v4138
        %v4176 = vsel %vm2240, %v4080, %v4140
        %v4177 = vsel %vm2240, %v4081, %v4142
        %v4178 = vsel %vm2240, %v4082, %v4144
        %v4179 = vsel %vm2240, %v4083, %v4146
        %v4180 = vsel %vm2240, %v4084, %v4148
        %v4181 = vpack.c.bf16 %v2892, %v2891
        %v4182 = vpack.c.bf16 %v4166, %v4165
        %v4183 = vpack.c.bf16 %v2894, %v2893
        %v4184 = vpack.c.bf16 %v4168, %v4167
        %v4185 = vpack.c.bf16 %v2896, %v2895
        %v4186 = vpack.c.bf16 %v4170, %v4169
        %v4187 = vpack.c.bf16 %v2898, %v2897
        %v4188 = vpack.c.bf16 %v4172, %v4171
        %v4189 = vpack.c.bf16 %v2900, %v2899
        %v4190 = vpack.c.bf16 %v4174, %v4173
        %v4191 = vpack.c.bf16 %v2902, %v2901
        %v4192 = vpack.c.bf16 %v4176, %v4175
        %v4193 = vpack.c.bf16 %v2904, %v2903
        %v4194 = vpack.c.bf16 %v4178, %v4177
        %v4195 = vpack.c.bf16 %v2906, %v2905
        %v4196 = vpack.c.bf16 %v4180, %v4179
        %v4229 = vunpack.c.l.b16 %v260
        %v4230 = vunpack.c.h.b16 %v260
        %v4231 = vunpack.c.l.b16 %v261
        %v4232 = vunpack.c.h.b16 %v261
        %v4233 = vunpack.c.l.b16 %v262
        %v4234 = vunpack.c.h.b16 %v262
        %v4235 = vunpack.c.l.b16 %v263
        %v4236 = vunpack.c.h.b16 %v263
        %v4237 = vunpack.c.l.b16 %v264
        %v4238 = vunpack.c.h.b16 %v264
        %v4239 = vunpack.c.l.b16 %v265
        %v4240 = vunpack.c.h.b16 %v265
        %v4241 = vunpack.c.l.b16 %v266
        %v4242 = vunpack.c.h.b16 %v266
        %v4243 = vunpack.c.l.b16 %v267
        %v4244 = vunpack.c.h.b16 %v267
        %v4245 = vunpack.c.l.b16 %v268
        %v4246 = vunpack.c.h.b16 %v268
        %v4247 = vunpack.c.l.b16 %v269
        %v4248 = vunpack.c.h.b16 %v269
        %v4249 = vunpack.c.l.b16 %v270
        %v4250 = vunpack.c.h.b16 %v270
        %v4251 = vunpack.c.l.b16 %v271
        %v4252 = vunpack.c.h.b16 %v271
        %v4253 = vunpack.c.l.b16 %v272
        %v4254 = vunpack.c.h.b16 %v272
        %v4255 = vunpack.c.l.b16 %v273
        %v4256 = vunpack.c.h.b16 %v273
        %v4257 = vunpack.c.l.b16 %v274
        %v4258 = vunpack.c.h.b16 %v274
        %v4259 = vunpack.c.l.b16 %v275
        %v4260 = vunpack.c.h.b16 %v275
        %v4261 = vunpack.c.l.b16 %v276
        %v4262 = vunpack.c.h.b16 %v276
        %v4263 = vunpack.c.l.b16 %v277
        %v4264 = vunpack.c.h.b16 %v277
        %v4265 = vunpack.c.l.b16 %v278
        %v4266 = vunpack.c.h.b16 %v278
        %v4267 = vunpack.c.l.b16 %v279
        %v4268 = vunpack.c.h.b16 %v279
        %v4269 = vunpack.c.l.b16 %v280
        %v4270 = vunpack.c.h.b16 %v280
        %v4271 = vunpack.c.l.b16 %v281
        %v4272 = vunpack.c.h.b16 %v281
        %v4273 = vunpack.c.l.b16 %v282
        %v4274 = vunpack.c.h.b16 %v282
        %v4275 = vunpack.c.l.b16 %v283
        %v4276 = vunpack.c.h.b16 %v283
        %v4277 = vunpack.c.l.b16 %v284
        %v4278 = vunpack.c.h.b16 %v284
        %v4279 = vunpack.c.l.b16 %v285
        %v4280 = vunpack.c.h.b16 %v285
        %v4281 = vunpack.c.l.b16 %v286
        %v4282 = vunpack.c.h.b16 %v286
        %v4283 = vunpack.c.l.b16 %v287
        %v4284 = vunpack.c.h.b16 %v287
        %v4285 = vunpack.c.l.b16 %v288
        %v4286 = vunpack.c.h.b16 %v288
        %v4287 = vunpack.c.l.b16 %v289
        %v4288 = vunpack.c.h.b16 %v289
        %v4289 = vunpack.c.l.b16 %v290
        %v4290 = vunpack.c.h.b16 %v290
        %v4291 = vunpack.c.l.b16 %v291
        %v4292 = vunpack.c.h.b16 %v291
        %v4293 = vpack.c.b16 %v4231, %v4229
        %v4294 = vpack.c.b16 %v4232, %v4230
        %v4295 = vpack.c.b16 %v4235, %v4233
        %v4296 = vpack.c.b16 %v4236, %v4234
        %v4297 = vpack.c.b16 %v4239, %v4237
        %v4298 = vpack.c.b16 %v4240, %v4238
        %v4299 = vpack.c.b16 %v4243, %v4241
        %v4300 = vpack.c.b16 %v4244, %v4242
        %v4301 = vpack.c.b16 %v4247, %v4245
        %v4302 = vpack.c.b16 %v4248, %v4246
        %v4303 = vpack.c.b16 %v4251, %v4249
        %v4304 = vpack.c.b16 %v4252, %v4250
        %v4305 = vpack.c.b16 %v4255, %v4253
        %v4306 = vpack.c.b16 %v4256, %v4254
        %v4307 = vpack.c.b16 %v4259, %v4257
        %v4308 = vpack.c.b16 %v4260, %v4258
        %v4309 = vpack.c.b16 %v4263, %v4261
        %v4310 = vpack.c.b16 %v4264, %v4262
        %v4311 = vpack.c.b16 %v4267, %v4265
        %v4312 = vpack.c.b16 %v4268, %v4266
        %v4313 = vpack.c.b16 %v4271, %v4269
        %v4314 = vpack.c.b16 %v4272, %v4270
        %v4315 = vpack.c.b16 %v4275, %v4273
        %v4316 = vpack.c.b16 %v4276, %v4274
        %v4317 = vpack.c.b16 %v4279, %v4277
        %v4318 = vpack.c.b16 %v4280, %v4278
        %v4319 = vpack.c.b16 %v4283, %v4281
        %v4320 = vpack.c.b16 %v4284, %v4282
        %v4321 = vpack.c.b16 %v4287, %v4285
        %v4322 = vpack.c.b16 %v4288, %v4286
        %v4323 = vpack.c.b16 %v4291, %v4289
        %v4324 = vpack.c.b16 %v4292, %v4290
        %4357 = vmatpush.bf16.msra.mxu0 %v4307
        %4358 = vmatpush.bf16.msra.mxu0 %v4305
        %4359 = vmatpush.bf16.msra.mxu0 %v4303
        %4360 = vmatpush.bf16.msra.mxu0 %v4301
        %4361 = vmatpush.bf16.msra.mxu0 %v4299
        %4362 = vmatpush.bf16.msra.mxu0 %v4297
        %4363 = vmatpush.bf16.msra.mxu0 %v4295
        %4364 = vmatpush.bf16.msra.mxu0 %v4293
        %4365 = vmatmul.bf16.gmra.mxu0 %v4181
        %v4366 = vpop.f32.mrf.mxu0
        %v4367 = vadd.f32 0.0, %v4366
        %v4368 = vpop.f32.mrf.mxu0
        %v4369 = vadd.f32 0.0, %v4368
        %4370 = vmatmul.bf16.gmra.mxu0 %v4183
        %v4371 = vpop.f32.mrf.mxu0
        %v4372 = vadd.f32 0.0, %v4371
        %v4373 = vpop.f32.mrf.mxu0
        %v4374 = vadd.f32 0.0, %v4373
        %4375 = vmatmul.bf16.gmra.mxu0 %v4185
        %v4376 = vpop.f32.mrf.mxu0
        %v4377 = vadd.f32 0.0, %v4376
        %v4378 = vpop.f32.mrf.mxu0
        %v4379 = vadd.f32 0.0, %v4378
        %4380 = vmatmul.bf16.gmra.mxu0 %v4187
        %v4381 = vpop.f32.mrf.mxu0
        %v4382 = vadd.f32 0.0, %v4381
        %v4383 = vpop.f32.mrf.mxu0
        %v4384 = vadd.f32 0.0, %v4383
        %4385 = vmatmul.bf16.gmra.mxu0 %v4189
        %v4386 = vpop.f32.mrf.mxu0
        %v4387 = vadd.f32 0.0, %v4386
        %v4388 = vpop.f32.mrf.mxu0
        %v4389 = vadd.f32 0.0, %v4388
        %4390 = vmatmul.bf16.gmra.mxu0 %v4191
        %v4391 = vpop.f32.mrf.mxu0
        %v4392 = vadd.f32 0.0, %v4391
        %v4393 = vpop.f32.mrf.mxu0
        %v4394 = vadd.f32 0.0, %v4393
        %4395 = vmatmul.bf16.gmra.mxu0 %v4193
        %v4396 = vpop.f32.mrf.mxu0
        %v4397 = vadd.f32 0.0, %v4396
        %v4398 = vpop.f32.mrf.mxu0
        %v4399 = vadd.f32 0.0, %v4398
        %4400 = vmatmul.bf16.gmra.mxu0 %v4195
        %v4401 = vpop.f32.mrf.mxu0
        %v4402 = vadd.f32 0.0, %v4401
        %v4403 = vpop.f32.mrf.mxu0
        %v4404 = vadd.f32 0.0, %v4403
        %4405 = vdwg.mxu0
        %4406 = vmatpush.bf16.msra.mxu0 %v4323
        %4407 = vmatpush.bf16.msra.mxu0 %v4321
        %4408 = vmatpush.bf16.msra.mxu0 %v4319
        %4409 = vmatpush.bf16.msra.mxu0 %v4317
        %4410 = vmatpush.bf16.msra.mxu0 %v4315
        %4411 = vmatpush.bf16.msra.mxu0 %v4313
        %4412 = vmatpush.bf16.msra.mxu0 %v4311
        %4413 = vmatpush.bf16.msra.mxu0 %v4309
        %4414 = vmatmul.bf16.gmra.mxu0 %v4182
        %v4415 = vpop.f32.mrf.mxu0
        %v4416 = vadd.f32 %v4367, %v4415
        %v4417 = vpop.f32.mrf.mxu0
        %v4418 = vadd.f32 %v4369, %v4417
        %4419 = vmatmul.bf16.gmra.mxu0 %v4184
        %v4420 = vpop.f32.mrf.mxu0
        %v4421 = vadd.f32 %v4372, %v4420
        %v4422 = vpop.f32.mrf.mxu0
        %v4423 = vadd.f32 %v4374, %v4422
        %4424 = vmatmul.bf16.gmra.mxu0 %v4186
        %v4425 = vpop.f32.mrf.mxu0
        %v4426 = vadd.f32 %v4377, %v4425
        %v4427 = vpop.f32.mrf.mxu0
        %v4428 = vadd.f32 %v4379, %v4427
        %4429 = vmatmul.bf16.gmra.mxu0 %v4188
        %v4430 = vpop.f32.mrf.mxu0
        %v4431 = vadd.f32 %v4382, %v4430
        %v4432 = vpop.f32.mrf.mxu0
        %v4433 = vadd.f32 %v4384, %v4432
        %4434 = vmatmul.bf16.gmra.mxu0 %v4190
        %v4435 = vpop.f32.mrf.mxu0
        %v4436 = vadd.f32 %v4387, %v4435
        %v4437 = vpop.f32.mrf.mxu0
        %v4438 = vadd.f32 %v4389, %v4437
        %4439 = vmatmul.bf16.gmra.mxu0 %v4192
        %v4440 = vpop.f32.mrf.mxu0
        %v4441 = vadd.f32 %v4392, %v4440
        %v4442 = vpop.f32.mrf.mxu0
        %v4443 = vadd.f32 %v4394, %v4442
        %4444 = vmatmul.bf16.gmra.mxu0 %v4194
        %v4445 = vpop.f32.mrf.mxu0
        %v4446 = vadd.f32 %v4397, %v4445
        %v4447 = vpop.f32.mrf.mxu0
        %v4448 = vadd.f32 %v4399, %v4447
        %4449 = vmatmul.bf16.gmra.mxu0 %v4196
        %v4450 = vpop.f32.mrf.mxu0
        %v4451 = vadd.f32 %v4402, %v4450
        %v4452 = vpop.f32.mrf.mxu0
        %v4453 = vadd.f32 %v4404, %v4452
        %4454 = vdwg.mxu0
        %4455 = vmatpush.bf16.msra.mxu0 %v4308
        %4456 = vmatpush.bf16.msra.mxu0 %v4306
        %4457 = vmatpush.bf16.msra.mxu0 %v4304
        %4458 = vmatpush.bf16.msra.mxu0 %v4302
        %4459 = vmatpush.bf16.msra.mxu0 %v4300
        %4460 = vmatpush.bf16.msra.mxu0 %v4298
        %4461 = vmatpush.bf16.msra.mxu0 %v4296
        %4462 = vmatpush.bf16.msra.mxu0 %v4294
        %4463 = vmatmul.bf16.gmra.mxu0 %v4181
        %v4464 = vpop.f32.mrf.mxu0
        %v4465 = vadd.f32 0.0, %v4464
        %v4466 = vpop.f32.mrf.mxu0
        %v4467 = vadd.f32 0.0, %v4466
        %4468 = vmatmul.bf16.gmra.mxu0 %v4183
        %v4469 = vpop.f32.mrf.mxu0
        %v4470 = vadd.f32 0.0, %v4469
        %v4471 = vpop.f32.mrf.mxu0
        %v4472 = vadd.f32 0.0, %v4471
        %4473 = vmatmul.bf16.gmra.mxu0 %v4185
        %v4474 = vpop.f32.mrf.mxu0
        %v4475 = vadd.f32 0.0, %v4474
        %v4476 = vpop.f32.mrf.mxu0
        %v4477 = vadd.f32 0.0, %v4476
        %4478 = vmatmul.bf16.gmra.mxu0 %v4187
        %v4479 = vpop.f32.mrf.mxu0
        %v4480 = vadd.f32 0.0, %v4479
        %v4481 = vpop.f32.mrf.mxu0
        %v4482 = vadd.f32 0.0, %v4481
        %4483 = vmatmul.bf16.gmra.mxu0 %v4189
        %v4484 = vpop.f32.mrf.mxu0
        %v4485 = vadd.f32 0.0, %v4484
        %v4486 = vpop.f32.mrf.mxu0
        %v4487 = vadd.f32 0.0, %v4486
        %4488 = vmatmul.bf16.gmra.mxu0 %v4191
        %v4489 = vpop.f32.mrf.mxu0
        %v4490 = vadd.f32 0.0, %v4489
        %v4491 = vpop.f32.mrf.mxu0
        %v4492 = vadd.f32 0.0, %v4491
        %4493 = vmatmul.bf16.gmra.mxu0 %v4193
        %v4494 = vpop.f32.mrf.mxu0
        %v4495 = vadd.f32 0.0, %v4494
        %v4496 = vpop.f32.mrf.mxu0
        %v4497 = vadd.f32 0.0, %v4496
        %4498 = vmatmul.bf16.gmra.mxu0 %v4195
        %v4499 = vpop.f32.mrf.mxu0
        %v4500 = vadd.f32 0.0, %v4499
        %v4501 = vpop.f32.mrf.mxu0
        %v4502 = vadd.f32 0.0, %v4501
        %4503 = vdwg.mxu0
        %4504 = vmatpush.bf16.msra.mxu0 %v4324
        %4505 = vmatpush.bf16.msra.mxu0 %v4322
        %4506 = vmatpush.bf16.msra.mxu0 %v4320
        %4507 = vmatpush.bf16.msra.mxu0 %v4318
        %4508 = vmatpush.bf16.msra.mxu0 %v4316
        %4509 = vmatpush.bf16.msra.mxu0 %v4314
        %4510 = vmatpush.bf16.msra.mxu0 %v4312
        %4511 = vmatpush.bf16.msra.mxu0 %v4310
        %4512 = vmatmul.bf16.gmra.mxu0 %v4182
        %v4513 = vpop.f32.mrf.mxu0
        %v4514 = vadd.f32 %v4465, %v4513
        %v4515 = vpop.f32.mrf.mxu0
        %v4516 = vadd.f32 %v4467, %v4515
        %4517 = vmatmul.bf16.gmra.mxu0 %v4184
        %v4518 = vpop.f32.mrf.mxu0
        %v4519 = vadd.f32 %v4470, %v4518
        %v4520 = vpop.f32.mrf.mxu0
        %v4521 = vadd.f32 %v4472, %v4520
        %4522 = vmatmul.bf16.gmra.mxu0 %v4186
        %v4523 = vpop.f32.mrf.mxu0
        %v4524 = vadd.f32 %v4475, %v4523
        %v4525 = vpop.f32.mrf.mxu0
        %v4526 = vadd.f32 %v4477, %v4525
        %4527 = vmatmul.bf16.gmra.mxu0 %v4188
        %v4528 = vpop.f32.mrf.mxu0
        %v4529 = vadd.f32 %v4480, %v4528
        %v4530 = vpop.f32.mrf.mxu0
        %v4531 = vadd.f32 %v4482, %v4530
        %4532 = vmatmul.bf16.gmra.mxu0 %v4190
        %v4533 = vpop.f32.mrf.mxu0
        %v4534 = vadd.f32 %v4485, %v4533
        %v4535 = vpop.f32.mrf.mxu0
        %v4536 = vadd.f32 %v4487, %v4535
        %4537 = vmatmul.bf16.gmra.mxu0 %v4192
        %v4538 = vpop.f32.mrf.mxu0
        %v4539 = vadd.f32 %v4490, %v4538
        %v4540 = vpop.f32.mrf.mxu0
        %v4541 = vadd.f32 %v4492, %v4540
        %4542 = vmatmul.bf16.gmra.mxu0 %v4194
        %v4543 = vpop.f32.mrf.mxu0
        %v4544 = vadd.f32 %v4495, %v4543
        %v4545 = vpop.f32.mrf.mxu0
        %v4546 = vadd.f32 %v4497, %v4545
        %4547 = vmatmul.bf16.gmra.mxu0 %v4196
        %v4548 = vpop.f32.mrf.mxu0
        %v4549 = vadd.f32 %v4500, %v4548
        %v4550 = vpop.f32.mrf.mxu0
        %v4551 = vadd.f32 %v4502, %v4550
        %4552 = vdwg.mxu0
        %4553 = vst [vmem:[%s190] sm:$0xff] %v4416
        %4554 = vst [vmem:[%s190 + $0x8] sm:$0xff] %v4514
        %4555 = vst [vmem:[%s190 + $0x10] sm:$0xff] %v4418
        %4556 = vst [vmem:[%s190 + $0x18] sm:$0xff] %v4516
        %4557 = vst [vmem:[%s190 + $0x20] sm:$0xff] %v4421
        %4558 = vst [vmem:[%s190 + $0x28] sm:$0xff] %v4519
        %4559 = vst [vmem:[%s190 + $0x30] sm:$0xff] %v4423
        %4560 = vst [vmem:[%s190 + $0x38] sm:$0xff] %v4521
        %4561 = vst [vmem:[%s190 + $0x40] sm:$0xff] %v4426
        %4562 = vst [vmem:[%s190 + $0x48] sm:$0xff] %v4524
        %4563 = vst [vmem:[%s190 + $0x50] sm:$0xff] %v4428
        %4564 = vst [vmem:[%s190 + $0x58] sm:$0xff] %v4526
        %4565 = vst [vmem:[%s190 + $0x60] sm:$0xff] %v4431
        %4566 = vst [vmem:[%s190 + $0x68] sm:$0xff] %v4529
        %4567 = vst [vmem:[%s190 + $0x70] sm:$0xff] %v4433
        %4568 = vst [vmem:[%s190 + $0x78] sm:$0xff] %v4531
        %4569 = vst [vmem:[%s190 + $0x80] sm:$0xff] %v4436
        %4570 = vst [vmem:[%s190 + $0x88] sm:$0xff] %v4534
        %4571 = vst [vmem:[%s190 + $0x90] sm:$0xff] %v4438
        %4572 = vst [vmem:[%s190 + $0x98] sm:$0xff] %v4536
        %4573 = vst [vmem:[%s190 + $0xa0] sm:$0xff] %v4441
        %4574 = vst [vmem:[%s190 + $0xa8] sm:$0xff] %v4539
        %4575 = vst [vmem:[%s190 + $0xb0] sm:$0xff] %v4443
        %4576 = vst [vmem:[%s190 + $0xb8] sm:$0xff] %v4541
        %4577 = vst [vmem:[%s190 + $0xc0] sm:$0xff] %v4446
        %4578 = vst [vmem:[%s190 + $0xc8] sm:$0xff] %v4544
        %4579 = vst [vmem:[%s190 + $0xd0] sm:$0xff] %v4448
        %4580 = vst [vmem:[%s190 + $0xd8] sm:$0xff] %v4546
        %4581 = vst [vmem:[%s190 + $0xe0] sm:$0xff] %v4451
        %4582 = vst [vmem:[%s190 + $0xe8] sm:$0xff] %v4549
        %4583 = vst [vmem:[%s190 + $0xf0] sm:$0xff] %v4453
        %4584 = vst [vmem:[%s190 + $0xf8] sm:$0xff] %v4551
        %s4585 = sand.u32 %s115, 1
        %s4586 = scalar_lea.sflag [#allocation3], %s4585
        %s4587 = sand.u32 %s115, 1
        %s4588 = smul.addr %s4587, 256
        %s4589 = scalar_lea.vmem [#allocation2], %s4588
        // Predicated region
        $region37: #{llama_flash_attention2_forward.1} parent=35 // pred_check
          %p4590 = pneg %p125
        $region38: #{llama_flash_attention2_forward.1} parent=35 // pred_check_branch
          %4592 = sbr.rel (%p4590) target = $region40
        $region39: #{llama_flash_attention2_forward.1} parent=35 // pred_region
          %4594 = vsyncadd %s4586, 0
          %s4595 = smul.addr %s18, 32
          %s4596 = smul.addr %s4595, 8
          %s4597 = scalar_lea.hbm %s4, %s4596
          %s4598 = sshll.u32 %s4589, 4
          %s4599 = int_to_ptr.vmem [resolvable:$true] %s4598
          %s4600 = sshll.u32 %s4597, 4
          %s4601 = int_to_ptr.hbm [resolvable:$true] %s4600
          %4606 = dma.vmem_to_hbm [thread:$0]  %s4599, 4096, %s4601, %s4586, 256, 256, 16
        $region40: #{llama_flash_attention2_forward.1} parent=35 // pred_fallthru
          _
      $region36: #{llama_flash_attention2_forward.1} parent=5 // pred_fallthru
        _
      %p4607 = scmp.le.s32.totalorder 2, %s13
      // Predicated region
      $region41: #{llama_flash_attention2_forward.1} parent=5 // pred_check
        %p4608 = pneg %p4607
      $region42: #{llama_flash_attention2_forward.1} parent=5 // pred_check_branch
        %4610 = sbr.rel (%p4608) target = $region44
      $region43: #{llama_flash_attention2_forward.1} parent=5 // pred_region
        %s4611 = ssub.s32 %s13, 2
        // Predicated region
        $region45: #{llama_flash_attention2_forward.1} parent=43 // pred_check
          %p4612 = pneg %p131
        $region46: #{llama_flash_attention2_forward.1} parent=43 // pred_check_branch
          %4614 = sbr.rel (%p4612) target = $region48
        $region47: #{llama_flash_attention2_forward.1} parent=43 // pred_region
          %s4615 = sand.u32 %s116, 1
          %s4616 = scalar_lea.sflag [#allocation3], %s4615
          %s4617 = sand.u32 %s116, 1
          %s4618 = smul.addr %s4617, 256
          %s4619 = scalar_lea.vmem [#allocation2], %s4618
          %4621 = dma.done %s4616, 4096
        $region48: #{llama_flash_attention2_forward.1} parent=43 // pred_fallthru
          _
      $region44: #{llama_flash_attention2_forward.1} parent=5 // pred_fallthru
        _
    $region6: #{llama_flash_attention2_forward.1} parent=1 // loop_footer
      %s17 = sadd.s32 1, %s13
    $region7: #{llama_flash_attention2_forward.1} parent=1 // loop_footer_branch
      %12 = sbr.rel target = $region3
    $region8: #{llama_flash_attention2_forward.1} parent=1 // loop_exit
      _
    %4622 = vsyncpa [#allocation3], 1
    %s4623 = scalar_lea.sflag [#allocation3], 1
    %4624 = vsyncpa %s4623, 1

</llo_original>
